<compile_context>
chip_gen: v5e
topology: v5e:2x2
jax: 0.10.0
libtpu: 0.0.40
codegen_flags: <defaults>
</compile_context>

<pallas_src>
import math

import jax
import jax.numpy as jnp
from jax.experimental import pallas as pl
from jax.experimental.pallas import tpu as pltpu


def _round_up(x, m):
    return ((x + m - 1) // m) * m


def _pack_factor(feat_in, feat_out):
    """Rows packed per lane-row so both packed widths are multiples of 128."""
    r_in = 128 // math.gcd(feat_in, 128)
    r_out = 128 // math.gcd(feat_out, 128)
    return (r_in * r_out) // math.gcd(r_in, r_out)      # lcm(r_in, r_out)


def retailnn_kernel(x_ref, w1_ref, b1_ref, w2_ref, b2_ref, out_ref):
    # x_ref: [tb, R*F] — R batch rows packed per lane-dense row.
    x = x_ref[...]

    # Linear(F -> H) on the packed layout via block-diagonal W1, + ReLU.
    h = jnp.dot(x, w1_ref[...],
                preferred_element_type=jnp.float32,
                precision=jax.lax.Precision.HIGHEST)      # [tb, R*H]
    h = jnp.maximum(h + b1_ref[...], 0.0)

    # BatchNorm1d (eval mode) is pre-folded into w2/b2 on the host.
    # Dropout(0.3) is the identity in eval mode.

    # Linear(H -> O) via block-diagonal (BN-folded) W2, + ReLU.
    # Output stays packed -> one unmasked lane-dense store per tile.
    o = jnp.dot(h, w2_ref[...],
                preferred_element_type=jnp.float32,
                precision=jax.lax.Precision.HIGHEST)      # [tb, R*O]
    out_ref[...] = jnp.maximum(o + b2_ref[...], 0.0)


def retailnn_forward(x, params, *, block_b=8192):
    x = x.astype(jnp.float32)
    b, f = x.shape
    h = params["w1"].shape[1]
    o = params["w2"].shape[1]

    # ---- Host-side folding: eval BatchNorm -> W2/b2 ------------------------
    eps = jnp.float32(1e-5)
    scale = params["gamma"] * jax.lax.rsqrt(params["var"] + eps)    # (1, H)
    shift = params["beta"] - params["mean"] * scale                 # (1, H)
    w2_f = scale.reshape(h, 1) * params["w2"]                       # (H, O)
    b2_f = params["b2"] + shift @ params["w2"]                      # (1, O)

    # ---- Row packing + block-diagonal weights ------------------------------
    r = _pack_factor(f, o)        # 16 for F=8, O=16: x->(B/16,128), out->(B/16,256)
    # TODO(synk): for feature widths that don't divide 128 nicely r can grow;
    # cap/sweep it if such a config ever matters.
    eye_r = jnp.eye(r, dtype=jnp.float32)
    w1_bd = jnp.kron(eye_r, params["w1"])        # (R*F, R*H) block-diagonal
    b1_t = jnp.tile(params["b1"], (1, r))        # (1, R*H)
    w2_bd = jnp.kron(eye_r, w2_f)                # (R*H, R*O) block-diagonal
    b2_t = jnp.tile(b2_f, (1, r))                # (1, R*O)

    # ---- Batch tiling over packed rows --------------------------------------
    n_rows = pl.cdiv(b, r)                       # packed rows needed
    tb = max(1, min(block_b // r, n_rows))       # packed rows per grid step
    if tb < n_rows:
        tb = _round_up(tb, 8)                    # sublane-aligned tile
        n_rows = _round_up(n_rows, tb)
    b_pad = n_rows * r
    if b_pad != b:                               # tiny tail pad (<= tb*r-1 rows)
        x = jnp.pad(x, ((0, b_pad - b), (0, 0)))
    x_packed = x.reshape(n_rows, r * f)          # pure row-major repack

    grid = (n_rows // tb,)
    resident = lambda i: (0, 0)                  # weights: DMA once, stay in VMEM

    out = pl.pallas_call(
        retailnn_kernel,
        out_shape=jax.ShapeDtypeStruct((n_rows, r * o), jnp.float32),
        grid=grid,
        in_specs=[
            pl.BlockSpec((tb, r * f), lambda i: (i, 0)),   # x: streamed per tile
            pl.BlockSpec((r * f, r * h), resident),        # W1 (block-diag)
            pl.BlockSpec((1, r * h), resident),            # b1 (tiled)
            pl.BlockSpec((r * h, r * o), resident),        # W2 (BN-folded, block-diag)
            pl.BlockSpec((1, r * o), resident),            # b2 (BN-folded, tiled)
        ],
        out_specs=pl.BlockSpec((tb, r * o), lambda i: (i, 0)),
        compiler_params=pltpu.CompilerParams(
            dimension_semantics=("parallel",),
            vmem_limit_bytes=32 * 1024 * 1024),
        cost_estimate=pl.CostEstimate(
            flops=2 * n_rows * ((r * f) * (r * h) + (r * h) * (r * o)),
            bytes_accessed=4 * (n_rows * r * f          # x reads (lane dense)
                                + (r * f) * (r * h) + r * h
                                + (r * h) * (r * o) + r * o
                                + n_rows * r * o),       # out writes (lane dense)
            transcendentals=0),
    )(x_packed, w1_bd, b1_t, w2_bd, b2_t)

    # Unpack (B/R, R*O) -> (B, O): row-major, no padded lanes to strip.
    return out.reshape(b_pad, o)[:b]


def init_params(key, input_size, hidden_size=32, output_size=16):
    """Deterministic init mirroring PyTorch defaults (uniform +-1/sqrt(fan_in))."""
    k1, k2, k3, k4 = jax.random.split(key, 4)
    bound1 = 1.0 / (input_size ** 0.5)
    bound2 = 1.0 / (hidden_size ** 0.5)
    return {
        # Linear weights stored transposed: [in, out]
        "w1": jax.random.uniform(k1, (input_size, hidden_size),
                                 jnp.float32, -bound1, bound1),
        "b1": jax.random.uniform(k2, (1, hidden_size),
                                 jnp.float32, -bound1, bound1),
        # BatchNorm1d defaults: gamma=1, beta=0, running_mean=0, running_var=1
        "gamma": jnp.ones((1, hidden_size), jnp.float32),
        "beta": jnp.zeros((1, hidden_size), jnp.float32),
        "mean": jnp.zeros((1, hidden_size), jnp.float32),
        "var": jnp.ones((1, hidden_size), jnp.float32),
        "w2": jax.random.uniform(k3, (hidden_size, output_size),
                                 jnp.float32, -bound2, bound2),
        "b2": jax.random.uniform(k4, (1, output_size),
                                 jnp.float32, -bound2, bound2),
    }


if __name__ == "__main__":
    key = jax.random.PRNGKey(0)
    k_x, k_p = jax.random.split(key)

    batch = 4
    input_size = 8
    hidden_size = 32
    output_size = 16

    x = jax.random.normal(k_x, (batch, input_size), jnp.float32)
    params = init_params(k_p, input_size, hidden_size, output_size)

    out = retailnn_forward(x, params)
    out = jax.block_until_ready(out)

    # Reference in plain JAX (eval-mode semantics).
    hh = jnp.maximum(x @ params["w1"] + params["b1"], 0.0)
    hh = (hh - params["mean"]) * jax.lax.rsqrt(params["var"] + 1e-5) \
        * params["gamma"] + params["beta"]
    ref = jnp.maximum(hh @ params["w2"] + params["b2"], 0.0)

    assert out.shape == (batch, output_size)
    assert jnp.allclose(out, ref, atol=1e-5, rtol=1e-5)

    print("KERNEL_OK")
</pallas_src>

<mosaic_0001>
module attributes {stable_mosaic.version = 11 : i64} {
  func.func @retailnn_kernel(%arg0: i32, %arg1: memref<1x128xf32, #tpu.memory_space<vmem>>, %arg2: memref<128x512xf32, #tpu.memory_space<vmem>>, %arg3: memref<1x512xf32, #tpu.memory_space<vmem>>, %arg4: memref<512x256xf32, #tpu.memory_space<vmem>>, %arg5: memref<1x256xf32, #tpu.memory_space<vmem>>, %arg6: memref<1x256xf32, #tpu.memory_space<vmem>>) attributes {dimension_semantics = [#tpu.dimension_semantics<parallel>], iteration_bounds = array<i64: 1>, scalar_prefetch = 0 : i64, scratch_operands = 0 : i64, tpu.core_type = #tpu.core_type<tc>, window_params = [{transform_indices = @transform_0, window_bounds = array<i64: 1, 128>}, {pipeline_mode = #tpu.pipeline_mode<synchronous>, transform_indices = @transform_1, window_bounds = array<i64: 128, 512>}, {pipeline_mode = #tpu.pipeline_mode<synchronous>, transform_indices = @transform_2, window_bounds = array<i64: 1, 512>}, {pipeline_mode = #tpu.pipeline_mode<synchronous>, transform_indices = @transform_3, window_bounds = array<i64: 512, 256>}, {pipeline_mode = #tpu.pipeline_mode<synchronous>, transform_indices = @transform_4, window_bounds = array<i64: 1, 256>}, {transform_indices = @transform_5, window_bounds = array<i64: 1, 256>}]} {
    %c0 = arith.constant 0 : index
    %c0_0 = arith.constant 0 : index
    %0 = vector.load %arg1[%c0, %c0_0] : memref<1x128xf32, #tpu.memory_space<vmem>>, vector<1x128xf32>
    %c0_1 = arith.constant 0 : index
    %c0_2 = arith.constant 0 : index
    %1 = vector.load %arg2[%c0_1, %c0_2] : memref<128x512xf32, #tpu.memory_space<vmem>>, vector<128x512xf32>
    %cst = arith.constant dense<0.000000e+00> : vector<1x512xf32>
    %2 = tpu.matmul %0, %1, %cst {dimension_numbers = #tpu.dot_dimension_numbers<[1], [0], [0], [1], [0, 0, 1, 1], [], []>, precision = #tpu.contract_precision<fp32>} : vector<1x128xf32>, vector<128x512xf32>, vector<1x512xf32> -> vector<1x512xf32>
    %c0_3 = arith.constant 0 : index
    %c0_4 = arith.constant 0 : index
    %3 = vector.load %arg3[%c0_3, %c0_4] : memref<1x512xf32, #tpu.memory_space<vmem>>, vector<1x512xf32>
    %4 = arith.addf %2, %3 : vector<1x512xf32>
    %cst_5 = arith.constant 0.000000e+00 : f32
    %5 = vector.broadcast %cst_5 : f32 to vector<1x512xf32>
    %6 = arith.maximumf %4, %5 : vector<1x512xf32>
    %c0_6 = arith.constant 0 : index
    %c0_7 = arith.constant 0 : index
    %7 = vector.load %arg4[%c0_6, %c0_7] : memref<512x256xf32, #tpu.memory_space<vmem>>, vector<512x256xf32>
    %cst_8 = arith.constant dense<0.000000e+00> : vector<1x256xf32>
    %8 = tpu.matmul %6, %7, %cst_8 {dimension_numbers = #tpu.dot_dimension_numbers<[1], [0], [0], [1], [0, 0, 1, 1], [], []>, precision = #tpu.contract_precision<fp32>} : vector<1x512xf32>, vector<512x256xf32>, vector<1x256xf32> -> vector<1x256xf32>
    %c0_9 = arith.constant 0 : index
    %c0_10 = arith.constant 0 : index
    %9 = vector.load %arg5[%c0_9, %c0_10] : memref<1x256xf32, #tpu.memory_space<vmem>>, vector<1x256xf32>
    %10 = arith.addf %8, %9 : vector<1x256xf32>
    %cst_11 = arith.constant 0.000000e+00 : f32
    %11 = vector.broadcast %cst_11 : f32 to vector<1x256xf32>
    %12 = arith.maximumf %10, %11 : vector<1x256xf32>
    %c0_12 = arith.constant 0 : index
    %c0_13 = arith.constant 0 : index
    %13 = vector.load %arg6[%c0_12, %c0_13] : memref<1x256xf32, #tpu.memory_space<vmem>>, vector<1x256xf32>
    tpu.vector_store %arg6[%c0_12, %c0_13], %12 {strides = array<i32>} : memref<1x256xf32, #tpu.memory_space<vmem>>, vector<1x256xf32>,
    return
  }
  func.func @transform_0(%arg0: i32) -> (i32, i32) {
    %c0_i32 = arith.constant 0 : i32
    %c0_i32_0 = arith.constant 0 : i32
    return %arg0, %c0_i32 : i32, i32
  }
  func.func @transform_1(%arg0: i32) -> (i32, i32) {
    %c0_i32 = arith.constant 0 : i32
    %c0_i32_0 = arith.constant 0 : i32
    %c0_i32_1 = arith.constant 0 : i32
    return %c0_i32, %c0_i32_0 : i32, i32
  }
  func.func @transform_2(%arg0: i32) -> (i32, i32) {
    %c0_i32 = arith.constant 0 : i32
    %c0_i32_0 = arith.constant 0 : i32
    %c0_i32_1 = arith.constant 0 : i32
    return %c0_i32, %c0_i32_0 : i32, i32
  }
  func.func @transform_3(%arg0: i32) -> (i32, i32) {
    %c0_i32 = arith.constant 0 : i32
    %c0_i32_0 = arith.constant 0 : i32
    %c0_i32_1 = arith.constant 0 : i32
    return %c0_i32, %c0_i32_0 : i32, i32
  }
  func.func @transform_4(%arg0: i32) -> (i32, i32) {
    %c0_i32 = arith.constant 0 : i32
    %c0_i32_0 = arith.constant 0 : i32
    %c0_i32_1 = arith.constant 0 : i32
    return %c0_i32, %c0_i32_0 : i32, i32
  }
  func.func @transform_5(%arg0: i32) -> (i32, i32) {
    %c0_i32 = arith.constant 0 : i32
    %c0_i32_0 = arith.constant 0 : i32
    return %arg0, %c0_i32 : i32, i32
  }
}

</mosaic_0001>

<llo_original>
// kernel: tpu_custom_call.1
$region0: #{tpu_custom_call.1}
  #allocation0 [shape = 'u32[]', space=smem, size = 0x4, offset = 0x4, fixed_abs, tag = 'smem constant byte address 0x4 - core index']
  #allocation1 [shape = 'u32[72,128]{1,0:T(1,128)}', space=vmem, size = 0x9000, scoped, tag = 'internal scratch']
  %s0 = inlined_call_operand.hbm [shape: f32[1,128], index: 0, kind: input, shape index: {}]
  %s1 = inlined_call_operand.hbm [shape: f32[128,512], index: 1, kind: input, shape index: {}]
  %s2 = inlined_call_operand.hbm [shape: f32[1,512], index: 2, kind: input, shape index: {}]
  %s3 = inlined_call_operand.hbm [shape: f32[512,256], index: 3, kind: input, shape index: {}]
  %s4 = inlined_call_operand.vmem [shape: f32[1,256], index: 4, kind: input, shape index: {}]
  %s5 = inlined_call_operand.hbm [shape: f32[1,256], index: 5, kind: output, shape index: {}]
  %s6 = sld [smem:[#allocation0]]
  $region46: #{tpu_custom_call.1} parent=0
    _
  %s8 = ssub.s32 1, %s6
  %s9 = scalar_select 0, %s8, %s6
  $region1: #{tpu_custom_call.1} parent=0
    #allocation2 [shape = 'u8[512]{0}', space=vmem, size = 0x400, scoped, tag = 'input window, operand 0, single buffered']
    #allocation3 [shape = 's32[1]{0}', space=sflag, size = 0x4, scoped, tag = 'scoped memory for tpu_custom_call.1']
    #allocation4 [shape = 's32[1]{0}', space=sflag, size = 0x4, scoped, tag = 'scoped memory for tpu_custom_call.1']
    #allocation5 [shape = 'u8[262144]{0}', space=vmem, size = 0x40000, scoped, tag = 'input window, operand 1, single buffered']
    #allocation6 [shape = 's32[1]{0}', space=sflag, size = 0x4, scoped, tag = 'scoped memory for tpu_custom_call.1']
    #allocation7 [shape = 'u8[2048]{0}', space=vmem, size = 0x800, scoped, tag = 'input window, operand 2, single buffered']
    #allocation8 [shape = 'u8[524288]{0}', space=vmem, size = 0x80000, scoped, tag = 'input window, operand 3, single buffered']
    #allocation9 [shape = 's32[1]{0}', space=sflag, size = 0x4, scoped, tag = 'scoped memory for tpu_custom_call.1']
    #allocation10 [shape = 'u8[1024]{0}', space=vmem, size = 0x400, scoped, tag = 'output window, operand 0, single buffered']
    %10 = vsyncpa [#allocation3], 0
    %11 = vsyncpa [#allocation6], 0
    %12 = vsyncpa [#allocation9], 0
    %13 = vsyncpa [#allocation4], 0
    // Predicated region
    $region2: #{tpu_custom_call.1} parent=1 // pred_check
      _
    $region3: #{tpu_custom_call.1} parent=1 // pred_check_branch
      %15 = sbr.rel (0) target = $region5
    $region4: #{tpu_custom_call.1} parent=1 // pred_region
      %17 = vsyncadd [#allocation3], 0
      %s19 = sshll.u32 %s0, 4
      %s20 = int_to_ptr.hbm [resolvable:$true] %s19
      %s21 = sshll.u32 [#allocation2], 4
      %s22 = int_to_ptr.vmem [resolvable:$true] %s21
      %24 = dma.hbm_to_vmem [thread:$0]  %s20, 16, %s22, [#allocation3]
    $region5: #{tpu_custom_call.1} parent=1 // pred_fallthru
      _
    // Predicated region
    $region6: #{tpu_custom_call.1} parent=1 // pred_check
      _
    $region7: #{tpu_custom_call.1} parent=1 // pred_check_branch
      %26 = sbr.rel (0) target = $region9
    $region8: #{tpu_custom_call.1} parent=1 // pred_region
      %28 = vsyncadd [#allocation6], 0
      %s29 = sshll.u32 %s1, 4
      %s30 = int_to_ptr.hbm [resolvable:$true] %s29
      %s31 = sshll.u32 [#allocation5], 4
      %s32 = int_to_ptr.vmem [resolvable:$true] %s31
      %37 = dma.hbm_to_vmem [thread:$0]  %s30, 8192, %s32, [#allocation6], 512, 512, 32
    $region9: #{tpu_custom_call.1} parent=1 // pred_fallthru
      _
    // Predicated region
    $region10: #{tpu_custom_call.1} parent=1 // pred_check
      _
    $region11: #{tpu_custom_call.1} parent=1 // pred_check_branch
      %39 = sbr.rel (0) target = $region13
    $region12: #{tpu_custom_call.1} parent=1 // pred_region
      %41 = vsyncadd [#allocation6], 0
      %s43 = sshll.u32 %s2, 4
      %s44 = int_to_ptr.hbm [resolvable:$true] %s43
      %s45 = sshll.u32 [#allocation7], 4
      %s46 = int_to_ptr.vmem [resolvable:$true] %s45
      %48 = dma.hbm_to_vmem [thread:$0]  %s44, 64, %s46, [#allocation6]
    $region13: #{tpu_custom_call.1} parent=1 // pred_fallthru
      _
    // Predicated region
    $region14: #{tpu_custom_call.1} parent=1 // pred_check
      _
    $region15: #{tpu_custom_call.1} parent=1 // pred_check_branch
      %50 = sbr.rel (0) target = $region17
    $region16: #{tpu_custom_call.1} parent=1 // pred_region
      %52 = vsyncadd [#allocation9], 0
      %s53 = sshll.u32 %s3, 4
      %s54 = int_to_ptr.hbm [resolvable:$true] %s53
      %s55 = sshll.u32 [#allocation8], 4
      %s56 = int_to_ptr.vmem [resolvable:$true] %s55
      %61 = dma.hbm_to_vmem [thread:$0]  %s54, 16384, %s56, [#allocation9], 256, 256, 16
    $region17: #{tpu_custom_call.1} parent=1 // pred_fallthru
      _
    // Predicated region
    $region18: #{tpu_custom_call.1} parent=1 // pred_check
      _
    $region19: #{tpu_custom_call.1} parent=1 // pred_check_branch
      %63 = sbr.rel (0) target = $region21
    $region20: #{tpu_custom_call.1} parent=1 // pred_region
      _
    $region21: #{tpu_custom_call.1} parent=1 // pred_fallthru
      _
    // Predicated region
    $region22: #{tpu_custom_call.1} parent=1 // pred_check
      _
    $region23: #{tpu_custom_call.1} parent=1 // pred_check_branch
      %65 = sbr.rel (0) target = $region25
    $region24: #{tpu_custom_call.1} parent=1 // pred_region
      %67 = dma.done [#allocation3], 16
    $region25: #{tpu_custom_call.1} parent=1 // pred_fallthru
      _
    // Predicated region
    $region26: #{tpu_custom_call.1} parent=1 // pred_check
      _
    $region27: #{tpu_custom_call.1} parent=1 // pred_check_branch
      %69 = sbr.rel (0) target = $region29
    $region28: #{tpu_custom_call.1} parent=1 // pred_region
      %71 = dma.done [#allocation6], 8192
    $region29: #{tpu_custom_call.1} parent=1 // pred_fallthru
      _
    // Predicated region
    $region30: #{tpu_custom_call.1} parent=1 // pred_check
      _
    $region31: #{tpu_custom_call.1} parent=1 // pred_check_branch
      %73 = sbr.rel (0) target = $region33
    $region32: #{tpu_custom_call.1} parent=1 // pred_region
      %75 = dma.done [#allocation6], 64
    $region33: #{tpu_custom_call.1} parent=1 // pred_fallthru
      _
    // Predicated region
    $region34: #{tpu_custom_call.1} parent=1 // pred_check
      _
    $region35: #{tpu_custom_call.1} parent=1 // pred_check_branch
      %77 = sbr.rel (0) target = $region37
    $region36: #{tpu_custom_call.1} parent=1 // pred_region
      %79 = dma.done [#allocation9], 16384
    $region37: #{tpu_custom_call.1} parent=1 // pred_fallthru
      _
    %v80 = vld [vmem:[#allocation2] sm:$0x1]
    %v81 = vld [vmem:[#allocation5] sm:$0xff]
    %v82 = vld [vmem:[#allocation5 + $0x8] sm:$0xff]
    %v83 = vld [vmem:[#allocation5 + $0x10] sm:$0xff]
    %v84 = vld [vmem:[#allocation5 + $0x18] sm:$0xff]
    %v85 = vld [vmem:[#allocation5 + $0x20] sm:$0xff]
    %v86 = vld [vmem:[#allocation5 + $0x28] sm:$0xff]
    %v87 = vld [vmem:[#allocation5 + $0x30] sm:$0xff]
    %v88 = vld [vmem:[#allocation5 + $0x38] sm:$0xff]
    %v89 = vld [vmem:[#allocation5 + $0x40] sm:$0xff]
    %v90 = vld [vmem:[#allocation5 + $0x48] sm:$0xff]
    %v91 = vld [vmem:[#allocation5 + $0x50] sm:$0xff]
    %v92 = vld [vmem:[#allocation5 + $0x58] sm:$0xff]
    %v93 = vld [vmem:[#allocation5 + $0x60] sm:$0xff]
    %v94 = vld [vmem:[#allocation5 + $0x68] sm:$0xff]
    %v95 = vld [vmem:[#allocation5 + $0x70] sm:$0xff]
    %v96 = vld [vmem:[#allocation5 + $0x78] sm:$0xff]
    %v97 = vld [vmem:[#allocation5 + $0x80] sm:$0xff]
    %v98 = vld [vmem:[#allocation5 + $0x88] sm:$0xff]
    %v99 = vld [vmem:[#allocation5 + $0x90] sm:$0xff]
    %v100 = vld [vmem:[#allocation5 + $0x98] sm:$0xff]
    %v101 = vld [vmem:[#allocation5 + $0xa0] sm:$0xff]
    %v102 = vld [vmem:[#allocation5 + $0xa8] sm:$0xff]
    %v103 = vld [vmem:[#allocation5 + $0xb0] sm:$0xff]
    %v104 = vld [vmem:[#allocation5 + $0xb8] sm:$0xff]
    %v105 = vld [vmem:[#allocation5 + $0xc0] sm:$0xff]
    %v106 = vld [vmem:[#allocation5 + $0xc8] sm:$0xff]
    %v107 = vld [vmem:[#allocation5 + $0xd0] sm:$0xff]
    %v108 = vld [vmem:[#allocation5 + $0xd8] sm:$0xff]
    %v109 = vld [vmem:[#allocation5 + $0xe0] sm:$0xff]
    %v110 = vld [vmem:[#allocation5 + $0xe8] sm:$0xff]
    %v111 = vld [vmem:[#allocation5 + $0xf0] sm:$0xff]
    %v112 = vld [vmem:[#allocation5 + $0xf8] sm:$0xff]
    %v113 = vld [vmem:[#allocation5 + $0x100] sm:$0xff]
    %v114 = vld [vmem:[#allocation5 + $0x108] sm:$0xff]
    %v115 = vld [vmem:[#allocation5 + $0x110] sm:$0xff]
    %v116 = vld [vmem:[#allocation5 + $0x118] sm:$0xff]
    %v117 = vld [vmem:[#allocation5 + $0x120] sm:$0xff]
    %v118 = vld [vmem:[#allocation5 + $0x128] sm:$0xff]
    %v119 = vld [vmem:[#allocation5 + $0x130] sm:$0xff]
    %v120 = vld [vmem:[#allocation5 + $0x138] sm:$0xff]
    %v121 = vld [vmem:[#allocation5 + $0x140] sm:$0xff]
    %v122 = vld [vmem:[#allocation5 + $0x148] sm:$0xff]
    %v123 = vld [vmem:[#allocation5 + $0x150] sm:$0xff]
    %v124 = vld [vmem:[#allocation5 + $0x158] sm:$0xff]
    %v125 = vld [vmem:[#allocation5 + $0x160] sm:$0xff]
    %v126 = vld [vmem:[#allocation5 + $0x168] sm:$0xff]
    %v127 = vld [vmem:[#allocation5 + $0x170] sm:$0xff]
    %v128 = vld [vmem:[#allocation5 + $0x178] sm:$0xff]
    %v129 = vld [vmem:[#allocation5 + $0x180] sm:$0xff]
    %v130 = vld [vmem:[#allocation5 + $0x188] sm:$0xff]
    %v131 = vld [vmem:[#allocation5 + $0x190] sm:$0xff]
    %v132 = vld [vmem:[#allocation5 + $0x198] sm:$0xff]
    %v133 = vld [vmem:[#allocation5 + $0x1a0] sm:$0xff]
    %v134 = vld [vmem:[#allocation5 + $0x1a8] sm:$0xff]
    %v135 = vld [vmem:[#allocation5 + $0x1b0] sm:$0xff]
    %v136 = vld [vmem:[#allocation5 + $0x1b8] sm:$0xff]
    %v137 = vld [vmem:[#allocation5 + $0x1c0] sm:$0xff]
    %v138 = vld [vmem:[#allocation5 + $0x1c8] sm:$0xff]
    %v139 = vld [vmem:[#allocation5 + $0x1d0] sm:$0xff]
    %v140 = vld [vmem:[#allocation5 + $0x1d8] sm:$0xff]
    %v141 = vld [vmem:[#allocation5 + $0x1e0] sm:$0xff]
    %v142 = vld [vmem:[#allocation5 + $0x1e8] sm:$0xff]
    %v143 = vld [vmem:[#allocation5 + $0x1f0] sm:$0xff]
    %v144 = vld [vmem:[#allocation5 + $0x1f8] sm:$0xff]
    %v145 = vld [vmem:[#allocation7] sm:$0xf]
    %v147 = vperm.slane %v145, 0
    %v148 = vperm.slane %v145, 1
    %v149 = vperm.slane %v145, 2
    %v150 = vperm.slane %v145, 3
    %v155 = vand.u32 %v141, 4294901760
    %156 = vmatpush.msra.mxu0 %v155
    %v157 = vand.u32 %v137, 4294901760
    %158 = vmatpush.msra.mxu0 %v157
    %v159 = vand.u32 %v133, 4294901760
    %160 = vmatpush.msra.mxu0 %v159
    %v161 = vand.u32 %v129, 4294901760
    %162 = vmatpush.msra.mxu0 %v161
    %v163 = vand.u32 %v125, 4294901760
    %164 = vmatpush.msra.mxu0 %v163
    %v165 = vand.u32 %v121, 4294901760
    %166 = vmatpush.msra.mxu0 %v165
    %v167 = vand.u32 %v117, 4294901760
    %168 = vmatpush.msra.mxu0 %v167
    %v169 = vand.u32 %v113, 4294901760
    %170 = vmatpush.msra.mxu0 %v169
    %v171 = vand.u32 %v109, 4294901760
    %172 = vmatpush.msra.mxu0 %v171
    %v173 = vand.u32 %v105, 4294901760
    %174 = vmatpush.msra.mxu0 %v173
    %v175 = vand.u32 %v101, 4294901760
    %176 = vmatpush.msra.mxu0 %v175
    %v177 = vand.u32 %v97, 4294901760
    %178 = vmatpush.msra.mxu0 %v177
    %v179 = vand.u32 %v93, 4294901760
    %180 = vmatpush.msra.mxu0 %v179
    %v181 = vand.u32 %v89, 4294901760
    %182 = vmatpush.msra.mxu0 %v181
    %v183 = vand.u32 %v85, 4294901760
    %184 = vmatpush.msra.mxu0 %v183
    %v185 = vand.u32 %v81, 4294901760
    %186 = vmatpush.msra.mxu0 %v185
    %v187 = vand.u32 %v80, 4294901760
    %v188 = vsub.f32 %v80, %v187
    %v189 = vand.u32 %v188, 4294901760
    %v190 = vsub.f32 %v188, %v189
    %v191 = vand.u32 %v190, 4294901760
    %192 = vmatmul.f32.gmra.mxu0 %v191
    %v193 = vpop.f32.mrf.mxu0
    %v194 = vadd.f32 %v147, %v193
    %195 = vdwg.mxu0
    %v196 = vand.u32 %v141, 4294901760
    %v197 = vsub.f32 %v141, %v196
    %v198 = vand.u32 %v197, 4294901760
    %v199 = vsub.f32 %v197, %v198
    %v200 = vand.u32 %v199, 4294901760
    %201 = vmatpush.msra.mxu0 %v200
    %v202 = vand.u32 %v137, 4294901760
    %v203 = vsub.f32 %v137, %v202
    %v204 = vand.u32 %v203, 4294901760
    %v205 = vsub.f32 %v203, %v204
    %v206 = vand.u32 %v205, 4294901760
    %207 = vmatpush.msra.mxu0 %v206
    %v208 = vand.u32 %v133, 4294901760
    %v209 = vsub.f32 %v133, %v208
    %v210 = vand.u32 %v209, 4294901760
    %v211 = vsub.f32 %v209, %v210
    %v212 = vand.u32 %v211, 4294901760
    %213 = vmatpush.msra.mxu0 %v212
    %v214 = vand.u32 %v129, 4294901760
    %v215 = vsub.f32 %v129, %v214
    %v216 = vand.u32 %v215, 4294901760
    %v217 = vsub.f32 %v215, %v216
    %v218 = vand.u32 %v217, 4294901760
    %219 = vmatpush.msra.mxu0 %v218
    %v220 = vand.u32 %v125, 4294901760
    %v221 = vsub.f32 %v125, %v220
    %v222 = vand.u32 %v221, 4294901760
    %v223 = vsub.f32 %v221, %v222
    %v224 = vand.u32 %v223, 4294901760
    %225 = vmatpush.msra.mxu0 %v224
    %v226 = vand.u32 %v121, 4294901760
    %v227 = vsub.f32 %v121, %v226
    %v228 = vand.u32 %v227, 4294901760
    %v229 = vsub.f32 %v227, %v228
    %v230 = vand.u32 %v229, 4294901760
    %231 = vmatpush.msra.mxu0 %v230
    %v232 = vand.u32 %v117, 4294901760
    %v233 = vsub.f32 %v117, %v232
    %v234 = vand.u32 %v233, 4294901760
    %v235 = vsub.f32 %v233, %v234
    %v236 = vand.u32 %v235, 4294901760
    %237 = vmatpush.msra.mxu0 %v236
    %v238 = vand.u32 %v113, 4294901760
    %v239 = vsub.f32 %v113, %v238
    %v240 = vand.u32 %v239, 4294901760
    %v241 = vsub.f32 %v239, %v240
    %v242 = vand.u32 %v241, 4294901760
    %243 = vmatpush.msra.mxu0 %v242
    %v244 = vand.u32 %v109, 4294901760
    %v245 = vsub.f32 %v109, %v244
    %v246 = vand.u32 %v245, 4294901760
    %v247 = vsub.f32 %v245, %v246
    %v248 = vand.u32 %v247, 4294901760
    %249 = vmatpush.msra.mxu0 %v248
    %v250 = vand.u32 %v105, 4294901760
    %v251 = vsub.f32 %v105, %v250
    %v252 = vand.u32 %v251, 4294901760
    %v253 = vsub.f32 %v251, %v252
    %v254 = vand.u32 %v253, 4294901760
    %255 = vmatpush.msra.mxu0 %v254
    %v256 = vand.u32 %v101, 4294901760
    %v257 = vsub.f32 %v101, %v256
    %v258 = vand.u32 %v257, 4294901760
    %v259 = vsub.f32 %v257, %v258
    %v260 = vand.u32 %v259, 4294901760
    %261 = vmatpush.msra.mxu0 %v260
    %v262 = vand.u32 %v97, 4294901760
    %v263 = vsub.f32 %v97, %v262
    %v264 = vand.u32 %v263, 4294901760
    %v265 = vsub.f32 %v263, %v264
    %v266 = vand.u32 %v265, 4294901760
    %267 = vmatpush.msra.mxu0 %v266
    %v268 = vand.u32 %v93, 4294901760
    %v269 = vsub.f32 %v93, %v268
    %v270 = vand.u32 %v269, 4294901760
    %v271 = vsub.f32 %v269, %v270
    %v272 = vand.u32 %v271, 4294901760
    %273 = vmatpush.msra.mxu0 %v272
    %v274 = vand.u32 %v89, 4294901760
    %v275 = vsub.f32 %v89, %v274
    %v276 = vand.u32 %v275, 4294901760
    %v277 = vsub.f32 %v275, %v276
    %v278 = vand.u32 %v277, 4294901760
    %279 = vmatpush.msra.mxu0 %v278
    %v280 = vand.u32 %v85, 4294901760
    %v281 = vsub.f32 %v85, %v280
    %v282 = vand.u32 %v281, 4294901760
    %v283 = vsub.f32 %v281, %v282
    %v284 = vand.u32 %v283, 4294901760
    %285 = vmatpush.msra.mxu0 %v284
    %v286 = vand.u32 %v81, 4294901760
    %v287 = vsub.f32 %v81, %v286
    %v288 = vand.u32 %v287, 4294901760
    %v289 = vsub.f32 %v287, %v288
    %v290 = vand.u32 %v289, 4294901760
    %291 = vmatpush.msra.mxu0 %v290
    %v292 = vand.u32 %v80, 4294901760
    %293 = vmatmul.f32.gmra.mxu0 %v292
    %v294 = vpop.f32.mrf.mxu0
    %v295 = vadd.f32 %v194, %v294
    %296 = vdwg.mxu0
    %v297 = vand.u32 %v141, 4294901760
    %v298 = vsub.f32 %v141, %v297
    %299 = vmatpush.msra.mxu0 %v298
    %v300 = vand.u32 %v137, 4294901760
    %v301 = vsub.f32 %v137, %v300
    %302 = vmatpush.msra.mxu0 %v301
    %v303 = vand.u32 %v133, 4294901760
    %v304 = vsub.f32 %v133, %v303
    %305 = vmatpush.msra.mxu0 %v304
    %v306 = vand.u32 %v129, 4294901760
    %v307 = vsub.f32 %v129, %v306
    %308 = vmatpush.msra.mxu0 %v307
    %v309 = vand.u32 %v125, 4294901760
    %v310 = vsub.f32 %v125, %v309
    %311 = vmatpush.msra.mxu0 %v310
    %v312 = vand.u32 %v121, 4294901760
    %v313 = vsub.f32 %v121, %v312
    %314 = vmatpush.msra.mxu0 %v313
    %v315 = vand.u32 %v117, 4294901760
    %v316 = vsub.f32 %v117, %v315
    %317 = vmatpush.msra.mxu0 %v316
    %v318 = vand.u32 %v113, 4294901760
    %v319 = vsub.f32 %v113, %v318
    %320 = vmatpush.msra.mxu0 %v319
    %v321 = vand.u32 %v109, 4294901760
    %v322 = vsub.f32 %v109, %v321
    %323 = vmatpush.msra.mxu0 %v322
    %v324 = vand.u32 %v105, 4294901760
    %v325 = vsub.f32 %v105, %v324
    %326 = vmatpush.msra.mxu0 %v325
    %v327 = vand.u32 %v101, 4294901760
    %v328 = vsub.f32 %v101, %v327
    %329 = vmatpush.msra.mxu0 %v328
    %v330 = vand.u32 %v97, 4294901760
    %v331 = vsub.f32 %v97, %v330
    %332 = vmatpush.msra.mxu0 %v331
    %v333 = vand.u32 %v93, 4294901760
    %v334 = vsub.f32 %v93, %v333
    %335 = vmatpush.msra.mxu0 %v334
    %v336 = vand.u32 %v89, 4294901760
    %v337 = vsub.f32 %v89, %v336
    %338 = vmatpush.msra.mxu0 %v337
    %v339 = vand.u32 %v85, 4294901760
    %v340 = vsub.f32 %v85, %v339
    %341 = vmatpush.msra.mxu0 %v340
    %v342 = vand.u32 %v81, 4294901760
    %v343 = vsub.f32 %v81, %v342
    %344 = vmatpush.msra.mxu0 %v343
    %v345 = vand.u32 %v80, 4294901760
    %v346 = vsub.f32 %v80, %v345
    %347 = vmatmul.f32.gmra.mxu0 %v346
    %v348 = vpop.f32.mrf.mxu0
    %v349 = vadd.f32 %v295, %v348
    %350 = vdwg.mxu0
    %v351 = vand.u32 %v141, 4294901760
    %352 = vmatpush.msra.mxu0 %v351
    %v353 = vand.u32 %v137, 4294901760
    %354 = vmatpush.msra.mxu0 %v353
    %v355 = vand.u32 %v133, 4294901760
    %356 = vmatpush.msra.mxu0 %v355
    %v357 = vand.u32 %v129, 4294901760
    %358 = vmatpush.msra.mxu0 %v357
    %v359 = vand.u32 %v125, 4294901760
    %360 = vmatpush.msra.mxu0 %v359
    %v361 = vand.u32 %v121, 4294901760
    %362 = vmatpush.msra.mxu0 %v361
    %v363 = vand.u32 %v117, 4294901760
    %364 = vmatpush.msra.mxu0 %v363
    %v365 = vand.u32 %v113, 4294901760
    %366 = vmatpush.msra.mxu0 %v365
    %v367 = vand.u32 %v109, 4294901760
    %368 = vmatpush.msra.mxu0 %v367
    %v369 = vand.u32 %v105, 4294901760
    %370 = vmatpush.msra.mxu0 %v369
    %v371 = vand.u32 %v101, 4294901760
    %372 = vmatpush.msra.mxu0 %v371
    %v373 = vand.u32 %v97, 4294901760
    %374 = vmatpush.msra.mxu0 %v373
    %v375 = vand.u32 %v93, 4294901760
    %376 = vmatpush.msra.mxu0 %v375
    %v377 = vand.u32 %v89, 4294901760
    %378 = vmatpush.msra.mxu0 %v377
    %v379 = vand.u32 %v85, 4294901760
    %380 = vmatpush.msra.mxu0 %v379
    %v381 = vand.u32 %v81, 4294901760
    %382 = vmatpush.msra.mxu0 %v381
    %v383 = vand.u32 %v80, 4294901760
    %v384 = vsub.f32 %v80, %v383
    %v385 = vand.u32 %v384, 4294901760
    %386 = vmatmul.f32.gmra.mxu0 %v385
    %v387 = vpop.f32.mrf.mxu0
    %v388 = vadd.f32 %v349, %v387
    %389 = vdwg.mxu0
    %v390 = vand.u32 %v141, 4294901760
    %v391 = vsub.f32 %v141, %v390
    %v392 = vand.u32 %v391, 4294901760
    %393 = vmatpush.msra.mxu0 %v392
    %v394 = vand.u32 %v137, 4294901760
    %v395 = vsub.f32 %v137, %v394
    %v396 = vand.u32 %v395, 4294901760
    %397 = vmatpush.msra.mxu0 %v396
    %v398 = vand.u32 %v133, 4294901760
    %v399 = vsub.f32 %v133, %v398
    %v400 = vand.u32 %v399, 4294901760
    %401 = vmatpush.msra.mxu0 %v400
    %v402 = vand.u32 %v129, 4294901760
    %v403 = vsub.f32 %v129, %v402
    %v404 = vand.u32 %v403, 4294901760
    %405 = vmatpush.msra.mxu0 %v404
    %v406 = vand.u32 %v125, 4294901760
    %v407 = vsub.f32 %v125, %v406
    %v408 = vand.u32 %v407, 4294901760
    %409 = vmatpush.msra.mxu0 %v408
    %v410 = vand.u32 %v121, 4294901760
    %v411 = vsub.f32 %v121, %v410
    %v412 = vand.u32 %v411, 4294901760
    %413 = vmatpush.msra.mxu0 %v412
    %v414 = vand.u32 %v117, 4294901760
    %v415 = vsub.f32 %v117, %v414
    %v416 = vand.u32 %v415, 4294901760
    %417 = vmatpush.msra.mxu0 %v416
    %v418 = vand.u32 %v113, 4294901760
    %v419 = vsub.f32 %v113, %v418
    %v420 = vand.u32 %v419, 4294901760
    %421 = vmatpush.msra.mxu0 %v420
    %v422 = vand.u32 %v109, 4294901760
    %v423 = vsub.f32 %v109, %v422
    %v424 = vand.u32 %v423, 4294901760
    %425 = vmatpush.msra.mxu0 %v424
    %v426 = vand.u32 %v105, 4294901760
    %v427 = vsub.f32 %v105, %v426
    %v428 = vand.u32 %v427, 4294901760
    %429 = vmatpush.msra.mxu0 %v428
    %v430 = vand.u32 %v101, 4294901760
    %v431 = vsub.f32 %v101, %v430
    %v432 = vand.u32 %v431, 4294901760
    %433 = vmatpush.msra.mxu0 %v432
    %v434 = vand.u32 %v97, 4294901760
    %v435 = vsub.f32 %v97, %v434
    %v436 = vand.u32 %v435, 4294901760
    %437 = vmatpush.msra.mxu0 %v436
    %v438 = vand.u32 %v93, 4294901760
    %v439 = vsub.f32 %v93, %v438
    %v440 = vand.u32 %v439, 4294901760
    %441 = vmatpush.msra.mxu0 %v440
    %v442 = vand.u32 %v89, 4294901760
    %v443 = vsub.f32 %v89, %v442
    %v444 = vand.u32 %v443, 4294901760
    %445 = vmatpush.msra.mxu0 %v444
    %v446 = vand.u32 %v85, 4294901760
    %v447 = vsub.f32 %v85, %v446
    %v448 = vand.u32 %v447, 4294901760
    %449 = vmatpush.msra.mxu0 %v448
    %v450 = vand.u32 %v81, 4294901760
    %v451 = vsub.f32 %v81, %v450
    %v452 = vand.u32 %v451, 4294901760
    %453 = vmatpush.msra.mxu0 %v452
    %v454 = vand.u32 %v80, 4294901760
    %455 = vmatmul.f32.gmra.mxu0 %v454
    %v456 = vpop.f32.mrf.mxu0
    %v457 = vadd.f32 %v388, %v456
    %458 = vdwg.mxu0
    %v459 = vand.u32 %v141, 4294901760
    %460 = vmatpush.msra.mxu0 %v459
    %v461 = vand.u32 %v137, 4294901760
    %462 = vmatpush.msra.mxu0 %v461
    %v463 = vand.u32 %v133, 4294901760
    %464 = vmatpush.msra.mxu0 %v463
    %v465 = vand.u32 %v129, 4294901760
    %466 = vmatpush.msra.mxu0 %v465
    %v467 = vand.u32 %v125, 4294901760
    %468 = vmatpush.msra.mxu0 %v467
    %v469 = vand.u32 %v121, 4294901760
    %470 = vmatpush.msra.mxu0 %v469
    %v471 = vand.u32 %v117, 4294901760
    %472 = vmatpush.msra.mxu0 %v471
    %v473 = vand.u32 %v113, 4294901760
    %474 = vmatpush.msra.mxu0 %v473
    %v475 = vand.u32 %v109, 4294901760
    %476 = vmatpush.msra.mxu0 %v475
    %v477 = vand.u32 %v105, 4294901760
    %478 = vmatpush.msra.mxu0 %v477
    %v479 = vand.u32 %v101, 4294901760
    %480 = vmatpush.msra.mxu0 %v479
    %v481 = vand.u32 %v97, 4294901760
    %482 = vmatpush.msra.mxu0 %v481
    %v483 = vand.u32 %v93, 4294901760
    %484 = vmatpush.msra.mxu0 %v483
    %v485 = vand.u32 %v89, 4294901760
    %486 = vmatpush.msra.mxu0 %v485
    %v487 = vand.u32 %v85, 4294901760
    %488 = vmatpush.msra.mxu0 %v487
    %v489 = vand.u32 %v81, 4294901760
    %490 = vmatpush.msra.mxu0 %v489
    %v491 = vand.u32 %v80, 4294901760
    %492 = vmatmul.f32.gmra.mxu0 %v491
    %v493 = vpop.f32.mrf.mxu0
    %v494 = vadd.f32 %v457, %v493
    %495 = vdwg.mxu0
    %v496 = vand.u32 %v142, 4294901760
    %497 = vmatpush.msra.mxu0 %v496
    %v498 = vand.u32 %v138, 4294901760
    %499 = vmatpush.msra.mxu0 %v498
    %v500 = vand.u32 %v134, 4294901760
    %501 = vmatpush.msra.mxu0 %v500
    %v502 = vand.u32 %v130, 4294901760
    %503 = vmatpush.msra.mxu0 %v502
    %v504 = vand.u32 %v126, 4294901760
    %505 = vmatpush.msra.mxu0 %v504
    %v506 = vand.u32 %v122, 4294901760
    %507 = vmatpush.msra.mxu0 %v506
    %v508 = vand.u32 %v118, 4294901760
    %509 = vmatpush.msra.mxu0 %v508
    %v510 = vand.u32 %v114, 4294901760
    %511 = vmatpush.msra.mxu0 %v510
    %v512 = vand.u32 %v110, 4294901760
    %513 = vmatpush.msra.mxu0 %v512
    %v514 = vand.u32 %v106, 4294901760
    %515 = vmatpush.msra.mxu0 %v514
    %v516 = vand.u32 %v102, 4294901760
    %517 = vmatpush.msra.mxu0 %v516
    %v518 = vand.u32 %v98, 4294901760
    %519 = vmatpush.msra.mxu0 %v518
    %v520 = vand.u32 %v94, 4294901760
    %521 = vmatpush.msra.mxu0 %v520
    %v522 = vand.u32 %v90, 4294901760
    %523 = vmatpush.msra.mxu0 %v522
    %v524 = vand.u32 %v86, 4294901760
    %525 = vmatpush.msra.mxu0 %v524
    %v526 = vand.u32 %v82, 4294901760
    %527 = vmatpush.msra.mxu0 %v526
    %v528 = vand.u32 %v80, 4294901760
    %v529 = vsub.f32 %v80, %v528
    %v530 = vand.u32 %v529, 4294901760
    %v531 = vsub.f32 %v529, %v530
    %v532 = vand.u32 %v531, 4294901760
    %533 = vmatmul.f32.gmra.mxu0 %v532
    %v534 = vpop.f32.mrf.mxu0
    %v535 = vadd.f32 %v148, %v534
    %536 = vdwg.mxu0
    %v537 = vand.u32 %v142, 4294901760
    %v538 = vsub.f32 %v142, %v537
    %v539 = vand.u32 %v538, 4294901760
    %v540 = vsub.f32 %v538, %v539
    %v541 = vand.u32 %v540, 4294901760
    %542 = vmatpush.msra.mxu0 %v541
    %v543 = vand.u32 %v138, 4294901760
    %v544 = vsub.f32 %v138, %v543
    %v545 = vand.u32 %v544, 4294901760
    %v546 = vsub.f32 %v544, %v545
    %v547 = vand.u32 %v546, 4294901760
    %548 = vmatpush.msra.mxu0 %v547
    %v549 = vand.u32 %v134, 4294901760
    %v550 = vsub.f32 %v134, %v549
    %v551 = vand.u32 %v550, 4294901760
    %v552 = vsub.f32 %v550, %v551
    %v553 = vand.u32 %v552, 4294901760
    %554 = vmatpush.msra.mxu0 %v553
    %v555 = vand.u32 %v130, 4294901760
    %v556 = vsub.f32 %v130, %v555
    %v557 = vand.u32 %v556, 4294901760
    %v558 = vsub.f32 %v556, %v557
    %v559 = vand.u32 %v558, 4294901760
    %560 = vmatpush.msra.mxu0 %v559
    %v561 = vand.u32 %v126, 4294901760
    %v562 = vsub.f32 %v126, %v561
    %v563 = vand.u32 %v562, 4294901760
    %v564 = vsub.f32 %v562, %v563
    %v565 = vand.u32 %v564, 4294901760
    %566 = vmatpush.msra.mxu0 %v565
    %v567 = vand.u32 %v122, 4294901760
    %v568 = vsub.f32 %v122, %v567
    %v569 = vand.u32 %v568, 4294901760
    %v570 = vsub.f32 %v568, %v569
    %v571 = vand.u32 %v570, 4294901760
    %572 = vmatpush.msra.mxu0 %v571
    %v573 = vand.u32 %v118, 4294901760
    %v574 = vsub.f32 %v118, %v573
    %v575 = vand.u32 %v574, 4294901760
    %v576 = vsub.f32 %v574, %v575
    %v577 = vand.u32 %v576, 4294901760
    %578 = vmatpush.msra.mxu0 %v577
    %v579 = vand.u32 %v114, 4294901760
    %v580 = vsub.f32 %v114, %v579
    %v581 = vand.u32 %v580, 4294901760
    %v582 = vsub.f32 %v580, %v581
    %v583 = vand.u32 %v582, 4294901760
    %584 = vmatpush.msra.mxu0 %v583
    %v585 = vand.u32 %v110, 4294901760
    %v586 = vsub.f32 %v110, %v585
    %v587 = vand.u32 %v586, 4294901760
    %v588 = vsub.f32 %v586, %v587
    %v589 = vand.u32 %v588, 4294901760
    %590 = vmatpush.msra.mxu0 %v589
    %v591 = vand.u32 %v106, 4294901760
    %v592 = vsub.f32 %v106, %v591
    %v593 = vand.u32 %v592, 4294901760
    %v594 = vsub.f32 %v592, %v593
    %v595 = vand.u32 %v594, 4294901760
    %596 = vmatpush.msra.mxu0 %v595
    %v597 = vand.u32 %v102, 4294901760
    %v598 = vsub.f32 %v102, %v597
    %v599 = vand.u32 %v598, 4294901760
    %v600 = vsub.f32 %v598, %v599
    %v601 = vand.u32 %v600, 4294901760
    %602 = vmatpush.msra.mxu0 %v601
    %v603 = vand.u32 %v98, 4294901760
    %v604 = vsub.f32 %v98, %v603
    %v605 = vand.u32 %v604, 4294901760
    %v606 = vsub.f32 %v604, %v605
    %v607 = vand.u32 %v606, 4294901760
    %608 = vmatpush.msra.mxu0 %v607
    %v609 = vand.u32 %v94, 4294901760
    %v610 = vsub.f32 %v94, %v609
    %v611 = vand.u32 %v610, 4294901760
    %v612 = vsub.f32 %v610, %v611
    %v613 = vand.u32 %v612, 4294901760
    %614 = vmatpush.msra.mxu0 %v613
    %v615 = vand.u32 %v90, 4294901760
    %v616 = vsub.f32 %v90, %v615
    %v617 = vand.u32 %v616, 4294901760
    %v618 = vsub.f32 %v616, %v617
    %v619 = vand.u32 %v618, 4294901760
    %620 = vmatpush.msra.mxu0 %v619
    %v621 = vand.u32 %v86, 4294901760
    %v622 = vsub.f32 %v86, %v621
    %v623 = vand.u32 %v622, 4294901760
    %v624 = vsub.f32 %v622, %v623
    %v625 = vand.u32 %v624, 4294901760
    %626 = vmatpush.msra.mxu0 %v625
    %v627 = vand.u32 %v82, 4294901760
    %v628 = vsub.f32 %v82, %v627
    %v629 = vand.u32 %v628, 4294901760
    %v630 = vsub.f32 %v628, %v629
    %v631 = vand.u32 %v630, 4294901760
    %632 = vmatpush.msra.mxu0 %v631
    %v633 = vand.u32 %v80, 4294901760
    %634 = vmatmul.f32.gmra.mxu0 %v633
    %v635 = vpop.f32.mrf.mxu0
    %v636 = vadd.f32 %v535, %v635
    %637 = vdwg.mxu0
    %v638 = vand.u32 %v142, 4294901760
    %v639 = vsub.f32 %v142, %v638
    %640 = vmatpush.msra.mxu0 %v639
    %v641 = vand.u32 %v138, 4294901760
    %v642 = vsub.f32 %v138, %v641
    %643 = vmatpush.msra.mxu0 %v642
    %v644 = vand.u32 %v134, 4294901760
    %v645 = vsub.f32 %v134, %v644
    %646 = vmatpush.msra.mxu0 %v645
    %v647 = vand.u32 %v130, 4294901760
    %v648 = vsub.f32 %v130, %v647
    %649 = vmatpush.msra.mxu0 %v648
    %v650 = vand.u32 %v126, 4294901760
    %v651 = vsub.f32 %v126, %v650
    %652 = vmatpush.msra.mxu0 %v651
    %v653 = vand.u32 %v122, 4294901760
    %v654 = vsub.f32 %v122, %v653
    %655 = vmatpush.msra.mxu0 %v654
    %v656 = vand.u32 %v118, 4294901760
    %v657 = vsub.f32 %v118, %v656
    %658 = vmatpush.msra.mxu0 %v657
    %v659 = vand.u32 %v114, 4294901760
    %v660 = vsub.f32 %v114, %v659
    %661 = vmatpush.msra.mxu0 %v660
    %v662 = vand.u32 %v110, 4294901760
    %v663 = vsub.f32 %v110, %v662
    %664 = vmatpush.msra.mxu0 %v663
    %v665 = vand.u32 %v106, 4294901760
    %v666 = vsub.f32 %v106, %v665
    %667 = vmatpush.msra.mxu0 %v666
    %v668 = vand.u32 %v102, 4294901760
    %v669 = vsub.f32 %v102, %v668
    %670 = vmatpush.msra.mxu0 %v669
    %v671 = vand.u32 %v98, 4294901760
    %v672 = vsub.f32 %v98, %v671
    %673 = vmatpush.msra.mxu0 %v672
    %v674 = vand.u32 %v94, 4294901760
    %v675 = vsub.f32 %v94, %v674
    %676 = vmatpush.msra.mxu0 %v675
    %v677 = vand.u32 %v90, 4294901760
    %v678 = vsub.f32 %v90, %v677
    %679 = vmatpush.msra.mxu0 %v678
    %v680 = vand.u32 %v86, 4294901760
    %v681 = vsub.f32 %v86, %v680
    %682 = vmatpush.msra.mxu0 %v681
    %v683 = vand.u32 %v82, 4294901760
    %v684 = vsub.f32 %v82, %v683
    %685 = vmatpush.msra.mxu0 %v684
    %v686 = vand.u32 %v80, 4294901760
    %v687 = vsub.f32 %v80, %v686
    %688 = vmatmul.f32.gmra.mxu0 %v687
    %v689 = vpop.f32.mrf.mxu0
    %v690 = vadd.f32 %v636, %v689
    %691 = vdwg.mxu0
    %v692 = vand.u32 %v142, 4294901760
    %693 = vmatpush.msra.mxu0 %v692
    %v694 = vand.u32 %v138, 4294901760
    %695 = vmatpush.msra.mxu0 %v694
    %v696 = vand.u32 %v134, 4294901760
    %697 = vmatpush.msra.mxu0 %v696
    %v698 = vand.u32 %v130, 4294901760
    %699 = vmatpush.msra.mxu0 %v698
    %v700 = vand.u32 %v126, 4294901760
    %701 = vmatpush.msra.mxu0 %v700
    %v702 = vand.u32 %v122, 4294901760
    %703 = vmatpush.msra.mxu0 %v702
    %v704 = vand.u32 %v118, 4294901760
    %705 = vmatpush.msra.mxu0 %v704
    %v706 = vand.u32 %v114, 4294901760
    %707 = vmatpush.msra.mxu0 %v706
    %v708 = vand.u32 %v110, 4294901760
    %709 = vmatpush.msra.mxu0 %v708
    %v710 = vand.u32 %v106, 4294901760
    %711 = vmatpush.msra.mxu0 %v710
    %v712 = vand.u32 %v102, 4294901760
    %713 = vmatpush.msra.mxu0 %v712
    %v714 = vand.u32 %v98, 4294901760
    %715 = vmatpush.msra.mxu0 %v714
    %v716 = vand.u32 %v94, 4294901760
    %717 = vmatpush.msra.mxu0 %v716
    %v718 = vand.u32 %v90, 4294901760
    %719 = vmatpush.msra.mxu0 %v718
    %v720 = vand.u32 %v86, 4294901760
    %721 = vmatpush.msra.mxu0 %v720
    %v722 = vand.u32 %v82, 4294901760
    %723 = vmatpush.msra.mxu0 %v722
    %v724 = vand.u32 %v80, 4294901760
    %v725 = vsub.f32 %v80, %v724
    %v726 = vand.u32 %v725, 4294901760
    %727 = vmatmul.f32.gmra.mxu0 %v726
    %v728 = vpop.f32.mrf.mxu0
    %v729 = vadd.f32 %v690, %v728
    %730 = vdwg.mxu0
    %v731 = vand.u32 %v142, 4294901760
    %v732 = vsub.f32 %v142, %v731
    %v733 = vand.u32 %v732, 4294901760
    %734 = vmatpush.msra.mxu0 %v733
    %v735 = vand.u32 %v138, 4294901760
    %v736 = vsub.f32 %v138, %v735
    %v737 = vand.u32 %v736, 4294901760
    %738 = vmatpush.msra.mxu0 %v737
    %v739 = vand.u32 %v134, 4294901760
    %v740 = vsub.f32 %v134, %v739
    %v741 = vand.u32 %v740, 4294901760
    %742 = vmatpush.msra.mxu0 %v741
    %v743 = vand.u32 %v130, 4294901760
    %v744 = vsub.f32 %v130, %v743
    %v745 = vand.u32 %v744, 4294901760
    %746 = vmatpush.msra.mxu0 %v745
    %v747 = vand.u32 %v126, 4294901760
    %v748 = vsub.f32 %v126, %v747
    %v749 = vand.u32 %v748, 4294901760
    %750 = vmatpush.msra.mxu0 %v749
    %v751 = vand.u32 %v122, 4294901760
    %v752 = vsub.f32 %v122, %v751
    %v753 = vand.u32 %v752, 4294901760
    %754 = vmatpush.msra.mxu0 %v753
    %v755 = vand.u32 %v118, 4294901760
    %v756 = vsub.f32 %v118, %v755
    %v757 = vand.u32 %v756, 4294901760
    %758 = vmatpush.msra.mxu0 %v757
    %v759 = vand.u32 %v114, 4294901760
    %v760 = vsub.f32 %v114, %v759
    %v761 = vand.u32 %v760, 4294901760
    %762 = vmatpush.msra.mxu0 %v761
    %v763 = vand.u32 %v110, 4294901760
    %v764 = vsub.f32 %v110, %v763
    %v765 = vand.u32 %v764, 4294901760
    %766 = vmatpush.msra.mxu0 %v765
    %v767 = vand.u32 %v106, 4294901760
    %v768 = vsub.f32 %v106, %v767
    %v769 = vand.u32 %v768, 4294901760
    %770 = vmatpush.msra.mxu0 %v769
    %v771 = vand.u32 %v102, 4294901760
    %v772 = vsub.f32 %v102, %v771
    %v773 = vand.u32 %v772, 4294901760
    %774 = vmatpush.msra.mxu0 %v773
    %v775 = vand.u32 %v98, 4294901760
    %v776 = vsub.f32 %v98, %v775
    %v777 = vand.u32 %v776, 4294901760
    %778 = vmatpush.msra.mxu0 %v777
    %v779 = vand.u32 %v94, 4294901760
    %v780 = vsub.f32 %v94, %v779
    %v781 = vand.u32 %v780, 4294901760
    %782 = vmatpush.msra.mxu0 %v781
    %v783 = vand.u32 %v90, 4294901760
    %v784 = vsub.f32 %v90, %v783
    %v785 = vand.u32 %v784, 4294901760
    %786 = vmatpush.msra.mxu0 %v785
    %v787 = vand.u32 %v86, 4294901760
    %v788 = vsub.f32 %v86, %v787
    %v789 = vand.u32 %v788, 4294901760
    %790 = vmatpush.msra.mxu0 %v789
    %v791 = vand.u32 %v82, 4294901760
    %v792 = vsub.f32 %v82, %v791
    %v793 = vand.u32 %v792, 4294901760
    %794 = vmatpush.msra.mxu0 %v793
    %v795 = vand.u32 %v80, 4294901760
    %796 = vmatmul.f32.gmra.mxu0 %v795
    %v797 = vpop.f32.mrf.mxu0
    %v798 = vadd.f32 %v729, %v797
    %799 = vdwg.mxu0
    %v800 = vand.u32 %v142, 4294901760
    %801 = vmatpush.msra.mxu0 %v800
    %v802 = vand.u32 %v138, 4294901760
    %803 = vmatpush.msra.mxu0 %v802
    %v804 = vand.u32 %v134, 4294901760
    %805 = vmatpush.msra.mxu0 %v804
    %v806 = vand.u32 %v130, 4294901760
    %807 = vmatpush.msra.mxu0 %v806
    %v808 = vand.u32 %v126, 4294901760
    %809 = vmatpush.msra.mxu0 %v808
    %v810 = vand.u32 %v122, 4294901760
    %811 = vmatpush.msra.mxu0 %v810
    %v812 = vand.u32 %v118, 4294901760
    %813 = vmatpush.msra.mxu0 %v812
    %v814 = vand.u32 %v114, 4294901760
    %815 = vmatpush.msra.mxu0 %v814
    %v816 = vand.u32 %v110, 4294901760
    %817 = vmatpush.msra.mxu0 %v816
    %v818 = vand.u32 %v106, 4294901760
    %819 = vmatpush.msra.mxu0 %v818
    %v820 = vand.u32 %v102, 4294901760
    %821 = vmatpush.msra.mxu0 %v820
    %v822 = vand.u32 %v98, 4294901760
    %823 = vmatpush.msra.mxu0 %v822
    %v824 = vand.u32 %v94, 4294901760
    %825 = vmatpush.msra.mxu0 %v824
    %v826 = vand.u32 %v90, 4294901760
    %827 = vmatpush.msra.mxu0 %v826
    %v828 = vand.u32 %v86, 4294901760
    %829 = vmatpush.msra.mxu0 %v828
    %v830 = vand.u32 %v82, 4294901760
    %831 = vmatpush.msra.mxu0 %v830
    %v832 = vand.u32 %v80, 4294901760
    %833 = vmatmul.f32.gmra.mxu0 %v832
    %v834 = vpop.f32.mrf.mxu0
    %v835 = vadd.f32 %v798, %v834
    %836 = vdwg.mxu0
    %v837 = vand.u32 %v143, 4294901760
    %838 = vmatpush.msra.mxu0 %v837
    %v839 = vand.u32 %v139, 4294901760
    %840 = vmatpush.msra.mxu0 %v839
    %v841 = vand.u32 %v135, 4294901760
    %842 = vmatpush.msra.mxu0 %v841
    %v843 = vand.u32 %v131, 4294901760
    %844 = vmatpush.msra.mxu0 %v843
    %v845 = vand.u32 %v127, 4294901760
    %846 = vmatpush.msra.mxu0 %v845
    %v847 = vand.u32 %v123, 4294901760
    %848 = vmatpush.msra.mxu0 %v847
    %v849 = vand.u32 %v119, 4294901760
    %850 = vmatpush.msra.mxu0 %v849
    %v851 = vand.u32 %v115, 4294901760
    %852 = vmatpush.msra.mxu0 %v851
    %v853 = vand.u32 %v111, 4294901760
    %854 = vmatpush.msra.mxu0 %v853
    %v855 = vand.u32 %v107, 4294901760
    %856 = vmatpush.msra.mxu0 %v855
    %v857 = vand.u32 %v103, 4294901760
    %858 = vmatpush.msra.mxu0 %v857
    %v859 = vand.u32 %v99, 4294901760
    %860 = vmatpush.msra.mxu0 %v859
    %v861 = vand.u32 %v95, 4294901760
    %862 = vmatpush.msra.mxu0 %v861
    %v863 = vand.u32 %v91, 4294901760
    %864 = vmatpush.msra.mxu0 %v863
    %v865 = vand.u32 %v87, 4294901760
    %866 = vmatpush.msra.mxu0 %v865
    %v867 = vand.u32 %v83, 4294901760
    %868 = vmatpush.msra.mxu0 %v867
    %v869 = vand.u32 %v80, 4294901760
    %v870 = vsub.f32 %v80, %v869
    %v871 = vand.u32 %v870, 4294901760
    %v872 = vsub.f32 %v870, %v871
    %v873 = vand.u32 %v872, 4294901760
    %874 = vmatmul.f32.gmra.mxu0 %v873
    %v875 = vpop.f32.mrf.mxu0
    %v876 = vadd.f32 %v149, %v875
    %877 = vdwg.mxu0
    %v878 = vand.u32 %v143, 4294901760
    %v879 = vsub.f32 %v143, %v878
    %v880 = vand.u32 %v879, 4294901760
    %v881 = vsub.f32 %v879, %v880
    %v882 = vand.u32 %v881, 4294901760
    %883 = vmatpush.msra.mxu0 %v882
    %v884 = vand.u32 %v139, 4294901760
    %v885 = vsub.f32 %v139, %v884
    %v886 = vand.u32 %v885, 4294901760
    %v887 = vsub.f32 %v885, %v886
    %v888 = vand.u32 %v887, 4294901760
    %889 = vmatpush.msra.mxu0 %v888
    %v890 = vand.u32 %v135, 4294901760
    %v891 = vsub.f32 %v135, %v890
    %v892 = vand.u32 %v891, 4294901760
    %v893 = vsub.f32 %v891, %v892
    %v894 = vand.u32 %v893, 4294901760
    %895 = vmatpush.msra.mxu0 %v894
    %v896 = vand.u32 %v131, 4294901760
    %v897 = vsub.f32 %v131, %v896
    %v898 = vand.u32 %v897, 4294901760
    %v899 = vsub.f32 %v897, %v898
    %v900 = vand.u32 %v899, 4294901760
    %901 = vmatpush.msra.mxu0 %v900
    %v902 = vand.u32 %v127, 4294901760
    %v903 = vsub.f32 %v127, %v902
    %v904 = vand.u32 %v903, 4294901760
    %v905 = vsub.f32 %v903, %v904
    %v906 = vand.u32 %v905, 4294901760
    %907 = vmatpush.msra.mxu0 %v906
    %v908 = vand.u32 %v123, 4294901760
    %v909 = vsub.f32 %v123, %v908
    %v910 = vand.u32 %v909, 4294901760
    %v911 = vsub.f32 %v909, %v910
    %v912 = vand.u32 %v911, 4294901760
    %913 = vmatpush.msra.mxu0 %v912
    %v914 = vand.u32 %v119, 4294901760
    %v915 = vsub.f32 %v119, %v914
    %v916 = vand.u32 %v915, 4294901760
    %v917 = vsub.f32 %v915, %v916
    %v918 = vand.u32 %v917, 4294901760
    %919 = vmatpush.msra.mxu0 %v918
    %v920 = vand.u32 %v115, 4294901760
    %v921 = vsub.f32 %v115, %v920
    %v922 = vand.u32 %v921, 4294901760
    %v923 = vsub.f32 %v921, %v922
    %v924 = vand.u32 %v923, 4294901760
    %925 = vmatpush.msra.mxu0 %v924
    %v926 = vand.u32 %v111, 4294901760
    %v927 = vsub.f32 %v111, %v926
    %v928 = vand.u32 %v927, 4294901760
    %v929 = vsub.f32 %v927, %v928
    %v930 = vand.u32 %v929, 4294901760
    %931 = vmatpush.msra.mxu0 %v930
    %v932 = vand.u32 %v107, 4294901760
    %v933 = vsub.f32 %v107, %v932
    %v934 = vand.u32 %v933, 4294901760
    %v935 = vsub.f32 %v933, %v934
    %v936 = vand.u32 %v935, 4294901760
    %937 = vmatpush.msra.mxu0 %v936
    %v938 = vand.u32 %v103, 4294901760
    %v939 = vsub.f32 %v103, %v938
    %v940 = vand.u32 %v939, 4294901760
    %v941 = vsub.f32 %v939, %v940
    %v942 = vand.u32 %v941, 4294901760
    %943 = vmatpush.msra.mxu0 %v942
    %v944 = vand.u32 %v99, 4294901760
    %v945 = vsub.f32 %v99, %v944
    %v946 = vand.u32 %v945, 4294901760
    %v947 = vsub.f32 %v945, %v946
    %v948 = vand.u32 %v947, 4294901760
    %949 = vmatpush.msra.mxu0 %v948
    %v950 = vand.u32 %v95, 4294901760
    %v951 = vsub.f32 %v95, %v950
    %v952 = vand.u32 %v951, 4294901760
    %v953 = vsub.f32 %v951, %v952
    %v954 = vand.u32 %v953, 4294901760
    %955 = vmatpush.msra.mxu0 %v954
    %v956 = vand.u32 %v91, 4294901760
    %v957 = vsub.f32 %v91, %v956
    %v958 = vand.u32 %v957, 4294901760
    %v959 = vsub.f32 %v957, %v958
    %v960 = vand.u32 %v959, 4294901760
    %961 = vmatpush.msra.mxu0 %v960
    %v962 = vand.u32 %v87, 4294901760
    %v963 = vsub.f32 %v87, %v962
    %v964 = vand.u32 %v963, 4294901760
    %v965 = vsub.f32 %v963, %v964
    %v966 = vand.u32 %v965, 4294901760
    %967 = vmatpush.msra.mxu0 %v966
    %v968 = vand.u32 %v83, 4294901760
    %v969 = vsub.f32 %v83, %v968
    %v970 = vand.u32 %v969, 4294901760
    %v971 = vsub.f32 %v969, %v970
    %v972 = vand.u32 %v971, 4294901760
    %973 = vmatpush.msra.mxu0 %v972
    %v974 = vand.u32 %v80, 4294901760
    %975 = vmatmul.f32.gmra.mxu0 %v974
    %v976 = vpop.f32.mrf.mxu0
    %v977 = vadd.f32 %v876, %v976
    %978 = vdwg.mxu0
    %v979 = vand.u32 %v143, 4294901760
    %v980 = vsub.f32 %v143, %v979
    %981 = vmatpush.msra.mxu0 %v980
    %v982 = vand.u32 %v139, 4294901760
    %v983 = vsub.f32 %v139, %v982
    %984 = vmatpush.msra.mxu0 %v983
    %v985 = vand.u32 %v135, 4294901760
    %v986 = vsub.f32 %v135, %v985
    %987 = vmatpush.msra.mxu0 %v986
    %v988 = vand.u32 %v131, 4294901760
    %v989 = vsub.f32 %v131, %v988
    %990 = vmatpush.msra.mxu0 %v989
    %v991 = vand.u32 %v127, 4294901760
    %v992 = vsub.f32 %v127, %v991
    %993 = vmatpush.msra.mxu0 %v992
    %v994 = vand.u32 %v123, 4294901760
    %v995 = vsub.f32 %v123, %v994
    %996 = vmatpush.msra.mxu0 %v995
    %v997 = vand.u32 %v119, 4294901760
    %v998 = vsub.f32 %v119, %v997
    %999 = vmatpush.msra.mxu0 %v998
    %v1000 = vand.u32 %v115, 4294901760
    %v1001 = vsub.f32 %v115, %v1000
    %1002 = vmatpush.msra.mxu0 %v1001
    %v1003 = vand.u32 %v111, 4294901760
    %v1004 = vsub.f32 %v111, %v1003
    %1005 = vmatpush.msra.mxu0 %v1004
    %v1006 = vand.u32 %v107, 4294901760
    %v1007 = vsub.f32 %v107, %v1006
    %1008 = vmatpush.msra.mxu0 %v1007
    %v1009 = vand.u32 %v103, 4294901760
    %v1010 = vsub.f32 %v103, %v1009
    %1011 = vmatpush.msra.mxu0 %v1010
    %v1012 = vand.u32 %v99, 4294901760
    %v1013 = vsub.f32 %v99, %v1012
    %1014 = vmatpush.msra.mxu0 %v1013
    %v1015 = vand.u32 %v95, 4294901760
    %v1016 = vsub.f32 %v95, %v1015
    %1017 = vmatpush.msra.mxu0 %v1016
    %v1018 = vand.u32 %v91, 4294901760
    %v1019 = vsub.f32 %v91, %v1018
    %1020 = vmatpush.msra.mxu0 %v1019
    %v1021 = vand.u32 %v87, 4294901760
    %v1022 = vsub.f32 %v87, %v1021
    %1023 = vmatpush.msra.mxu0 %v1022
    %v1024 = vand.u32 %v83, 4294901760
    %v1025 = vsub.f32 %v83, %v1024
    %1026 = vmatpush.msra.mxu0 %v1025
    %v1027 = vand.u32 %v80, 4294901760
    %v1028 = vsub.f32 %v80, %v1027
    %1029 = vmatmul.f32.gmra.mxu0 %v1028
    %v1030 = vpop.f32.mrf.mxu0
    %v1031 = vadd.f32 %v977, %v1030
    %1032 = vdwg.mxu0
    %v1033 = vand.u32 %v143, 4294901760
    %1034 = vmatpush.msra.mxu0 %v1033
    %v1035 = vand.u32 %v139, 4294901760
    %1036 = vmatpush.msra.mxu0 %v1035
    %v1037 = vand.u32 %v135, 4294901760
    %1038 = vmatpush.msra.mxu0 %v1037
    %v1039 = vand.u32 %v131, 4294901760
    %1040 = vmatpush.msra.mxu0 %v1039
    %v1041 = vand.u32 %v127, 4294901760
    %1042 = vmatpush.msra.mxu0 %v1041
    %v1043 = vand.u32 %v123, 4294901760
    %1044 = vmatpush.msra.mxu0 %v1043
    %v1045 = vand.u32 %v119, 4294901760
    %1046 = vmatpush.msra.mxu0 %v1045
    %v1047 = vand.u32 %v115, 4294901760
    %1048 = vmatpush.msra.mxu0 %v1047
    %v1049 = vand.u32 %v111, 4294901760
    %1050 = vmatpush.msra.mxu0 %v1049
    %v1051 = vand.u32 %v107, 4294901760
    %1052 = vmatpush.msra.mxu0 %v1051
    %v1053 = vand.u32 %v103, 4294901760
    %1054 = vmatpush.msra.mxu0 %v1053
    %v1055 = vand.u32 %v99, 4294901760
    %1056 = vmatpush.msra.mxu0 %v1055
    %v1057 = vand.u32 %v95, 4294901760
    %1058 = vmatpush.msra.mxu0 %v1057
    %v1059 = vand.u32 %v91, 4294901760
    %1060 = vmatpush.msra.mxu0 %v1059
    %v1061 = vand.u32 %v87, 4294901760
    %1062 = vmatpush.msra.mxu0 %v1061
    %v1063 = vand.u32 %v83, 4294901760
    %1064 = vmatpush.msra.mxu0 %v1063
    %v1065 = vand.u32 %v80, 4294901760
    %v1066 = vsub.f32 %v80, %v1065
    %v1067 = vand.u32 %v1066, 4294901760
    %1068 = vmatmul.f32.gmra.mxu0 %v1067
    %v1069 = vpop.f32.mrf.mxu0
    %v1070 = vadd.f32 %v1031, %v1069
    %1071 = vdwg.mxu0
    %v1072 = vand.u32 %v143, 4294901760
    %v1073 = vsub.f32 %v143, %v1072
    %v1074 = vand.u32 %v1073, 4294901760
    %1075 = vmatpush.msra.mxu0 %v1074
    %v1076 = vand.u32 %v139, 4294901760
    %v1077 = vsub.f32 %v139, %v1076
    %v1078 = vand.u32 %v1077, 4294901760
    %1079 = vmatpush.msra.mxu0 %v1078
    %v1080 = vand.u32 %v135, 4294901760
    %v1081 = vsub.f32 %v135, %v1080
    %v1082 = vand.u32 %v1081, 4294901760
    %1083 = vmatpush.msra.mxu0 %v1082
    %v1084 = vand.u32 %v131, 4294901760
    %v1085 = vsub.f32 %v131, %v1084
    %v1086 = vand.u32 %v1085, 4294901760
    %1087 = vmatpush.msra.mxu0 %v1086
    %v1088 = vand.u32 %v127, 4294901760
    %v1089 = vsub.f32 %v127, %v1088
    %v1090 = vand.u32 %v1089, 4294901760
    %1091 = vmatpush.msra.mxu0 %v1090
    %v1092 = vand.u32 %v123, 4294901760
    %v1093 = vsub.f32 %v123, %v1092
    %v1094 = vand.u32 %v1093, 4294901760
    %1095 = vmatpush.msra.mxu0 %v1094
    %v1096 = vand.u32 %v119, 4294901760
    %v1097 = vsub.f32 %v119, %v1096
    %v1098 = vand.u32 %v1097, 4294901760
    %1099 = vmatpush.msra.mxu0 %v1098
    %v1100 = vand.u32 %v115, 4294901760
    %v1101 = vsub.f32 %v115, %v1100
    %v1102 = vand.u32 %v1101, 4294901760
    %1103 = vmatpush.msra.mxu0 %v1102
    %v1104 = vand.u32 %v111, 4294901760
    %v1105 = vsub.f32 %v111, %v1104
    %v1106 = vand.u32 %v1105, 4294901760
    %1107 = vmatpush.msra.mxu0 %v1106
    %v1108 = vand.u32 %v107, 4294901760
    %v1109 = vsub.f32 %v107, %v1108
    %v1110 = vand.u32 %v1109, 4294901760
    %1111 = vmatpush.msra.mxu0 %v1110
    %v1112 = vand.u32 %v103, 4294901760
    %v1113 = vsub.f32 %v103, %v1112
    %v1114 = vand.u32 %v1113, 4294901760
    %1115 = vmatpush.msra.mxu0 %v1114
    %v1116 = vand.u32 %v99, 4294901760
    %v1117 = vsub.f32 %v99, %v1116
    %v1118 = vand.u32 %v1117, 4294901760
    %1119 = vmatpush.msra.mxu0 %v1118
    %v1120 = vand.u32 %v95, 4294901760
    %v1121 = vsub.f32 %v95, %v1120
    %v1122 = vand.u32 %v1121, 4294901760
    %1123 = vmatpush.msra.mxu0 %v1122
    %v1124 = vand.u32 %v91, 4294901760
    %v1125 = vsub.f32 %v91, %v1124
    %v1126 = vand.u32 %v1125, 4294901760
    %1127 = vmatpush.msra.mxu0 %v1126
    %v1128 = vand.u32 %v87, 4294901760
    %v1129 = vsub.f32 %v87, %v1128
    %v1130 = vand.u32 %v1129, 4294901760
    %1131 = vmatpush.msra.mxu0 %v1130
    %v1132 = vand.u32 %v83, 4294901760
    %v1133 = vsub.f32 %v83, %v1132
    %v1134 = vand.u32 %v1133, 4294901760
    %1135 = vmatpush.msra.mxu0 %v1134
    %v1136 = vand.u32 %v80, 4294901760
    %1137 = vmatmul.f32.gmra.mxu0 %v1136
    %v1138 = vpop.f32.mrf.mxu0
    %v1139 = vadd.f32 %v1070, %v1138
    %1140 = vdwg.mxu0
    %v1141 = vand.u32 %v143, 4294901760
    %1142 = vmatpush.msra.mxu0 %v1141
    %v1143 = vand.u32 %v139, 4294901760
    %1144 = vmatpush.msra.mxu0 %v1143
    %v1145 = vand.u32 %v135, 4294901760
    %1146 = vmatpush.msra.mxu0 %v1145
    %v1147 = vand.u32 %v131, 4294901760
    %1148 = vmatpush.msra.mxu0 %v1147
    %v1149 = vand.u32 %v127, 4294901760
    %1150 = vmatpush.msra.mxu0 %v1149
    %v1151 = vand.u32 %v123, 4294901760
    %1152 = vmatpush.msra.mxu0 %v1151
    %v1153 = vand.u32 %v119, 4294901760
    %1154 = vmatpush.msra.mxu0 %v1153
    %v1155 = vand.u32 %v115, 4294901760
    %1156 = vmatpush.msra.mxu0 %v1155
    %v1157 = vand.u32 %v111, 4294901760
    %1158 = vmatpush.msra.mxu0 %v1157
    %v1159 = vand.u32 %v107, 4294901760
    %1160 = vmatpush.msra.mxu0 %v1159
    %v1161 = vand.u32 %v103, 4294901760
    %1162 = vmatpush.msra.mxu0 %v1161
    %v1163 = vand.u32 %v99, 4294901760
    %1164 = vmatpush.msra.mxu0 %v1163
    %v1165 = vand.u32 %v95, 4294901760
    %1166 = vmatpush.msra.mxu0 %v1165
    %v1167 = vand.u32 %v91, 4294901760
    %1168 = vmatpush.msra.mxu0 %v1167
    %v1169 = vand.u32 %v87, 4294901760
    %1170 = vmatpush.msra.mxu0 %v1169
    %v1171 = vand.u32 %v83, 4294901760
    %1172 = vmatpush.msra.mxu0 %v1171
    %v1173 = vand.u32 %v80, 4294901760
    %1174 = vmatmul.f32.gmra.mxu0 %v1173
    %v1175 = vpop.f32.mrf.mxu0
    %v1176 = vadd.f32 %v1139, %v1175
    %1177 = vdwg.mxu0
    %v1178 = vand.u32 %v144, 4294901760
    %1179 = vmatpush.msra.mxu0 %v1178
    %v1180 = vand.u32 %v140, 4294901760
    %1181 = vmatpush.msra.mxu0 %v1180
    %v1182 = vand.u32 %v136, 4294901760
    %1183 = vmatpush.msra.mxu0 %v1182
    %v1184 = vand.u32 %v132, 4294901760
    %1185 = vmatpush.msra.mxu0 %v1184
    %v1186 = vand.u32 %v128, 4294901760
    %1187 = vmatpush.msra.mxu0 %v1186
    %v1188 = vand.u32 %v124, 4294901760
    %1189 = vmatpush.msra.mxu0 %v1188
    %v1190 = vand.u32 %v120, 4294901760
    %1191 = vmatpush.msra.mxu0 %v1190
    %v1192 = vand.u32 %v116, 4294901760
    %1193 = vmatpush.msra.mxu0 %v1192
    %v1194 = vand.u32 %v112, 4294901760
    %1195 = vmatpush.msra.mxu0 %v1194
    %v1196 = vand.u32 %v108, 4294901760
    %1197 = vmatpush.msra.mxu0 %v1196
    %v1198 = vand.u32 %v104, 4294901760
    %1199 = vmatpush.msra.mxu0 %v1198
    %v1200 = vand.u32 %v100, 4294901760
    %1201 = vmatpush.msra.mxu0 %v1200
    %v1202 = vand.u32 %v96, 4294901760
    %1203 = vmatpush.msra.mxu0 %v1202
    %v1204 = vand.u32 %v92, 4294901760
    %1205 = vmatpush.msra.mxu0 %v1204
    %v1206 = vand.u32 %v88, 4294901760
    %1207 = vmatpush.msra.mxu0 %v1206
    %v1208 = vand.u32 %v84, 4294901760
    %1209 = vmatpush.msra.mxu0 %v1208
    %v1210 = vand.u32 %v80, 4294901760
    %v1211 = vsub.f32 %v80, %v1210
    %v1212 = vand.u32 %v1211, 4294901760
    %v1213 = vsub.f32 %v1211, %v1212
    %v1214 = vand.u32 %v1213, 4294901760
    %1215 = vmatmul.f32.gmra.mxu0 %v1214
    %v1216 = vpop.f32.mrf.mxu0
    %v1217 = vadd.f32 %v150, %v1216
    %1218 = vdwg.mxu0
    %v1219 = vand.u32 %v144, 4294901760
    %v1220 = vsub.f32 %v144, %v1219
    %v1221 = vand.u32 %v1220, 4294901760
    %v1222 = vsub.f32 %v1220, %v1221
    %v1223 = vand.u32 %v1222, 4294901760
    %1224 = vmatpush.msra.mxu0 %v1223
    %v1225 = vand.u32 %v140, 4294901760
    %v1226 = vsub.f32 %v140, %v1225
    %v1227 = vand.u32 %v1226, 4294901760
    %v1228 = vsub.f32 %v1226, %v1227
    %v1229 = vand.u32 %v1228, 4294901760
    %1230 = vmatpush.msra.mxu0 %v1229
    %v1231 = vand.u32 %v136, 4294901760
    %v1232 = vsub.f32 %v136, %v1231
    %v1233 = vand.u32 %v1232, 4294901760
    %v1234 = vsub.f32 %v1232, %v1233
    %v1235 = vand.u32 %v1234, 4294901760
    %1236 = vmatpush.msra.mxu0 %v1235
    %v1237 = vand.u32 %v132, 4294901760
    %v1238 = vsub.f32 %v132, %v1237
    %v1239 = vand.u32 %v1238, 4294901760
    %v1240 = vsub.f32 %v1238, %v1239
    %v1241 = vand.u32 %v1240, 4294901760
    %1242 = vmatpush.msra.mxu0 %v1241
    %v1243 = vand.u32 %v128, 4294901760
    %v1244 = vsub.f32 %v128, %v1243
    %v1245 = vand.u32 %v1244, 4294901760
    %v1246 = vsub.f32 %v1244, %v1245
    %v1247 = vand.u32 %v1246, 4294901760
    %1248 = vmatpush.msra.mxu0 %v1247
    %v1249 = vand.u32 %v124, 4294901760
    %v1250 = vsub.f32 %v124, %v1249
    %v1251 = vand.u32 %v1250, 4294901760
    %v1252 = vsub.f32 %v1250, %v1251
    %v1253 = vand.u32 %v1252, 4294901760
    %1254 = vmatpush.msra.mxu0 %v1253
    %v1255 = vand.u32 %v120, 4294901760
    %v1256 = vsub.f32 %v120, %v1255
    %v1257 = vand.u32 %v1256, 4294901760
    %v1258 = vsub.f32 %v1256, %v1257
    %v1259 = vand.u32 %v1258, 4294901760
    %1260 = vmatpush.msra.mxu0 %v1259
    %v1261 = vand.u32 %v116, 4294901760
    %v1262 = vsub.f32 %v116, %v1261
    %v1263 = vand.u32 %v1262, 4294901760
    %v1264 = vsub.f32 %v1262, %v1263
    %v1265 = vand.u32 %v1264, 4294901760
    %1266 = vmatpush.msra.mxu0 %v1265
    %v1267 = vand.u32 %v112, 4294901760
    %v1268 = vsub.f32 %v112, %v1267
    %v1269 = vand.u32 %v1268, 4294901760
    %v1270 = vsub.f32 %v1268, %v1269
    %v1271 = vand.u32 %v1270, 4294901760
    %1272 = vmatpush.msra.mxu0 %v1271
    %v1273 = vand.u32 %v108, 4294901760
    %v1274 = vsub.f32 %v108, %v1273
    %v1275 = vand.u32 %v1274, 4294901760
    %v1276 = vsub.f32 %v1274, %v1275
    %v1277 = vand.u32 %v1276, 4294901760
    %1278 = vmatpush.msra.mxu0 %v1277
    %v1279 = vand.u32 %v104, 4294901760
    %v1280 = vsub.f32 %v104, %v1279
    %v1281 = vand.u32 %v1280, 4294901760
    %v1282 = vsub.f32 %v1280, %v1281
    %v1283 = vand.u32 %v1282, 4294901760
    %1284 = vmatpush.msra.mxu0 %v1283
    %v1285 = vand.u32 %v100, 4294901760
    %v1286 = vsub.f32 %v100, %v1285
    %v1287 = vand.u32 %v1286, 4294901760
    %v1288 = vsub.f32 %v1286, %v1287
    %v1289 = vand.u32 %v1288, 4294901760
    %1290 = vmatpush.msra.mxu0 %v1289
    %v1291 = vand.u32 %v96, 4294901760
    %v1292 = vsub.f32 %v96, %v1291
    %v1293 = vand.u32 %v1292, 4294901760
    %v1294 = vsub.f32 %v1292, %v1293
    %v1295 = vand.u32 %v1294, 4294901760
    %1296 = vmatpush.msra.mxu0 %v1295
    %v1297 = vand.u32 %v92, 4294901760
    %v1298 = vsub.f32 %v92, %v1297
    %v1299 = vand.u32 %v1298, 4294901760
    %v1300 = vsub.f32 %v1298, %v1299
    %v1301 = vand.u32 %v1300, 4294901760
    %1302 = vmatpush.msra.mxu0 %v1301
    %v1303 = vand.u32 %v88, 4294901760
    %v1304 = vsub.f32 %v88, %v1303
    %v1305 = vand.u32 %v1304, 4294901760
    %v1306 = vsub.f32 %v1304, %v1305
    %v1307 = vand.u32 %v1306, 4294901760
    %1308 = vmatpush.msra.mxu0 %v1307
    %v1309 = vand.u32 %v84, 4294901760
    %v1310 = vsub.f32 %v84, %v1309
    %v1311 = vand.u32 %v1310, 4294901760
    %v1312 = vsub.f32 %v1310, %v1311
    %v1313 = vand.u32 %v1312, 4294901760
    %1314 = vmatpush.msra.mxu0 %v1313
    %v1315 = vand.u32 %v80, 4294901760
    %1316 = vmatmul.f32.gmra.mxu0 %v1315
    %v1317 = vpop.f32.mrf.mxu0
    %v1318 = vadd.f32 %v1217, %v1317
    %1319 = vdwg.mxu0
    %v1320 = vand.u32 %v144, 4294901760
    %v1321 = vsub.f32 %v144, %v1320
    %1322 = vmatpush.msra.mxu0 %v1321
    %v1323 = vand.u32 %v140, 4294901760
    %v1324 = vsub.f32 %v140, %v1323
    %1325 = vmatpush.msra.mxu0 %v1324
    %v1326 = vand.u32 %v136, 4294901760
    %v1327 = vsub.f32 %v136, %v1326
    %1328 = vmatpush.msra.mxu0 %v1327
    %v1329 = vand.u32 %v132, 4294901760
    %v1330 = vsub.f32 %v132, %v1329
    %1331 = vmatpush.msra.mxu0 %v1330
    %v1332 = vand.u32 %v128, 4294901760
    %v1333 = vsub.f32 %v128, %v1332
    %1334 = vmatpush.msra.mxu0 %v1333
    %v1335 = vand.u32 %v124, 4294901760
    %v1336 = vsub.f32 %v124, %v1335
    %1337 = vmatpush.msra.mxu0 %v1336
    %v1338 = vand.u32 %v120, 4294901760
    %v1339 = vsub.f32 %v120, %v1338
    %1340 = vmatpush.msra.mxu0 %v1339
    %v1341 = vand.u32 %v116, 4294901760
    %v1342 = vsub.f32 %v116, %v1341
    %1343 = vmatpush.msra.mxu0 %v1342
    %v1344 = vand.u32 %v112, 4294901760
    %v1345 = vsub.f32 %v112, %v1344
    %1346 = vmatpush.msra.mxu0 %v1345
    %v1347 = vand.u32 %v108, 4294901760
    %v1348 = vsub.f32 %v108, %v1347
    %1349 = vmatpush.msra.mxu0 %v1348
    %v1350 = vand.u32 %v104, 4294901760
    %v1351 = vsub.f32 %v104, %v1350
    %1352 = vmatpush.msra.mxu0 %v1351
    %v1353 = vand.u32 %v100, 4294901760
    %v1354 = vsub.f32 %v100, %v1353
    %1355 = vmatpush.msra.mxu0 %v1354
    %v1356 = vand.u32 %v96, 4294901760
    %v1357 = vsub.f32 %v96, %v1356
    %1358 = vmatpush.msra.mxu0 %v1357
    %v1359 = vand.u32 %v92, 4294901760
    %v1360 = vsub.f32 %v92, %v1359
    %1361 = vmatpush.msra.mxu0 %v1360
    %v1362 = vand.u32 %v88, 4294901760
    %v1363 = vsub.f32 %v88, %v1362
    %1364 = vmatpush.msra.mxu0 %v1363
    %v1365 = vand.u32 %v84, 4294901760
    %v1366 = vsub.f32 %v84, %v1365
    %1367 = vmatpush.msra.mxu0 %v1366
    %v1368 = vand.u32 %v80, 4294901760
    %v1369 = vsub.f32 %v80, %v1368
    %1370 = vmatmul.f32.gmra.mxu0 %v1369
    %v1371 = vpop.f32.mrf.mxu0
    %v1372 = vadd.f32 %v1318, %v1371
    %1373 = vdwg.mxu0
    %v1374 = vand.u32 %v144, 4294901760
    %1375 = vmatpush.msra.mxu0 %v1374
    %v1376 = vand.u32 %v140, 4294901760
    %1377 = vmatpush.msra.mxu0 %v1376
    %v1378 = vand.u32 %v136, 4294901760
    %1379 = vmatpush.msra.mxu0 %v1378
    %v1380 = vand.u32 %v132, 4294901760
    %1381 = vmatpush.msra.mxu0 %v1380
    %v1382 = vand.u32 %v128, 4294901760
    %1383 = vmatpush.msra.mxu0 %v1382
    %v1384 = vand.u32 %v124, 4294901760
    %1385 = vmatpush.msra.mxu0 %v1384
    %v1386 = vand.u32 %v120, 4294901760
    %1387 = vmatpush.msra.mxu0 %v1386
    %v1388 = vand.u32 %v116, 4294901760
    %1389 = vmatpush.msra.mxu0 %v1388
    %v1390 = vand.u32 %v112, 4294901760
    %1391 = vmatpush.msra.mxu0 %v1390
    %v1392 = vand.u32 %v108, 4294901760
    %1393 = vmatpush.msra.mxu0 %v1392
    %v1394 = vand.u32 %v104, 4294901760
    %1395 = vmatpush.msra.mxu0 %v1394
    %v1396 = vand.u32 %v100, 4294901760
    %1397 = vmatpush.msra.mxu0 %v1396
    %v1398 = vand.u32 %v96, 4294901760
    %1399 = vmatpush.msra.mxu0 %v1398
    %v1400 = vand.u32 %v92, 4294901760
    %1401 = vmatpush.msra.mxu0 %v1400
    %v1402 = vand.u32 %v88, 4294901760
    %1403 = vmatpush.msra.mxu0 %v1402
    %v1404 = vand.u32 %v84, 4294901760
    %1405 = vmatpush.msra.mxu0 %v1404
    %v1406 = vand.u32 %v80, 4294901760
    %v1407 = vsub.f32 %v80, %v1406
    %v1408 = vand.u32 %v1407, 4294901760
    %1409 = vmatmul.f32.gmra.mxu0 %v1408
    %v1410 = vpop.f32.mrf.mxu0
    %v1411 = vadd.f32 %v1372, %v1410
    %1412 = vdwg.mxu0
    %v1413 = vand.u32 %v144, 4294901760
    %v1414 = vsub.f32 %v144, %v1413
    %v1415 = vand.u32 %v1414, 4294901760
    %1416 = vmatpush.msra.mxu0 %v1415
    %v1417 = vand.u32 %v140, 4294901760
    %v1418 = vsub.f32 %v140, %v1417
    %v1419 = vand.u32 %v1418, 4294901760
    %1420 = vmatpush.msra.mxu0 %v1419
    %v1421 = vand.u32 %v136, 4294901760
    %v1422 = vsub.f32 %v136, %v1421
    %v1423 = vand.u32 %v1422, 4294901760
    %1424 = vmatpush.msra.mxu0 %v1423
    %v1425 = vand.u32 %v132, 4294901760
    %v1426 = vsub.f32 %v132, %v1425
    %v1427 = vand.u32 %v1426, 4294901760
    %1428 = vmatpush.msra.mxu0 %v1427
    %v1429 = vand.u32 %v128, 4294901760
    %v1430 = vsub.f32 %v128, %v1429
    %v1431 = vand.u32 %v1430, 4294901760
    %1432 = vmatpush.msra.mxu0 %v1431
    %v1433 = vand.u32 %v124, 4294901760
    %v1434 = vsub.f32 %v124, %v1433
    %v1435 = vand.u32 %v1434, 4294901760
    %1436 = vmatpush.msra.mxu0 %v1435
    %v1437 = vand.u32 %v120, 4294901760
    %v1438 = vsub.f32 %v120, %v1437
    %v1439 = vand.u32 %v1438, 4294901760
    %1440 = vmatpush.msra.mxu0 %v1439
    %v1441 = vand.u32 %v116, 4294901760
    %v1442 = vsub.f32 %v116, %v1441
    %v1443 = vand.u32 %v1442, 4294901760
    %1444 = vmatpush.msra.mxu0 %v1443
    %v1445 = vand.u32 %v112, 4294901760
    %v1446 = vsub.f32 %v112, %v1445
    %v1447 = vand.u32 %v1446, 4294901760
    %1448 = vmatpush.msra.mxu0 %v1447
    %v1449 = vand.u32 %v108, 4294901760
    %v1450 = vsub.f32 %v108, %v1449
    %v1451 = vand.u32 %v1450, 4294901760
    %1452 = vmatpush.msra.mxu0 %v1451
    %v1453 = vand.u32 %v104, 4294901760
    %v1454 = vsub.f32 %v104, %v1453
    %v1455 = vand.u32 %v1454, 4294901760
    %1456 = vmatpush.msra.mxu0 %v1455
    %v1457 = vand.u32 %v100, 4294901760
    %v1458 = vsub.f32 %v100, %v1457
    %v1459 = vand.u32 %v1458, 4294901760
    %1460 = vmatpush.msra.mxu0 %v1459
    %v1461 = vand.u32 %v96, 4294901760
    %v1462 = vsub.f32 %v96, %v1461
    %v1463 = vand.u32 %v1462, 4294901760
    %1464 = vmatpush.msra.mxu0 %v1463
    %v1465 = vand.u32 %v92, 4294901760
    %v1466 = vsub.f32 %v92, %v1465
    %v1467 = vand.u32 %v1466, 4294901760
    %1468 = vmatpush.msra.mxu0 %v1467
    %v1469 = vand.u32 %v88, 4294901760
    %v1470 = vsub.f32 %v88, %v1469
    %v1471 = vand.u32 %v1470, 4294901760
    %1472 = vmatpush.msra.mxu0 %v1471
    %v1473 = vand.u32 %v84, 4294901760
    %v1474 = vsub.f32 %v84, %v1473
    %v1475 = vand.u32 %v1474, 4294901760
    %1476 = vmatpush.msra.mxu0 %v1475
    %v1477 = vand.u32 %v80, 4294901760
    %1478 = vmatmul.f32.gmra.mxu0 %v1477
    %v1479 = vpop.f32.mrf.mxu0
    %v1480 = vadd.f32 %v1411, %v1479
    %1481 = vdwg.mxu0
    %v1482 = vand.u32 %v144, 4294901760
    %1483 = vmatpush.msra.mxu0 %v1482
    %v1484 = vand.u32 %v140, 4294901760
    %1485 = vmatpush.msra.mxu0 %v1484
    %v1486 = vand.u32 %v136, 4294901760
    %1487 = vmatpush.msra.mxu0 %v1486
    %v1488 = vand.u32 %v132, 4294901760
    %1489 = vmatpush.msra.mxu0 %v1488
    %v1490 = vand.u32 %v128, 4294901760
    %1491 = vmatpush.msra.mxu0 %v1490
    %v1492 = vand.u32 %v124, 4294901760
    %1493 = vmatpush.msra.mxu0 %v1492
    %v1494 = vand.u32 %v120, 4294901760
    %1495 = vmatpush.msra.mxu0 %v1494
    %v1496 = vand.u32 %v116, 4294901760
    %1497 = vmatpush.msra.mxu0 %v1496
    %v1498 = vand.u32 %v112, 4294901760
    %1499 = vmatpush.msra.mxu0 %v1498
    %v1500 = vand.u32 %v108, 4294901760
    %1501 = vmatpush.msra.mxu0 %v1500
    %v1502 = vand.u32 %v104, 4294901760
    %1503 = vmatpush.msra.mxu0 %v1502
    %v1504 = vand.u32 %v100, 4294901760
    %1505 = vmatpush.msra.mxu0 %v1504
    %v1506 = vand.u32 %v96, 4294901760
    %1507 = vmatpush.msra.mxu0 %v1506
    %v1508 = vand.u32 %v92, 4294901760
    %1509 = vmatpush.msra.mxu0 %v1508
    %v1510 = vand.u32 %v88, 4294901760
    %1511 = vmatpush.msra.mxu0 %v1510
    %v1512 = vand.u32 %v84, 4294901760
    %1513 = vmatpush.msra.mxu0 %v1512
    %v1514 = vand.u32 %v80, 4294901760
    %1515 = vmatmul.f32.gmra.mxu0 %v1514
    %v1516 = vpop.f32.mrf.mxu0
    %v1517 = vadd.f32 %v1480, %v1516
    %1518 = vdwg.mxu0
    %v1519 = vmax.f32 %v494, 0.0
    %v1520 = vmax.f32 %v835, 0.0
    %v1521 = vmax.f32 %v1176, 0.0
    %v1522 = vmax.f32 %v1517, 0.0
    %v1523 = vld [vmem:[#allocation8] sm:$0xff]
    %v1524 = vld [vmem:[#allocation8 + $0x8] sm:$0xff]
    %v1525 = vld [vmem:[#allocation8 + $0x10] sm:$0xff]
    %v1526 = vld [vmem:[#allocation8 + $0x18] sm:$0xff]
    %v1527 = vld [vmem:[#allocation8 + $0x20] sm:$0xff]
    %v1528 = vld [vmem:[#allocation8 + $0x28] sm:$0xff]
    %v1529 = vld [vmem:[#allocation8 + $0x30] sm:$0xff]
    %v1530 = vld [vmem:[#allocation8 + $0x38] sm:$0xff]
    %v1531 = vld [vmem:[#allocation8 + $0x40] sm:$0xff]
    %v1532 = vld [vmem:[#allocation8 + $0x48] sm:$0xff]
    %v1533 = vld [vmem:[#allocation8 + $0x50] sm:$0xff]
    %v1534 = vld [vmem:[#allocation8 + $0x58] sm:$0xff]
    %v1535 = vld [vmem:[#allocation8 + $0x60] sm:$0xff]
    %v1536 = vld [vmem:[#allocation8 + $0x68] sm:$0xff]
    %v1537 = vld [vmem:[#allocation8 + $0x70] sm:$0xff]
    %v1538 = vld [vmem:[#allocation8 + $0x78] sm:$0xff]
    %v1539 = vld [vmem:[#allocation8 + $0x80] sm:$0xff]
    %v1540 = vld [vmem:[#allocation8 + $0x88] sm:$0xff]
    %v1541 = vld [vmem:[#allocation8 + $0x90] sm:$0xff]
    %v1542 = vld [vmem:[#allocation8 + $0x98] sm:$0xff]
    %v1543 = vld [vmem:[#allocation8 + $0xa0] sm:$0xff]
    %v1544 = vld [vmem:[#allocation8 + $0xa8] sm:$0xff]
    %v1545 = vld [vmem:[#allocation8 + $0xb0] sm:$0xff]
    %v1546 = vld [vmem:[#allocation8 + $0xb8] sm:$0xff]
    %v1547 = vld [vmem:[#allocation8 + $0xc0] sm:$0xff]
    %v1548 = vld [vmem:[#allocation8 + $0xc8] sm:$0xff]
    %v1549 = vld [vmem:[#allocation8 + $0xd0] sm:$0xff]
    %v1550 = vld [vmem:[#allocation8 + $0xd8] sm:$0xff]
    %v1551 = vld [vmem:[#allocation8 + $0xe0] sm:$0xff]
    %v1552 = vld [vmem:[#allocation8 + $0xe8] sm:$0xff]
    %v1553 = vld [vmem:[#allocation8 + $0xf0] sm:$0xff]
    %v1554 = vld [vmem:[#allocation8 + $0xf8] sm:$0xff]
    %v1555 = vld [vmem:[#allocation8 + $0x100] sm:$0xff]
    %v1556 = vld [vmem:[#allocation8 + $0x108] sm:$0xff]
    %v1557 = vld [vmem:[#allocation8 + $0x110] sm:$0xff]
    %v1558 = vld [vmem:[#allocation8 + $0x118] sm:$0xff]
    %v1559 = vld [vmem:[#allocation8 + $0x120] sm:$0xff]
    %v1560 = vld [vmem:[#allocation8 + $0x128] sm:$0xff]
    %v1561 = vld [vmem:[#allocation8 + $0x130] sm:$0xff]
    %v1562 = vld [vmem:[#allocation8 + $0x138] sm:$0xff]
    %v1563 = vld [vmem:[#allocation8 + $0x140] sm:$0xff]
    %v1564 = vld [vmem:[#allocation8 + $0x148] sm:$0xff]
    %v1565 = vld [vmem:[#allocation8 + $0x150] sm:$0xff]
    %v1566 = vld [vmem:[#allocation8 + $0x158] sm:$0xff]
    %v1567 = vld [vmem:[#allocation8 + $0x160] sm:$0xff]
    %v1568 = vld [vmem:[#allocation8 + $0x168] sm:$0xff]
    %v1569 = vld [vmem:[#allocation8 + $0x170] sm:$0xff]
    %v1570 = vld [vmem:[#allocation8 + $0x178] sm:$0xff]
    %v1571 = vld [vmem:[#allocation8 + $0x180] sm:$0xff]
    %v1572 = vld [vmem:[#allocation8 + $0x188] sm:$0xff]
    %v1573 = vld [vmem:[#allocation8 + $0x190] sm:$0xff]
    %v1574 = vld [vmem:[#allocation8 + $0x198] sm:$0xff]
    %v1575 = vld [vmem:[#allocation8 + $0x1a0] sm:$0xff]
    %v1576 = vld [vmem:[#allocation8 + $0x1a8] sm:$0xff]
    %v1577 = vld [vmem:[#allocation8 + $0x1b0] sm:$0xff]
    %v1578 = vld [vmem:[#allocation8 + $0x1b8] sm:$0xff]
    %v1579 = vld [vmem:[#allocation8 + $0x1c0] sm:$0xff]
    %v1580 = vld [vmem:[#allocation8 + $0x1c8] sm:$0xff]
    %v1581 = vld [vmem:[#allocation8 + $0x1d0] sm:$0xff]
    %v1582 = vld [vmem:[#allocation8 + $0x1d8] sm:$0xff]
    %v1583 = vld [vmem:[#allocation8 + $0x1e0] sm:$0xff]
    %v1584 = vld [vmem:[#allocation8 + $0x1e8] sm:$0xff]
    %v1585 = vld [vmem:[#allocation8 + $0x1f0] sm:$0xff]
    %v1586 = vld [vmem:[#allocation8 + $0x1f8] sm:$0xff]
    %v1587 = vld [vmem:[#allocation8 + $0x200] sm:$0xff]
    %v1588 = vld [vmem:[#allocation8 + $0x208] sm:$0xff]
    %v1589 = vld [vmem:[#allocation8 + $0x210] sm:$0xff]
    %v1590 = vld [vmem:[#allocation8 + $0x218] sm:$0xff]
    %v1591 = vld [vmem:[#allocation8 + $0x220] sm:$0xff]
    %v1592 = vld [vmem:[#allocation8 + $0x228] sm:$0xff]
    %v1593 = vld [vmem:[#allocation8 + $0x230] sm:$0xff]
    %v1594 = vld [vmem:[#allocation8 + $0x238] sm:$0xff]
    %v1595 = vld [vmem:[#allocation8 + $0x240] sm:$0xff]
    %v1596 = vld [vmem:[#allocation8 + $0x248] sm:$0xff]
    %v1597 = vld [vmem:[#allocation8 + $0x250] sm:$0xff]
    %v1598 = vld [vmem:[#allocation8 + $0x258] sm:$0xff]
    %v1599 = vld [vmem:[#allocation8 + $0x260] sm:$0xff]
    %v1600 = vld [vmem:[#allocation8 + $0x268] sm:$0xff]
    %v1601 = vld [vmem:[#allocation8 + $0x270] sm:$0xff]
    %v1602 = vld [vmem:[#allocation8 + $0x278] sm:$0xff]
    %v1603 = vld [vmem:[#allocation8 + $0x280] sm:$0xff]
    %v1604 = vld [vmem:[#allocation8 + $0x288] sm:$0xff]
    %v1605 = vld [vmem:[#allocation8 + $0x290] sm:$0xff]
    %v1606 = vld [vmem:[#allocation8 + $0x298] sm:$0xff]
    %v1607 = vld [vmem:[#allocation8 + $0x2a0] sm:$0xff]
    %v1608 = vld [vmem:[#allocation8 + $0x2a8] sm:$0xff]
    %v1609 = vld [vmem:[#allocation8 + $0x2b0] sm:$0xff]
    %v1610 = vld [vmem:[#allocation8 + $0x2b8] sm:$0xff]
    %v1611 = vld [vmem:[#allocation8 + $0x2c0] sm:$0xff]
    %v1612 = vld [vmem:[#allocation8 + $0x2c8] sm:$0xff]
    %v1613 = vld [vmem:[#allocation8 + $0x2d0] sm:$0xff]
    %v1614 = vld [vmem:[#allocation8 + $0x2d8] sm:$0xff]
    %v1615 = vld [vmem:[#allocation8 + $0x2e0] sm:$0xff]
    %v1616 = vld [vmem:[#allocation8 + $0x2e8] sm:$0xff]
    %v1617 = vld [vmem:[#allocation8 + $0x2f0] sm:$0xff]
    %v1618 = vld [vmem:[#allocation8 + $0x2f8] sm:$0xff]
    %v1619 = vld [vmem:[#allocation8 + $0x300] sm:$0xff]
    %v1620 = vld [vmem:[#allocation8 + $0x308] sm:$0xff]
    %v1621 = vld [vmem:[#allocation8 + $0x310] sm:$0xff]
    %v1622 = vld [vmem:[#allocation8 + $0x318] sm:$0xff]
    %v1623 = vld [vmem:[#allocation8 + $0x320] sm:$0xff]
    %v1624 = vld [vmem:[#allocation8 + $0x328] sm:$0xff]
    %v1625 = vld [vmem:[#allocation8 + $0x330] sm:$0xff]
    %v1626 = vld [vmem:[#allocation8 + $0x338] sm:$0xff]
    %v1627 = vld [vmem:[#allocation8 + $0x340] sm:$0xff]
    %v1628 = vld [vmem:[#allocation8 + $0x348] sm:$0xff]
    %v1629 = vld [vmem:[#allocation8 + $0x350] sm:$0xff]
    %v1630 = vld [vmem:[#allocation8 + $0x358] sm:$0xff]
    %v1631 = vld [vmem:[#allocation8 + $0x360] sm:$0xff]
    %v1632 = vld [vmem:[#allocation8 + $0x368] sm:$0xff]
    %v1633 = vld [vmem:[#allocation8 + $0x370] sm:$0xff]
    %v1634 = vld [vmem:[#allocation8 + $0x378] sm:$0xff]
    %v1635 = vld [vmem:[#allocation8 + $0x380] sm:$0xff]
    %v1636 = vld [vmem:[#allocation8 + $0x388] sm:$0xff]
    %v1637 = vld [vmem:[#allocation8 + $0x390] sm:$0xff]
    %v1638 = vld [vmem:[#allocation8 + $0x398] sm:$0xff]
    %v1639 = vld [vmem:[#allocation8 + $0x3a0] sm:$0xff]
    %v1640 = vld [vmem:[#allocation8 + $0x3a8] sm:$0xff]
    %v1641 = vld [vmem:[#allocation8 + $0x3b0] sm:$0xff]
    %v1642 = vld [vmem:[#allocation8 + $0x3b8] sm:$0xff]
    %v1643 = vld [vmem:[#allocation8 + $0x3c0] sm:$0xff]
    %v1644 = vld [vmem:[#allocation8 + $0x3c8] sm:$0xff]
    %v1645 = vld [vmem:[#allocation8 + $0x3d0] sm:$0xff]
    %v1646 = vld [vmem:[#allocation8 + $0x3d8] sm:$0xff]
    %v1647 = vld [vmem:[#allocation8 + $0x3e0] sm:$0xff]
    %v1648 = vld [vmem:[#allocation8 + $0x3e8] sm:$0xff]
    %v1649 = vld [vmem:[#allocation8 + $0x3f0] sm:$0xff]
    %v1650 = vld [vmem:[#allocation8 + $0x3f8] sm:$0xff]
    %v1651 = vld [vmem:[%s4] sm:$0x3]
    %v1653 = vperm.slane %v1651, 0
    %v1654 = vperm.slane %v1651, 1
    %v1657 = vand.u32 %v1553, 4294901760
    %1658 = vmatpush.msra.mxu0 %v1657
    %v1659 = vand.u32 %v1551, 4294901760
    %1660 = vmatpush.msra.mxu0 %v1659
    %v1661 = vand.u32 %v1549, 4294901760
    %1662 = vmatpush.msra.mxu0 %v1661
    %v1663 = vand.u32 %v1547, 4294901760
    %1664 = vmatpush.msra.mxu0 %v1663
    %v1665 = vand.u32 %v1545, 4294901760
    %1666 = vmatpush.msra.mxu0 %v1665
    %v1667 = vand.u32 %v1543, 4294901760
    %1668 = vmatpush.msra.mxu0 %v1667
    %v1669 = vand.u32 %v1541, 4294901760
    %1670 = vmatpush.msra.mxu0 %v1669
    %v1671 = vand.u32 %v1539, 4294901760
    %1672 = vmatpush.msra.mxu0 %v1671
    %v1673 = vand.u32 %v1537, 4294901760
    %1674 = vmatpush.msra.mxu0 %v1673
    %v1675 = vand.u32 %v1535, 4294901760
    %1676 = vmatpush.msra.mxu0 %v1675
    %v1677 = vand.u32 %v1533, 4294901760
    %1678 = vmatpush.msra.mxu0 %v1677
    %v1679 = vand.u32 %v1531, 4294901760
    %1680 = vmatpush.msra.mxu0 %v1679
    %v1681 = vand.u32 %v1529, 4294901760
    %1682 = vmatpush.msra.mxu0 %v1681
    %v1683 = vand.u32 %v1527, 4294901760
    %1684 = vmatpush.msra.mxu0 %v1683
    %v1685 = vand.u32 %v1525, 4294901760
    %1686 = vmatpush.msra.mxu0 %v1685
    %v1687 = vand.u32 %v1523, 4294901760
    %1688 = vmatpush.msra.mxu0 %v1687
    %v1689 = vand.u32 %v1519, 4294901760
    %v1690 = vsub.f32 %v1519, %v1689
    %v1691 = vand.u32 %v1690, 4294901760
    %v1692 = vsub.f32 %v1690, %v1691
    %v1693 = vand.u32 %v1692, 4294901760
    %1694 = vmatmul.f32.gmra.mxu0 %v1693
    %v1695 = vpop.f32.mrf.mxu0
    %v1696 = vadd.f32 %v1653, %v1695
    %1697 = vdwg.mxu0
    %v1698 = vand.u32 %v1553, 4294901760
    %v1699 = vsub.f32 %v1553, %v1698
    %v1700 = vand.u32 %v1699, 4294901760
    %v1701 = vsub.f32 %v1699, %v1700
    %v1702 = vand.u32 %v1701, 4294901760
    %1703 = vmatpush.msra.mxu0 %v1702
    %v1704 = vand.u32 %v1551, 4294901760
    %v1705 = vsub.f32 %v1551, %v1704
    %v1706 = vand.u32 %v1705, 4294901760
    %v1707 = vsub.f32 %v1705, %v1706
    %v1708 = vand.u32 %v1707, 4294901760
    %1709 = vmatpush.msra.mxu0 %v1708
    %v1710 = vand.u32 %v1549, 4294901760
    %v1711 = vsub.f32 %v1549, %v1710
    %v1712 = vand.u32 %v1711, 4294901760
    %v1713 = vsub.f32 %v1711, %v1712
    %v1714 = vand.u32 %v1713, 4294901760
    %1715 = vmatpush.msra.mxu0 %v1714
    %v1716 = vand.u32 %v1547, 4294901760
    %v1717 = vsub.f32 %v1547, %v1716
    %v1718 = vand.u32 %v1717, 4294901760
    %v1719 = vsub.f32 %v1717, %v1718
    %v1720 = vand.u32 %v1719, 4294901760
    %1721 = vmatpush.msra.mxu0 %v1720
    %v1722 = vand.u32 %v1545, 4294901760
    %v1723 = vsub.f32 %v1545, %v1722
    %v1724 = vand.u32 %v1723, 4294901760
    %v1725 = vsub.f32 %v1723, %v1724
    %v1726 = vand.u32 %v1725, 4294901760
    %1727 = vmatpush.msra.mxu0 %v1726
    %v1728 = vand.u32 %v1543, 4294901760
    %v1729 = vsub.f32 %v1543, %v1728
    %v1730 = vand.u32 %v1729, 4294901760
    %v1731 = vsub.f32 %v1729, %v1730
    %v1732 = vand.u32 %v1731, 4294901760
    %1733 = vmatpush.msra.mxu0 %v1732
    %v1734 = vand.u32 %v1541, 4294901760
    %v1735 = vsub.f32 %v1541, %v1734
    %v1736 = vand.u32 %v1735, 4294901760
    %v1737 = vsub.f32 %v1735, %v1736
    %v1738 = vand.u32 %v1737, 4294901760
    %1739 = vmatpush.msra.mxu0 %v1738
    %v1740 = vand.u32 %v1539, 4294901760
    %v1741 = vsub.f32 %v1539, %v1740
    %v1742 = vand.u32 %v1741, 4294901760
    %v1743 = vsub.f32 %v1741, %v1742
    %v1744 = vand.u32 %v1743, 4294901760
    %1745 = vmatpush.msra.mxu0 %v1744
    %v1746 = vand.u32 %v1537, 4294901760
    %v1747 = vsub.f32 %v1537, %v1746
    %v1748 = vand.u32 %v1747, 4294901760
    %v1749 = vsub.f32 %v1747, %v1748
    %v1750 = vand.u32 %v1749, 4294901760
    %1751 = vmatpush.msra.mxu0 %v1750
    %v1752 = vand.u32 %v1535, 4294901760
    %v1753 = vsub.f32 %v1535, %v1752
    %v1754 = vand.u32 %v1753, 4294901760
    %v1755 = vsub.f32 %v1753, %v1754
    %v1756 = vand.u32 %v1755, 4294901760
    %1757 = vmatpush.msra.mxu0 %v1756
    %v1758 = vand.u32 %v1533, 4294901760
    %v1759 = vsub.f32 %v1533, %v1758
    %v1760 = vand.u32 %v1759, 4294901760
    %v1761 = vsub.f32 %v1759, %v1760
    %v1762 = vand.u32 %v1761, 4294901760
    %1763 = vmatpush.msra.mxu0 %v1762
    %v1764 = vand.u32 %v1531, 4294901760
    %v1765 = vsub.f32 %v1531, %v1764
    %v1766 = vand.u32 %v1765, 4294901760
    %v1767 = vsub.f32 %v1765, %v1766
    %v1768 = vand.u32 %v1767, 4294901760
    %1769 = vmatpush.msra.mxu0 %v1768
    %v1770 = vand.u32 %v1529, 4294901760
    %v1771 = vsub.f32 %v1529, %v1770
    %v1772 = vand.u32 %v1771, 4294901760
    %v1773 = vsub.f32 %v1771, %v1772
    %v1774 = vand.u32 %v1773, 4294901760
    %1775 = vmatpush.msra.mxu0 %v1774
    %v1776 = vand.u32 %v1527, 4294901760
    %v1777 = vsub.f32 %v1527, %v1776
    %v1778 = vand.u32 %v1777, 4294901760
    %v1779 = vsub.f32 %v1777, %v1778
    %v1780 = vand.u32 %v1779, 4294901760
    %1781 = vmatpush.msra.mxu0 %v1780
    %v1782 = vand.u32 %v1525, 4294901760
    %v1783 = vsub.f32 %v1525, %v1782
    %v1784 = vand.u32 %v1783, 4294901760
    %v1785 = vsub.f32 %v1783, %v1784
    %v1786 = vand.u32 %v1785, 4294901760
    %1787 = vmatpush.msra.mxu0 %v1786
    %v1788 = vand.u32 %v1523, 4294901760
    %v1789 = vsub.f32 %v1523, %v1788
    %v1790 = vand.u32 %v1789, 4294901760
    %v1791 = vsub.f32 %v1789, %v1790
    %v1792 = vand.u32 %v1791, 4294901760
    %1793 = vmatpush.msra.mxu0 %v1792
    %v1794 = vand.u32 %v1519, 4294901760
    %1795 = vmatmul.f32.gmra.mxu0 %v1794
    %v1796 = vpop.f32.mrf.mxu0
    %v1797 = vadd.f32 %v1696, %v1796
    %1798 = vdwg.mxu0
    %v1799 = vand.u32 %v1553, 4294901760
    %v1800 = vsub.f32 %v1553, %v1799
    %1801 = vmatpush.msra.mxu0 %v1800
    %v1802 = vand.u32 %v1551, 4294901760
    %v1803 = vsub.f32 %v1551, %v1802
    %1804 = vmatpush.msra.mxu0 %v1803
    %v1805 = vand.u32 %v1549, 4294901760
    %v1806 = vsub.f32 %v1549, %v1805
    %1807 = vmatpush.msra.mxu0 %v1806
    %v1808 = vand.u32 %v1547, 4294901760
    %v1809 = vsub.f32 %v1547, %v1808
    %1810 = vmatpush.msra.mxu0 %v1809
    %v1811 = vand.u32 %v1545, 4294901760
    %v1812 = vsub.f32 %v1545, %v1811
    %1813 = vmatpush.msra.mxu0 %v1812
    %v1814 = vand.u32 %v1543, 4294901760
    %v1815 = vsub.f32 %v1543, %v1814
    %1816 = vmatpush.msra.mxu0 %v1815
    %v1817 = vand.u32 %v1541, 4294901760
    %v1818 = vsub.f32 %v1541, %v1817
    %1819 = vmatpush.msra.mxu0 %v1818
    %v1820 = vand.u32 %v1539, 4294901760
    %v1821 = vsub.f32 %v1539, %v1820
    %1822 = vmatpush.msra.mxu0 %v1821
    %v1823 = vand.u32 %v1537, 4294901760
    %v1824 = vsub.f32 %v1537, %v1823
    %1825 = vmatpush.msra.mxu0 %v1824
    %v1826 = vand.u32 %v1535, 4294901760
    %v1827 = vsub.f32 %v1535, %v1826
    %1828 = vmatpush.msra.mxu0 %v1827
    %v1829 = vand.u32 %v1533, 4294901760
    %v1830 = vsub.f32 %v1533, %v1829
    %1831 = vmatpush.msra.mxu0 %v1830
    %v1832 = vand.u32 %v1531, 4294901760
    %v1833 = vsub.f32 %v1531, %v1832
    %1834 = vmatpush.msra.mxu0 %v1833
    %v1835 = vand.u32 %v1529, 4294901760
    %v1836 = vsub.f32 %v1529, %v1835
    %1837 = vmatpush.msra.mxu0 %v1836
    %v1838 = vand.u32 %v1527, 4294901760
    %v1839 = vsub.f32 %v1527, %v1838
    %1840 = vmatpush.msra.mxu0 %v1839
    %v1841 = vand.u32 %v1525, 4294901760
    %v1842 = vsub.f32 %v1525, %v1841
    %1843 = vmatpush.msra.mxu0 %v1842
    %v1844 = vand.u32 %v1523, 4294901760
    %v1845 = vsub.f32 %v1523, %v1844
    %1846 = vmatpush.msra.mxu0 %v1845
    %v1847 = vand.u32 %v1519, 4294901760
    %v1848 = vsub.f32 %v1519, %v1847
    %1849 = vmatmul.f32.gmra.mxu0 %v1848
    %v1850 = vpop.f32.mrf.mxu0
    %v1851 = vadd.f32 %v1797, %v1850
    %1852 = vdwg.mxu0
    %v1853 = vand.u32 %v1553, 4294901760
    %1854 = vmatpush.msra.mxu0 %v1853
    %v1855 = vand.u32 %v1551, 4294901760
    %1856 = vmatpush.msra.mxu0 %v1855
    %v1857 = vand.u32 %v1549, 4294901760
    %1858 = vmatpush.msra.mxu0 %v1857
    %v1859 = vand.u32 %v1547, 4294901760
    %1860 = vmatpush.msra.mxu0 %v1859
    %v1861 = vand.u32 %v1545, 4294901760
    %1862 = vmatpush.msra.mxu0 %v1861
    %v1863 = vand.u32 %v1543, 4294901760
    %1864 = vmatpush.msra.mxu0 %v1863
    %v1865 = vand.u32 %v1541, 4294901760
    %1866 = vmatpush.msra.mxu0 %v1865
    %v1867 = vand.u32 %v1539, 4294901760
    %1868 = vmatpush.msra.mxu0 %v1867
    %v1869 = vand.u32 %v1537, 4294901760
    %1870 = vmatpush.msra.mxu0 %v1869
    %v1871 = vand.u32 %v1535, 4294901760
    %1872 = vmatpush.msra.mxu0 %v1871
    %v1873 = vand.u32 %v1533, 4294901760
    %1874 = vmatpush.msra.mxu0 %v1873
    %v1875 = vand.u32 %v1531, 4294901760
    %1876 = vmatpush.msra.mxu0 %v1875
    %v1877 = vand.u32 %v1529, 4294901760
    %1878 = vmatpush.msra.mxu0 %v1877
    %v1879 = vand.u32 %v1527, 4294901760
    %1880 = vmatpush.msra.mxu0 %v1879
    %v1881 = vand.u32 %v1525, 4294901760
    %1882 = vmatpush.msra.mxu0 %v1881
    %v1883 = vand.u32 %v1523, 4294901760
    %1884 = vmatpush.msra.mxu0 %v1883
    %v1885 = vand.u32 %v1519, 4294901760
    %v1886 = vsub.f32 %v1519, %v1885
    %v1887 = vand.u32 %v1886, 4294901760
    %1888 = vmatmul.f32.gmra.mxu0 %v1887
    %v1889 = vpop.f32.mrf.mxu0
    %v1890 = vadd.f32 %v1851, %v1889
    %1891 = vdwg.mxu0
    %v1892 = vand.u32 %v1553, 4294901760
    %v1893 = vsub.f32 %v1553, %v1892
    %v1894 = vand.u32 %v1893, 4294901760
    %1895 = vmatpush.msra.mxu0 %v1894
    %v1896 = vand.u32 %v1551, 4294901760
    %v1897 = vsub.f32 %v1551, %v1896
    %v1898 = vand.u32 %v1897, 4294901760
    %1899 = vmatpush.msra.mxu0 %v1898
    %v1900 = vand.u32 %v1549, 4294901760
    %v1901 = vsub.f32 %v1549, %v1900
    %v1902 = vand.u32 %v1901, 4294901760
    %1903 = vmatpush.msra.mxu0 %v1902
    %v1904 = vand.u32 %v1547, 4294901760
    %v1905 = vsub.f32 %v1547, %v1904
    %v1906 = vand.u32 %v1905, 4294901760
    %1907 = vmatpush.msra.mxu0 %v1906
    %v1908 = vand.u32 %v1545, 4294901760
    %v1909 = vsub.f32 %v1545, %v1908
    %v1910 = vand.u32 %v1909, 4294901760
    %1911 = vmatpush.msra.mxu0 %v1910
    %v1912 = vand.u32 %v1543, 4294901760
    %v1913 = vsub.f32 %v1543, %v1912
    %v1914 = vand.u32 %v1913, 4294901760
    %1915 = vmatpush.msra.mxu0 %v1914
    %v1916 = vand.u32 %v1541, 4294901760
    %v1917 = vsub.f32 %v1541, %v1916
    %v1918 = vand.u32 %v1917, 4294901760
    %1919 = vmatpush.msra.mxu0 %v1918
    %v1920 = vand.u32 %v1539, 4294901760
    %v1921 = vsub.f32 %v1539, %v1920
    %v1922 = vand.u32 %v1921, 4294901760
    %1923 = vmatpush.msra.mxu0 %v1922
    %v1924 = vand.u32 %v1537, 4294901760
    %v1925 = vsub.f32 %v1537, %v1924
    %v1926 = vand.u32 %v1925, 4294901760
    %1927 = vmatpush.msra.mxu0 %v1926
    %v1928 = vand.u32 %v1535, 4294901760
    %v1929 = vsub.f32 %v1535, %v1928
    %v1930 = vand.u32 %v1929, 4294901760
    %1931 = vmatpush.msra.mxu0 %v1930
    %v1932 = vand.u32 %v1533, 4294901760
    %v1933 = vsub.f32 %v1533, %v1932
    %v1934 = vand.u32 %v1933, 4294901760
    %1935 = vmatpush.msra.mxu0 %v1934
    %v1936 = vand.u32 %v1531, 4294901760
    %v1937 = vsub.f32 %v1531, %v1936
    %v1938 = vand.u32 %v1937, 4294901760
    %1939 = vmatpush.msra.mxu0 %v1938
    %v1940 = vand.u32 %v1529, 4294901760
    %v1941 = vsub.f32 %v1529, %v1940
    %v1942 = vand.u32 %v1941, 4294901760
    %1943 = vmatpush.msra.mxu0 %v1942
    %v1944 = vand.u32 %v1527, 4294901760
    %v1945 = vsub.f32 %v1527, %v1944
    %v1946 = vand.u32 %v1945, 4294901760
    %1947 = vmatpush.msra.mxu0 %v1946
    %v1948 = vand.u32 %v1525, 4294901760
    %v1949 = vsub.f32 %v1525, %v1948
    %v1950 = vand.u32 %v1949, 4294901760
    %1951 = vmatpush.msra.mxu0 %v1950
    %v1952 = vand.u32 %v1523, 4294901760
    %v1953 = vsub.f32 %v1523, %v1952
    %v1954 = vand.u32 %v1953, 4294901760
    %1955 = vmatpush.msra.mxu0 %v1954
    %v1956 = vand.u32 %v1519, 4294901760
    %1957 = vmatmul.f32.gmra.mxu0 %v1956
    %v1958 = vpop.f32.mrf.mxu0
    %v1959 = vadd.f32 %v1890, %v1958
    %1960 = vdwg.mxu0
    %v1961 = vand.u32 %v1553, 4294901760
    %1962 = vmatpush.msra.mxu0 %v1961
    %v1963 = vand.u32 %v1551, 4294901760
    %1964 = vmatpush.msra.mxu0 %v1963
    %v1965 = vand.u32 %v1549, 4294901760
    %1966 = vmatpush.msra.mxu0 %v1965
    %v1967 = vand.u32 %v1547, 4294901760
    %1968 = vmatpush.msra.mxu0 %v1967
    %v1969 = vand.u32 %v1545, 4294901760
    %1970 = vmatpush.msra.mxu0 %v1969
    %v1971 = vand.u32 %v1543, 4294901760
    %1972 = vmatpush.msra.mxu0 %v1971
    %v1973 = vand.u32 %v1541, 4294901760
    %1974 = vmatpush.msra.mxu0 %v1973
    %v1975 = vand.u32 %v1539, 4294901760
    %1976 = vmatpush.msra.mxu0 %v1975
    %v1977 = vand.u32 %v1537, 4294901760
    %1978 = vmatpush.msra.mxu0 %v1977
    %v1979 = vand.u32 %v1535, 4294901760
    %1980 = vmatpush.msra.mxu0 %v1979
    %v1981 = vand.u32 %v1533, 4294901760
    %1982 = vmatpush.msra.mxu0 %v1981
    %v1983 = vand.u32 %v1531, 4294901760
    %1984 = vmatpush.msra.mxu0 %v1983
    %v1985 = vand.u32 %v1529, 4294901760
    %1986 = vmatpush.msra.mxu0 %v1985
    %v1987 = vand.u32 %v1527, 4294901760
    %1988 = vmatpush.msra.mxu0 %v1987
    %v1989 = vand.u32 %v1525, 4294901760
    %1990 = vmatpush.msra.mxu0 %v1989
    %v1991 = vand.u32 %v1523, 4294901760
    %1992 = vmatpush.msra.mxu0 %v1991
    %v1993 = vand.u32 %v1519, 4294901760
    %1994 = vmatmul.f32.gmra.mxu0 %v1993
    %v1995 = vpop.f32.mrf.mxu0
    %v1996 = vadd.f32 %v1959, %v1995
    %1997 = vdwg.mxu0
    %v1998 = vand.u32 %v1585, 4294901760
    %1999 = vmatpush.msra.mxu0 %v1998
    %v2000 = vand.u32 %v1583, 4294901760
    %2001 = vmatpush.msra.mxu0 %v2000
    %v2002 = vand.u32 %v1581, 4294901760
    %2003 = vmatpush.msra.mxu0 %v2002
    %v2004 = vand.u32 %v1579, 4294901760
    %2005 = vmatpush.msra.mxu0 %v2004
    %v2006 = vand.u32 %v1577, 4294901760
    %2007 = vmatpush.msra.mxu0 %v2006
    %v2008 = vand.u32 %v1575, 4294901760
    %2009 = vmatpush.msra.mxu0 %v2008
    %v2010 = vand.u32 %v1573, 4294901760
    %2011 = vmatpush.msra.mxu0 %v2010
    %v2012 = vand.u32 %v1571, 4294901760
    %2013 = vmatpush.msra.mxu0 %v2012
    %v2014 = vand.u32 %v1569, 4294901760
    %2015 = vmatpush.msra.mxu0 %v2014
    %v2016 = vand.u32 %v1567, 4294901760
    %2017 = vmatpush.msra.mxu0 %v2016
    %v2018 = vand.u32 %v1565, 4294901760
    %2019 = vmatpush.msra.mxu0 %v2018
    %v2020 = vand.u32 %v1563, 4294901760
    %2021 = vmatpush.msra.mxu0 %v2020
    %v2022 = vand.u32 %v1561, 4294901760
    %2023 = vmatpush.msra.mxu0 %v2022
    %v2024 = vand.u32 %v1559, 4294901760
    %2025 = vmatpush.msra.mxu0 %v2024
    %v2026 = vand.u32 %v1557, 4294901760
    %2027 = vmatpush.msra.mxu0 %v2026
    %v2028 = vand.u32 %v1555, 4294901760
    %2029 = vmatpush.msra.mxu0 %v2028
    %v2030 = vand.u32 %v1520, 4294901760
    %v2031 = vsub.f32 %v1520, %v2030
    %v2032 = vand.u32 %v2031, 4294901760
    %v2033 = vsub.f32 %v2031, %v2032
    %v2034 = vand.u32 %v2033, 4294901760
    %2035 = vmatmul.f32.gmra.mxu0 %v2034
    %v2036 = vpop.f32.mrf.mxu0
    %v2037 = vadd.f32 %v1996, %v2036
    %2038 = vdwg.mxu0
    %v2039 = vand.u32 %v1585, 4294901760
    %v2040 = vsub.f32 %v1585, %v2039
    %v2041 = vand.u32 %v2040, 4294901760
    %v2042 = vsub.f32 %v2040, %v2041
    %v2043 = vand.u32 %v2042, 4294901760
    %2044 = vmatpush.msra.mxu0 %v2043
    %v2045 = vand.u32 %v1583, 4294901760
    %v2046 = vsub.f32 %v1583, %v2045
    %v2047 = vand.u32 %v2046, 4294901760
    %v2048 = vsub.f32 %v2046, %v2047
    %v2049 = vand.u32 %v2048, 4294901760
    %2050 = vmatpush.msra.mxu0 %v2049
    %v2051 = vand.u32 %v1581, 4294901760
    %v2052 = vsub.f32 %v1581, %v2051
    %v2053 = vand.u32 %v2052, 4294901760
    %v2054 = vsub.f32 %v2052, %v2053
    %v2055 = vand.u32 %v2054, 4294901760
    %2056 = vmatpush.msra.mxu0 %v2055
    %v2057 = vand.u32 %v1579, 4294901760
    %v2058 = vsub.f32 %v1579, %v2057
    %v2059 = vand.u32 %v2058, 4294901760
    %v2060 = vsub.f32 %v2058, %v2059
    %v2061 = vand.u32 %v2060, 4294901760
    %2062 = vmatpush.msra.mxu0 %v2061
    %v2063 = vand.u32 %v1577, 4294901760
    %v2064 = vsub.f32 %v1577, %v2063
    %v2065 = vand.u32 %v2064, 4294901760
    %v2066 = vsub.f32 %v2064, %v2065
    %v2067 = vand.u32 %v2066, 4294901760
    %2068 = vmatpush.msra.mxu0 %v2067
    %v2069 = vand.u32 %v1575, 4294901760
    %v2070 = vsub.f32 %v1575, %v2069
    %v2071 = vand.u32 %v2070, 4294901760
    %v2072 = vsub.f32 %v2070, %v2071
    %v2073 = vand.u32 %v2072, 4294901760
    %2074 = vmatpush.msra.mxu0 %v2073
    %v2075 = vand.u32 %v1573, 4294901760
    %v2076 = vsub.f32 %v1573, %v2075
    %v2077 = vand.u32 %v2076, 4294901760
    %v2078 = vsub.f32 %v2076, %v2077
    %v2079 = vand.u32 %v2078, 4294901760
    %2080 = vmatpush.msra.mxu0 %v2079
    %v2081 = vand.u32 %v1571, 4294901760
    %v2082 = vsub.f32 %v1571, %v2081
    %v2083 = vand.u32 %v2082, 4294901760
    %v2084 = vsub.f32 %v2082, %v2083
    %v2085 = vand.u32 %v2084, 4294901760
    %2086 = vmatpush.msra.mxu0 %v2085
    %v2087 = vand.u32 %v1569, 4294901760
    %v2088 = vsub.f32 %v1569, %v2087
    %v2089 = vand.u32 %v2088, 4294901760
    %v2090 = vsub.f32 %v2088, %v2089
    %v2091 = vand.u32 %v2090, 4294901760
    %2092 = vmatpush.msra.mxu0 %v2091
    %v2093 = vand.u32 %v1567, 4294901760
    %v2094 = vsub.f32 %v1567, %v2093
    %v2095 = vand.u32 %v2094, 4294901760
    %v2096 = vsub.f32 %v2094, %v2095
    %v2097 = vand.u32 %v2096, 4294901760
    %2098 = vmatpush.msra.mxu0 %v2097
    %v2099 = vand.u32 %v1565, 4294901760
    %v2100 = vsub.f32 %v1565, %v2099
    %v2101 = vand.u32 %v2100, 4294901760
    %v2102 = vsub.f32 %v2100, %v2101
    %v2103 = vand.u32 %v2102, 4294901760
    %2104 = vmatpush.msra.mxu0 %v2103
    %v2105 = vand.u32 %v1563, 4294901760
    %v2106 = vsub.f32 %v1563, %v2105
    %v2107 = vand.u32 %v2106, 4294901760
    %v2108 = vsub.f32 %v2106, %v2107
    %v2109 = vand.u32 %v2108, 4294901760
    %2110 = vmatpush.msra.mxu0 %v2109
    %v2111 = vand.u32 %v1561, 4294901760
    %v2112 = vsub.f32 %v1561, %v2111
    %v2113 = vand.u32 %v2112, 4294901760
    %v2114 = vsub.f32 %v2112, %v2113
    %v2115 = vand.u32 %v2114, 4294901760
    %2116 = vmatpush.msra.mxu0 %v2115
    %v2117 = vand.u32 %v1559, 4294901760
    %v2118 = vsub.f32 %v1559, %v2117
    %v2119 = vand.u32 %v2118, 4294901760
    %v2120 = vsub.f32 %v2118, %v2119
    %v2121 = vand.u32 %v2120, 4294901760
    %2122 = vmatpush.msra.mxu0 %v2121
    %v2123 = vand.u32 %v1557, 4294901760
    %v2124 = vsub.f32 %v1557, %v2123
    %v2125 = vand.u32 %v2124, 4294901760
    %v2126 = vsub.f32 %v2124, %v2125
    %v2127 = vand.u32 %v2126, 4294901760
    %2128 = vmatpush.msra.mxu0 %v2127
    %v2129 = vand.u32 %v1555, 4294901760
    %v2130 = vsub.f32 %v1555, %v2129
    %v2131 = vand.u32 %v2130, 4294901760
    %v2132 = vsub.f32 %v2130, %v2131
    %v2133 = vand.u32 %v2132, 4294901760
    %2134 = vmatpush.msra.mxu0 %v2133
    %v2135 = vand.u32 %v1520, 4294901760
    %2136 = vmatmul.f32.gmra.mxu0 %v2135
    %v2137 = vpop.f32.mrf.mxu0
    %v2138 = vadd.f32 %v2037, %v2137
    %2139 = vdwg.mxu0
    %v2140 = vand.u32 %v1585, 4294901760
    %v2141 = vsub.f32 %v1585, %v2140
    %2142 = vmatpush.msra.mxu0 %v2141
    %v2143 = vand.u32 %v1583, 4294901760
    %v2144 = vsub.f32 %v1583, %v2143
    %2145 = vmatpush.msra.mxu0 %v2144
    %v2146 = vand.u32 %v1581, 4294901760
    %v2147 = vsub.f32 %v1581, %v2146
    %2148 = vmatpush.msra.mxu0 %v2147
    %v2149 = vand.u32 %v1579, 4294901760
    %v2150 = vsub.f32 %v1579, %v2149
    %2151 = vmatpush.msra.mxu0 %v2150
    %v2152 = vand.u32 %v1577, 4294901760
    %v2153 = vsub.f32 %v1577, %v2152
    %2154 = vmatpush.msra.mxu0 %v2153
    %v2155 = vand.u32 %v1575, 4294901760
    %v2156 = vsub.f32 %v1575, %v2155
    %2157 = vmatpush.msra.mxu0 %v2156
    %v2158 = vand.u32 %v1573, 4294901760
    %v2159 = vsub.f32 %v1573, %v2158
    %2160 = vmatpush.msra.mxu0 %v2159
    %v2161 = vand.u32 %v1571, 4294901760
    %v2162 = vsub.f32 %v1571, %v2161
    %2163 = vmatpush.msra.mxu0 %v2162
    %v2164 = vand.u32 %v1569, 4294901760
    %v2165 = vsub.f32 %v1569, %v2164
    %2166 = vmatpush.msra.mxu0 %v2165
    %v2167 = vand.u32 %v1567, 4294901760
    %v2168 = vsub.f32 %v1567, %v2167
    %2169 = vmatpush.msra.mxu0 %v2168
    %v2170 = vand.u32 %v1565, 4294901760
    %v2171 = vsub.f32 %v1565, %v2170
    %2172 = vmatpush.msra.mxu0 %v2171
    %v2173 = vand.u32 %v1563, 4294901760
    %v2174 = vsub.f32 %v1563, %v2173
    %2175 = vmatpush.msra.mxu0 %v2174
    %v2176 = vand.u32 %v1561, 4294901760
    %v2177 = vsub.f32 %v1561, %v2176
    %2178 = vmatpush.msra.mxu0 %v2177
    %v2179 = vand.u32 %v1559, 4294901760
    %v2180 = vsub.f32 %v1559, %v2179
    %2181 = vmatpush.msra.mxu0 %v2180
    %v2182 = vand.u32 %v1557, 4294901760
    %v2183 = vsub.f32 %v1557, %v2182
    %2184 = vmatpush.msra.mxu0 %v2183
    %v2185 = vand.u32 %v1555, 4294901760
    %v2186 = vsub.f32 %v1555, %v2185
    %2187 = vmatpush.msra.mxu0 %v2186
    %v2188 = vand.u32 %v1520, 4294901760
    %v2189 = vsub.f32 %v1520, %v2188
    %2190 = vmatmul.f32.gmra.mxu0 %v2189
    %v2191 = vpop.f32.mrf.mxu0
    %v2192 = vadd.f32 %v2138, %v2191
    %2193 = vdwg.mxu0
    %v2194 = vand.u32 %v1585, 4294901760
    %2195 = vmatpush.msra.mxu0 %v2194
    %v2196 = vand.u32 %v1583, 4294901760
    %2197 = vmatpush.msra.mxu0 %v2196
    %v2198 = vand.u32 %v1581, 4294901760
    %2199 = vmatpush.msra.mxu0 %v2198
    %v2200 = vand.u32 %v1579, 4294901760
    %2201 = vmatpush.msra.mxu0 %v2200
    %v2202 = vand.u32 %v1577, 4294901760
    %2203 = vmatpush.msra.mxu0 %v2202
    %v2204 = vand.u32 %v1575, 4294901760
    %2205 = vmatpush.msra.mxu0 %v2204
    %v2206 = vand.u32 %v1573, 4294901760
    %2207 = vmatpush.msra.mxu0 %v2206
    %v2208 = vand.u32 %v1571, 4294901760
    %2209 = vmatpush.msra.mxu0 %v2208
    %v2210 = vand.u32 %v1569, 4294901760
    %2211 = vmatpush.msra.mxu0 %v2210
    %v2212 = vand.u32 %v1567, 4294901760
    %2213 = vmatpush.msra.mxu0 %v2212
    %v2214 = vand.u32 %v1565, 4294901760
    %2215 = vmatpush.msra.mxu0 %v2214
    %v2216 = vand.u32 %v1563, 4294901760
    %2217 = vmatpush.msra.mxu0 %v2216
    %v2218 = vand.u32 %v1561, 4294901760
    %2219 = vmatpush.msra.mxu0 %v2218
    %v2220 = vand.u32 %v1559, 4294901760
    %2221 = vmatpush.msra.mxu0 %v2220
    %v2222 = vand.u32 %v1557, 4294901760
    %2223 = vmatpush.msra.mxu0 %v2222
    %v2224 = vand.u32 %v1555, 4294901760
    %2225 = vmatpush.msra.mxu0 %v2224
    %v2226 = vand.u32 %v1520, 4294901760
    %v2227 = vsub.f32 %v1520, %v2226
    %v2228 = vand.u32 %v2227, 4294901760
    %2229 = vmatmul.f32.gmra.mxu0 %v2228
    %v2230 = vpop.f32.mrf.mxu0
    %v2231 = vadd.f32 %v2192, %v2230
    %2232 = vdwg.mxu0
    %v2233 = vand.u32 %v1585, 4294901760
    %v2234 = vsub.f32 %v1585, %v2233
    %v2235 = vand.u32 %v2234, 4294901760
    %2236 = vmatpush.msra.mxu0 %v2235
    %v2237 = vand.u32 %v1583, 4294901760
    %v2238 = vsub.f32 %v1583, %v2237
    %v2239 = vand.u32 %v2238, 4294901760
    %2240 = vmatpush.msra.mxu0 %v2239
    %v2241 = vand.u32 %v1581, 4294901760
    %v2242 = vsub.f32 %v1581, %v2241
    %v2243 = vand.u32 %v2242, 4294901760
    %2244 = vmatpush.msra.mxu0 %v2243
    %v2245 = vand.u32 %v1579, 4294901760
    %v2246 = vsub.f32 %v1579, %v2245
    %v2247 = vand.u32 %v2246, 4294901760
    %2248 = vmatpush.msra.mxu0 %v2247
    %v2249 = vand.u32 %v1577, 4294901760
    %v2250 = vsub.f32 %v1577, %v2249
    %v2251 = vand.u32 %v2250, 4294901760
    %2252 = vmatpush.msra.mxu0 %v2251
    %v2253 = vand.u32 %v1575, 4294901760
    %v2254 = vsub.f32 %v1575, %v2253
    %v2255 = vand.u32 %v2254, 4294901760
    %2256 = vmatpush.msra.mxu0 %v2255
    %v2257 = vand.u32 %v1573, 4294901760
    %v2258 = vsub.f32 %v1573, %v2257
    %v2259 = vand.u32 %v2258, 4294901760
    %2260 = vmatpush.msra.mxu0 %v2259
    %v2261 = vand.u32 %v1571, 4294901760
    %v2262 = vsub.f32 %v1571, %v2261
    %v2263 = vand.u32 %v2262, 4294901760
    %2264 = vmatpush.msra.mxu0 %v2263
    %v2265 = vand.u32 %v1569, 4294901760
    %v2266 = vsub.f32 %v1569, %v2265
    %v2267 = vand.u32 %v2266, 4294901760
    %2268 = vmatpush.msra.mxu0 %v2267
    %v2269 = vand.u32 %v1567, 4294901760
    %v2270 = vsub.f32 %v1567, %v2269
    %v2271 = vand.u32 %v2270, 4294901760
    %2272 = vmatpush.msra.mxu0 %v2271
    %v2273 = vand.u32 %v1565, 4294901760
    %v2274 = vsub.f32 %v1565, %v2273
    %v2275 = vand.u32 %v2274, 4294901760
    %2276 = vmatpush.msra.mxu0 %v2275
    %v2277 = vand.u32 %v1563, 4294901760
    %v2278 = vsub.f32 %v1563, %v2277
    %v2279 = vand.u32 %v2278, 4294901760
    %2280 = vmatpush.msra.mxu0 %v2279
    %v2281 = vand.u32 %v1561, 4294901760
    %v2282 = vsub.f32 %v1561, %v2281
    %v2283 = vand.u32 %v2282, 4294901760
    %2284 = vmatpush.msra.mxu0 %v2283
    %v2285 = vand.u32 %v1559, 4294901760
    %v2286 = vsub.f32 %v1559, %v2285
    %v2287 = vand.u32 %v2286, 4294901760
    %2288 = vmatpush.msra.mxu0 %v2287
    %v2289 = vand.u32 %v1557, 4294901760
    %v2290 = vsub.f32 %v1557, %v2289
    %v2291 = vand.u32 %v2290, 4294901760
    %2292 = vmatpush.msra.mxu0 %v2291
    %v2293 = vand.u32 %v1555, 4294901760
    %v2294 = vsub.f32 %v1555, %v2293
    %v2295 = vand.u32 %v2294, 4294901760
    %2296 = vmatpush.msra.mxu0 %v2295
    %v2297 = vand.u32 %v1520, 4294901760
    %2298 = vmatmul.f32.gmra.mxu0 %v2297
    %v2299 = vpop.f32.mrf.mxu0
    %v2300 = vadd.f32 %v2231, %v2299
    %2301 = vdwg.mxu0
    %v2302 = vand.u32 %v1585, 4294901760
    %2303 = vmatpush.msra.mxu0 %v2302
    %v2304 = vand.u32 %v1583, 4294901760
    %2305 = vmatpush.msra.mxu0 %v2304
    %v2306 = vand.u32 %v1581, 4294901760
    %2307 = vmatpush.msra.mxu0 %v2306
    %v2308 = vand.u32 %v1579, 4294901760
    %2309 = vmatpush.msra.mxu0 %v2308
    %v2310 = vand.u32 %v1577, 4294901760
    %2311 = vmatpush.msra.mxu0 %v2310
    %v2312 = vand.u32 %v1575, 4294901760
    %2313 = vmatpush.msra.mxu0 %v2312
    %v2314 = vand.u32 %v1573, 4294901760
    %2315 = vmatpush.msra.mxu0 %v2314
    %v2316 = vand.u32 %v1571, 4294901760
    %2317 = vmatpush.msra.mxu0 %v2316
    %v2318 = vand.u32 %v1569, 4294901760
    %2319 = vmatpush.msra.mxu0 %v2318
    %v2320 = vand.u32 %v1567, 4294901760
    %2321 = vmatpush.msra.mxu0 %v2320
    %v2322 = vand.u32 %v1565, 4294901760
    %2323 = vmatpush.msra.mxu0 %v2322
    %v2324 = vand.u32 %v1563, 4294901760
    %2325 = vmatpush.msra.mxu0 %v2324
    %v2326 = vand.u32 %v1561, 4294901760
    %2327 = vmatpush.msra.mxu0 %v2326
    %v2328 = vand.u32 %v1559, 4294901760
    %2329 = vmatpush.msra.mxu0 %v2328
    %v2330 = vand.u32 %v1557, 4294901760
    %2331 = vmatpush.msra.mxu0 %v2330
    %v2332 = vand.u32 %v1555, 4294901760
    %2333 = vmatpush.msra.mxu0 %v2332
    %v2334 = vand.u32 %v1520, 4294901760
    %2335 = vmatmul.f32.gmra.mxu0 %v2334
    %v2336 = vpop.f32.mrf.mxu0
    %v2337 = vadd.f32 %v2300, %v2336
    %2338 = vdwg.mxu0
    %v2339 = vand.u32 %v1617, 4294901760
    %2340 = vmatpush.msra.mxu0 %v2339
    %v2341 = vand.u32 %v1615, 4294901760
    %2342 = vmatpush.msra.mxu0 %v2341
    %v2343 = vand.u32 %v1613, 4294901760
    %2344 = vmatpush.msra.mxu0 %v2343
    %v2345 = vand.u32 %v1611, 4294901760
    %2346 = vmatpush.msra.mxu0 %v2345
    %v2347 = vand.u32 %v1609, 4294901760
    %2348 = vmatpush.msra.mxu0 %v2347
    %v2349 = vand.u32 %v1607, 4294901760
    %2350 = vmatpush.msra.mxu0 %v2349
    %v2351 = vand.u32 %v1605, 4294901760
    %2352 = vmatpush.msra.mxu0 %v2351
    %v2353 = vand.u32 %v1603, 4294901760
    %2354 = vmatpush.msra.mxu0 %v2353
    %v2355 = vand.u32 %v1601, 4294901760
    %2356 = vmatpush.msra.mxu0 %v2355
    %v2357 = vand.u32 %v1599, 4294901760
    %2358 = vmatpush.msra.mxu0 %v2357
    %v2359 = vand.u32 %v1597, 4294901760
    %2360 = vmatpush.msra.mxu0 %v2359
    %v2361 = vand.u32 %v1595, 4294901760
    %2362 = vmatpush.msra.mxu0 %v2361
    %v2363 = vand.u32 %v1593, 4294901760
    %2364 = vmatpush.msra.mxu0 %v2363
    %v2365 = vand.u32 %v1591, 4294901760
    %2366 = vmatpush.msra.mxu0 %v2365
    %v2367 = vand.u32 %v1589, 4294901760
    %2368 = vmatpush.msra.mxu0 %v2367
    %v2369 = vand.u32 %v1587, 4294901760
    %2370 = vmatpush.msra.mxu0 %v2369
    %v2371 = vand.u32 %v1521, 4294901760
    %v2372 = vsub.f32 %v1521, %v2371
    %v2373 = vand.u32 %v2372, 4294901760
    %v2374 = vsub.f32 %v2372, %v2373
    %v2375 = vand.u32 %v2374, 4294901760
    %2376 = vmatmul.f32.gmra.mxu0 %v2375
    %v2377 = vpop.f32.mrf.mxu0
    %v2378 = vadd.f32 %v2337, %v2377
    %2379 = vdwg.mxu0
    %v2380 = vand.u32 %v1617, 4294901760
    %v2381 = vsub.f32 %v1617, %v2380
    %v2382 = vand.u32 %v2381, 4294901760
    %v2383 = vsub.f32 %v2381, %v2382
    %v2384 = vand.u32 %v2383, 4294901760
    %2385 = vmatpush.msra.mxu0 %v2384
    %v2386 = vand.u32 %v1615, 4294901760
    %v2387 = vsub.f32 %v1615, %v2386
    %v2388 = vand.u32 %v2387, 4294901760
    %v2389 = vsub.f32 %v2387, %v2388
    %v2390 = vand.u32 %v2389, 4294901760
    %2391 = vmatpush.msra.mxu0 %v2390
    %v2392 = vand.u32 %v1613, 4294901760
    %v2393 = vsub.f32 %v1613, %v2392
    %v2394 = vand.u32 %v2393, 4294901760
    %v2395 = vsub.f32 %v2393, %v2394
    %v2396 = vand.u32 %v2395, 4294901760
    %2397 = vmatpush.msra.mxu0 %v2396
    %v2398 = vand.u32 %v1611, 4294901760
    %v2399 = vsub.f32 %v1611, %v2398
    %v2400 = vand.u32 %v2399, 4294901760
    %v2401 = vsub.f32 %v2399, %v2400
    %v2402 = vand.u32 %v2401, 4294901760
    %2403 = vmatpush.msra.mxu0 %v2402
    %v2404 = vand.u32 %v1609, 4294901760
    %v2405 = vsub.f32 %v1609, %v2404
    %v2406 = vand.u32 %v2405, 4294901760
    %v2407 = vsub.f32 %v2405, %v2406
    %v2408 = vand.u32 %v2407, 4294901760
    %2409 = vmatpush.msra.mxu0 %v2408
    %v2410 = vand.u32 %v1607, 4294901760
    %v2411 = vsub.f32 %v1607, %v2410
    %v2412 = vand.u32 %v2411, 4294901760
    %v2413 = vsub.f32 %v2411, %v2412
    %v2414 = vand.u32 %v2413, 4294901760
    %2415 = vmatpush.msra.mxu0 %v2414
    %v2416 = vand.u32 %v1605, 4294901760
    %v2417 = vsub.f32 %v1605, %v2416
    %v2418 = vand.u32 %v2417, 4294901760
    %v2419 = vsub.f32 %v2417, %v2418
    %v2420 = vand.u32 %v2419, 4294901760
    %2421 = vmatpush.msra.mxu0 %v2420
    %v2422 = vand.u32 %v1603, 4294901760
    %v2423 = vsub.f32 %v1603, %v2422
    %v2424 = vand.u32 %v2423, 4294901760
    %v2425 = vsub.f32 %v2423, %v2424
    %v2426 = vand.u32 %v2425, 4294901760
    %2427 = vmatpush.msra.mxu0 %v2426
    %v2428 = vand.u32 %v1601, 4294901760
    %v2429 = vsub.f32 %v1601, %v2428
    %v2430 = vand.u32 %v2429, 4294901760
    %v2431 = vsub.f32 %v2429, %v2430
    %v2432 = vand.u32 %v2431, 4294901760
    %2433 = vmatpush.msra.mxu0 %v2432
    %v2434 = vand.u32 %v1599, 4294901760
    %v2435 = vsub.f32 %v1599, %v2434
    %v2436 = vand.u32 %v2435, 4294901760
    %v2437 = vsub.f32 %v2435, %v2436
    %v2438 = vand.u32 %v2437, 4294901760
    %2439 = vmatpush.msra.mxu0 %v2438
    %v2440 = vand.u32 %v1597, 4294901760
    %v2441 = vsub.f32 %v1597, %v2440
    %v2442 = vand.u32 %v2441, 4294901760
    %v2443 = vsub.f32 %v2441, %v2442
    %v2444 = vand.u32 %v2443, 4294901760
    %2445 = vmatpush.msra.mxu0 %v2444
    %v2446 = vand.u32 %v1595, 4294901760
    %v2447 = vsub.f32 %v1595, %v2446
    %v2448 = vand.u32 %v2447, 4294901760
    %v2449 = vsub.f32 %v2447, %v2448
    %v2450 = vand.u32 %v2449, 4294901760
    %2451 = vmatpush.msra.mxu0 %v2450
    %v2452 = vand.u32 %v1593, 4294901760
    %v2453 = vsub.f32 %v1593, %v2452
    %v2454 = vand.u32 %v2453, 4294901760
    %v2455 = vsub.f32 %v2453, %v2454
    %v2456 = vand.u32 %v2455, 4294901760
    %2457 = vmatpush.msra.mxu0 %v2456
    %v2458 = vand.u32 %v1591, 4294901760
    %v2459 = vsub.f32 %v1591, %v2458
    %v2460 = vand.u32 %v2459, 4294901760
    %v2461 = vsub.f32 %v2459, %v2460
    %v2462 = vand.u32 %v2461, 4294901760
    %2463 = vmatpush.msra.mxu0 %v2462
    %v2464 = vand.u32 %v1589, 4294901760
    %v2465 = vsub.f32 %v1589, %v2464
    %v2466 = vand.u32 %v2465, 4294901760
    %v2467 = vsub.f32 %v2465, %v2466
    %v2468 = vand.u32 %v2467, 4294901760
    %2469 = vmatpush.msra.mxu0 %v2468
    %v2470 = vand.u32 %v1587, 4294901760
    %v2471 = vsub.f32 %v1587, %v2470
    %v2472 = vand.u32 %v2471, 4294901760
    %v2473 = vsub.f32 %v2471, %v2472
    %v2474 = vand.u32 %v2473, 4294901760
    %2475 = vmatpush.msra.mxu0 %v2474
    %v2476 = vand.u32 %v1521, 4294901760
    %2477 = vmatmul.f32.gmra.mxu0 %v2476
    %v2478 = vpop.f32.mrf.mxu0
    %v2479 = vadd.f32 %v2378, %v2478
    %2480 = vdwg.mxu0
    %v2481 = vand.u32 %v1617, 4294901760
    %v2482 = vsub.f32 %v1617, %v2481
    %2483 = vmatpush.msra.mxu0 %v2482
    %v2484 = vand.u32 %v1615, 4294901760
    %v2485 = vsub.f32 %v1615, %v2484
    %2486 = vmatpush.msra.mxu0 %v2485
    %v2487 = vand.u32 %v1613, 4294901760
    %v2488 = vsub.f32 %v1613, %v2487
    %2489 = vmatpush.msra.mxu0 %v2488
    %v2490 = vand.u32 %v1611, 4294901760
    %v2491 = vsub.f32 %v1611, %v2490
    %2492 = vmatpush.msra.mxu0 %v2491
    %v2493 = vand.u32 %v1609, 4294901760
    %v2494 = vsub.f32 %v1609, %v2493
    %2495 = vmatpush.msra.mxu0 %v2494
    %v2496 = vand.u32 %v1607, 4294901760
    %v2497 = vsub.f32 %v1607, %v2496
    %2498 = vmatpush.msra.mxu0 %v2497
    %v2499 = vand.u32 %v1605, 4294901760
    %v2500 = vsub.f32 %v1605, %v2499
    %2501 = vmatpush.msra.mxu0 %v2500
    %v2502 = vand.u32 %v1603, 4294901760
    %v2503 = vsub.f32 %v1603, %v2502
    %2504 = vmatpush.msra.mxu0 %v2503
    %v2505 = vand.u32 %v1601, 4294901760
    %v2506 = vsub.f32 %v1601, %v2505
    %2507 = vmatpush.msra.mxu0 %v2506
    %v2508 = vand.u32 %v1599, 4294901760
    %v2509 = vsub.f32 %v1599, %v2508
    %2510 = vmatpush.msra.mxu0 %v2509
    %v2511 = vand.u32 %v1597, 4294901760
    %v2512 = vsub.f32 %v1597, %v2511
    %2513 = vmatpush.msra.mxu0 %v2512
    %v2514 = vand.u32 %v1595, 4294901760
    %v2515 = vsub.f32 %v1595, %v2514
    %2516 = vmatpush.msra.mxu0 %v2515
    %v2517 = vand.u32 %v1593, 4294901760
    %v2518 = vsub.f32 %v1593, %v2517
    %2519 = vmatpush.msra.mxu0 %v2518
    %v2520 = vand.u32 %v1591, 4294901760
    %v2521 = vsub.f32 %v1591, %v2520
    %2522 = vmatpush.msra.mxu0 %v2521
    %v2523 = vand.u32 %v1589, 4294901760
    %v2524 = vsub.f32 %v1589, %v2523
    %2525 = vmatpush.msra.mxu0 %v2524
    %v2526 = vand.u32 %v1587, 4294901760
    %v2527 = vsub.f32 %v1587, %v2526
    %2528 = vmatpush.msra.mxu0 %v2527
    %v2529 = vand.u32 %v1521, 4294901760
    %v2530 = vsub.f32 %v1521, %v2529
    %2531 = vmatmul.f32.gmra.mxu0 %v2530
    %v2532 = vpop.f32.mrf.mxu0
    %v2533 = vadd.f32 %v2479, %v2532
    %2534 = vdwg.mxu0
    %v2535 = vand.u32 %v1617, 4294901760
    %2536 = vmatpush.msra.mxu0 %v2535
    %v2537 = vand.u32 %v1615, 4294901760
    %2538 = vmatpush.msra.mxu0 %v2537
    %v2539 = vand.u32 %v1613, 4294901760
    %2540 = vmatpush.msra.mxu0 %v2539
    %v2541 = vand.u32 %v1611, 4294901760
    %2542 = vmatpush.msra.mxu0 %v2541
    %v2543 = vand.u32 %v1609, 4294901760
    %2544 = vmatpush.msra.mxu0 %v2543
    %v2545 = vand.u32 %v1607, 4294901760
    %2546 = vmatpush.msra.mxu0 %v2545
    %v2547 = vand.u32 %v1605, 4294901760
    %2548 = vmatpush.msra.mxu0 %v2547
    %v2549 = vand.u32 %v1603, 4294901760
    %2550 = vmatpush.msra.mxu0 %v2549
    %v2551 = vand.u32 %v1601, 4294901760
    %2552 = vmatpush.msra.mxu0 %v2551
    %v2553 = vand.u32 %v1599, 4294901760
    %2554 = vmatpush.msra.mxu0 %v2553
    %v2555 = vand.u32 %v1597, 4294901760
    %2556 = vmatpush.msra.mxu0 %v2555
    %v2557 = vand.u32 %v1595, 4294901760
    %2558 = vmatpush.msra.mxu0 %v2557
    %v2559 = vand.u32 %v1593, 4294901760
    %2560 = vmatpush.msra.mxu0 %v2559
    %v2561 = vand.u32 %v1591, 4294901760
    %2562 = vmatpush.msra.mxu0 %v2561
    %v2563 = vand.u32 %v1589, 4294901760
    %2564 = vmatpush.msra.mxu0 %v2563
    %v2565 = vand.u32 %v1587, 4294901760
    %2566 = vmatpush.msra.mxu0 %v2565
    %v2567 = vand.u32 %v1521, 4294901760
    %v2568 = vsub.f32 %v1521, %v2567
    %v2569 = vand.u32 %v2568, 4294901760
    %2570 = vmatmul.f32.gmra.mxu0 %v2569
    %v2571 = vpop.f32.mrf.mxu0
    %v2572 = vadd.f32 %v2533, %v2571
    %2573 = vdwg.mxu0
    %v2574 = vand.u32 %v1617, 4294901760
    %v2575 = vsub.f32 %v1617, %v2574
    %v2576 = vand.u32 %v2575, 4294901760
    %2577 = vmatpush.msra.mxu0 %v2576
    %v2578 = vand.u32 %v1615, 4294901760
    %v2579 = vsub.f32 %v1615, %v2578
    %v2580 = vand.u32 %v2579, 4294901760
    %2581 = vmatpush.msra.mxu0 %v2580
    %v2582 = vand.u32 %v1613, 4294901760
    %v2583 = vsub.f32 %v1613, %v2582
    %v2584 = vand.u32 %v2583, 4294901760
    %2585 = vmatpush.msra.mxu0 %v2584
    %v2586 = vand.u32 %v1611, 4294901760
    %v2587 = vsub.f32 %v1611, %v2586
    %v2588 = vand.u32 %v2587, 4294901760
    %2589 = vmatpush.msra.mxu0 %v2588
    %v2590 = vand.u32 %v1609, 4294901760
    %v2591 = vsub.f32 %v1609, %v2590
    %v2592 = vand.u32 %v2591, 4294901760
    %2593 = vmatpush.msra.mxu0 %v2592
    %v2594 = vand.u32 %v1607, 4294901760
    %v2595 = vsub.f32 %v1607, %v2594
    %v2596 = vand.u32 %v2595, 4294901760
    %2597 = vmatpush.msra.mxu0 %v2596
    %v2598 = vand.u32 %v1605, 4294901760
    %v2599 = vsub.f32 %v1605, %v2598
    %v2600 = vand.u32 %v2599, 4294901760
    %2601 = vmatpush.msra.mxu0 %v2600
    %v2602 = vand.u32 %v1603, 4294901760
    %v2603 = vsub.f32 %v1603, %v2602
    %v2604 = vand.u32 %v2603, 4294901760
    %2605 = vmatpush.msra.mxu0 %v2604
    %v2606 = vand.u32 %v1601, 4294901760
    %v2607 = vsub.f32 %v1601, %v2606
    %v2608 = vand.u32 %v2607, 4294901760
    %2609 = vmatpush.msra.mxu0 %v2608
    %v2610 = vand.u32 %v1599, 4294901760
    %v2611 = vsub.f32 %v1599, %v2610
    %v2612 = vand.u32 %v2611, 4294901760
    %2613 = vmatpush.msra.mxu0 %v2612
    %v2614 = vand.u32 %v1597, 4294901760
    %v2615 = vsub.f32 %v1597, %v2614
    %v2616 = vand.u32 %v2615, 4294901760
    %2617 = vmatpush.msra.mxu0 %v2616
    %v2618 = vand.u32 %v1595, 4294901760
    %v2619 = vsub.f32 %v1595, %v2618
    %v2620 = vand.u32 %v2619, 4294901760
    %2621 = vmatpush.msra.mxu0 %v2620
    %v2622 = vand.u32 %v1593, 4294901760
    %v2623 = vsub.f32 %v1593, %v2622
    %v2624 = vand.u32 %v2623, 4294901760
    %2625 = vmatpush.msra.mxu0 %v2624
    %v2626 = vand.u32 %v1591, 4294901760
    %v2627 = vsub.f32 %v1591, %v2626
    %v2628 = vand.u32 %v2627, 4294901760
    %2629 = vmatpush.msra.mxu0 %v2628
    %v2630 = vand.u32 %v1589, 4294901760
    %v2631 = vsub.f32 %v1589, %v2630
    %v2632 = vand.u32 %v2631, 4294901760
    %2633 = vmatpush.msra.mxu0 %v2632
    %v2634 = vand.u32 %v1587, 4294901760
    %v2635 = vsub.f32 %v1587, %v2634
    %v2636 = vand.u32 %v2635, 4294901760
    %2637 = vmatpush.msra.mxu0 %v2636
    %v2638 = vand.u32 %v1521, 4294901760
    %2639 = vmatmul.f32.gmra.mxu0 %v2638
    %v2640 = vpop.f32.mrf.mxu0
    %v2641 = vadd.f32 %v2572, %v2640
    %2642 = vdwg.mxu0
    %v2643 = vand.u32 %v1617, 4294901760
    %2644 = vmatpush.msra.mxu0 %v2643
    %v2645 = vand.u32 %v1615, 4294901760
    %2646 = vmatpush.msra.mxu0 %v2645
    %v2647 = vand.u32 %v1613, 4294901760
    %2648 = vmatpush.msra.mxu0 %v2647
    %v2649 = vand.u32 %v1611, 4294901760
    %2650 = vmatpush.msra.mxu0 %v2649
    %v2651 = vand.u32 %v1609, 4294901760
    %2652 = vmatpush.msra.mxu0 %v2651
    %v2653 = vand.u32 %v1607, 4294901760
    %2654 = vmatpush.msra.mxu0 %v2653
    %v2655 = vand.u32 %v1605, 4294901760
    %2656 = vmatpush.msra.mxu0 %v2655
    %v2657 = vand.u32 %v1603, 4294901760
    %2658 = vmatpush.msra.mxu0 %v2657
    %v2659 = vand.u32 %v1601, 4294901760
    %2660 = vmatpush.msra.mxu0 %v2659
    %v2661 = vand.u32 %v1599, 4294901760
    %2662 = vmatpush.msra.mxu0 %v2661
    %v2663 = vand.u32 %v1597, 4294901760
    %2664 = vmatpush.msra.mxu0 %v2663
    %v2665 = vand.u32 %v1595, 4294901760
    %2666 = vmatpush.msra.mxu0 %v2665
    %v2667 = vand.u32 %v1593, 4294901760
    %2668 = vmatpush.msra.mxu0 %v2667
    %v2669 = vand.u32 %v1591, 4294901760
    %2670 = vmatpush.msra.mxu0 %v2669
    %v2671 = vand.u32 %v1589, 4294901760
    %2672 = vmatpush.msra.mxu0 %v2671
    %v2673 = vand.u32 %v1587, 4294901760
    %2674 = vmatpush.msra.mxu0 %v2673
    %v2675 = vand.u32 %v1521, 4294901760
    %2676 = vmatmul.f32.gmra.mxu0 %v2675
    %v2677 = vpop.f32.mrf.mxu0
    %v2678 = vadd.f32 %v2641, %v2677
    %2679 = vdwg.mxu0
    %v2680 = vand.u32 %v1649, 4294901760
    %2681 = vmatpush.msra.mxu0 %v2680
    %v2682 = vand.u32 %v1647, 4294901760
    %2683 = vmatpush.msra.mxu0 %v2682
    %v2684 = vand.u32 %v1645, 4294901760
    %2685 = vmatpush.msra.mxu0 %v2684
    %v2686 = vand.u32 %v1643, 4294901760
    %2687 = vmatpush.msra.mxu0 %v2686
    %v2688 = vand.u32 %v1641, 4294901760
    %2689 = vmatpush.msra.mxu0 %v2688
    %v2690 = vand.u32 %v1639, 4294901760
    %2691 = vmatpush.msra.mxu0 %v2690
    %v2692 = vand.u32 %v1637, 4294901760
    %2693 = vmatpush.msra.mxu0 %v2692
    %v2694 = vand.u32 %v1635, 4294901760
    %2695 = vmatpush.msra.mxu0 %v2694
    %v2696 = vand.u32 %v1633, 4294901760
    %2697 = vmatpush.msra.mxu0 %v2696
    %v2698 = vand.u32 %v1631, 4294901760
    %2699 = vmatpush.msra.mxu0 %v2698
    %v2700 = vand.u32 %v1629, 4294901760
    %2701 = vmatpush.msra.mxu0 %v2700
    %v2702 = vand.u32 %v1627, 4294901760
    %2703 = vmatpush.msra.mxu0 %v2702
    %v2704 = vand.u32 %v1625, 4294901760
    %2705 = vmatpush.msra.mxu0 %v2704
    %v2706 = vand.u32 %v1623, 4294901760
    %2707 = vmatpush.msra.mxu0 %v2706
    %v2708 = vand.u32 %v1621, 4294901760
    %2709 = vmatpush.msra.mxu0 %v2708
    %v2710 = vand.u32 %v1619, 4294901760
    %2711 = vmatpush.msra.mxu0 %v2710
    %v2712 = vand.u32 %v1522, 4294901760
    %v2713 = vsub.f32 %v1522, %v2712
    %v2714 = vand.u32 %v2713, 4294901760
    %v2715 = vsub.f32 %v2713, %v2714
    %v2716 = vand.u32 %v2715, 4294901760
    %2717 = vmatmul.f32.gmra.mxu0 %v2716
    %v2718 = vpop.f32.mrf.mxu0
    %v2719 = vadd.f32 %v2678, %v2718
    %2720 = vdwg.mxu0
    %v2721 = vand.u32 %v1649, 4294901760
    %v2722 = vsub.f32 %v1649, %v2721
    %v2723 = vand.u32 %v2722, 4294901760
    %v2724 = vsub.f32 %v2722, %v2723
    %v2725 = vand.u32 %v2724, 4294901760
    %2726 = vmatpush.msra.mxu0 %v2725
    %v2727 = vand.u32 %v1647, 4294901760
    %v2728 = vsub.f32 %v1647, %v2727
    %v2729 = vand.u32 %v2728, 4294901760
    %v2730 = vsub.f32 %v2728, %v2729
    %v2731 = vand.u32 %v2730, 4294901760
    %2732 = vmatpush.msra.mxu0 %v2731
    %v2733 = vand.u32 %v1645, 4294901760
    %v2734 = vsub.f32 %v1645, %v2733
    %v2735 = vand.u32 %v2734, 4294901760
    %v2736 = vsub.f32 %v2734, %v2735
    %v2737 = vand.u32 %v2736, 4294901760
    %2738 = vmatpush.msra.mxu0 %v2737
    %v2739 = vand.u32 %v1643, 4294901760
    %v2740 = vsub.f32 %v1643, %v2739
    %v2741 = vand.u32 %v2740, 4294901760
    %v2742 = vsub.f32 %v2740, %v2741
    %v2743 = vand.u32 %v2742, 4294901760
    %2744 = vmatpush.msra.mxu0 %v2743
    %v2745 = vand.u32 %v1641, 4294901760
    %v2746 = vsub.f32 %v1641, %v2745
    %v2747 = vand.u32 %v2746, 4294901760
    %v2748 = vsub.f32 %v2746, %v2747
    %v2749 = vand.u32 %v2748, 4294901760
    %2750 = vmatpush.msra.mxu0 %v2749
    %v2751 = vand.u32 %v1639, 4294901760
    %v2752 = vsub.f32 %v1639, %v2751
    %v2753 = vand.u32 %v2752, 4294901760
    %v2754 = vsub.f32 %v2752, %v2753
    %v2755 = vand.u32 %v2754, 4294901760
    %2756 = vmatpush.msra.mxu0 %v2755
    %v2757 = vand.u32 %v1637, 4294901760
    %v2758 = vsub.f32 %v1637, %v2757
    %v2759 = vand.u32 %v2758, 4294901760
    %v2760 = vsub.f32 %v2758, %v2759
    %v2761 = vand.u32 %v2760, 4294901760
    %2762 = vmatpush.msra.mxu0 %v2761
    %v2763 = vand.u32 %v1635, 4294901760
    %v2764 = vsub.f32 %v1635, %v2763
    %v2765 = vand.u32 %v2764, 4294901760
    %v2766 = vsub.f32 %v2764, %v2765
    %v2767 = vand.u32 %v2766, 4294901760
    %2768 = vmatpush.msra.mxu0 %v2767
    %v2769 = vand.u32 %v1633, 4294901760
    %v2770 = vsub.f32 %v1633, %v2769
    %v2771 = vand.u32 %v2770, 4294901760
    %v2772 = vsub.f32 %v2770, %v2771
    %v2773 = vand.u32 %v2772, 4294901760
    %2774 = vmatpush.msra.mxu0 %v2773
    %v2775 = vand.u32 %v1631, 4294901760
    %v2776 = vsub.f32 %v1631, %v2775
    %v2777 = vand.u32 %v2776, 4294901760
    %v2778 = vsub.f32 %v2776, %v2777
    %v2779 = vand.u32 %v2778, 4294901760
    %2780 = vmatpush.msra.mxu0 %v2779
    %v2781 = vand.u32 %v1629, 4294901760
    %v2782 = vsub.f32 %v1629, %v2781
    %v2783 = vand.u32 %v2782, 4294901760
    %v2784 = vsub.f32 %v2782, %v2783
    %v2785 = vand.u32 %v2784, 4294901760
    %2786 = vmatpush.msra.mxu0 %v2785
    %v2787 = vand.u32 %v1627, 4294901760
    %v2788 = vsub.f32 %v1627, %v2787
    %v2789 = vand.u32 %v2788, 4294901760
    %v2790 = vsub.f32 %v2788, %v2789
    %v2791 = vand.u32 %v2790, 4294901760
    %2792 = vmatpush.msra.mxu0 %v2791
    %v2793 = vand.u32 %v1625, 4294901760
    %v2794 = vsub.f32 %v1625, %v2793
    %v2795 = vand.u32 %v2794, 4294901760
    %v2796 = vsub.f32 %v2794, %v2795
    %v2797 = vand.u32 %v2796, 4294901760
    %2798 = vmatpush.msra.mxu0 %v2797
    %v2799 = vand.u32 %v1623, 4294901760
    %v2800 = vsub.f32 %v1623, %v2799
    %v2801 = vand.u32 %v2800, 4294901760
    %v2802 = vsub.f32 %v2800, %v2801
    %v2803 = vand.u32 %v2802, 4294901760
    %2804 = vmatpush.msra.mxu0 %v2803
    %v2805 = vand.u32 %v1621, 4294901760
    %v2806 = vsub.f32 %v1621, %v2805
    %v2807 = vand.u32 %v2806, 4294901760
    %v2808 = vsub.f32 %v2806, %v2807
    %v2809 = vand.u32 %v2808, 4294901760
    %2810 = vmatpush.msra.mxu0 %v2809
    %v2811 = vand.u32 %v1619, 4294901760
    %v2812 = vsub.f32 %v1619, %v2811
    %v2813 = vand.u32 %v2812, 4294901760
    %v2814 = vsub.f32 %v2812, %v2813
    %v2815 = vand.u32 %v2814, 4294901760
    %2816 = vmatpush.msra.mxu0 %v2815
    %v2817 = vand.u32 %v1522, 4294901760
    %2818 = vmatmul.f32.gmra.mxu0 %v2817
    %v2819 = vpop.f32.mrf.mxu0
    %v2820 = vadd.f32 %v2719, %v2819
    %2821 = vdwg.mxu0
    %v2822 = vand.u32 %v1649, 4294901760
    %v2823 = vsub.f32 %v1649, %v2822
    %2824 = vmatpush.msra.mxu0 %v2823
    %v2825 = vand.u32 %v1647, 4294901760
    %v2826 = vsub.f32 %v1647, %v2825
    %2827 = vmatpush.msra.mxu0 %v2826
    %v2828 = vand.u32 %v1645, 4294901760
    %v2829 = vsub.f32 %v1645, %v2828
    %2830 = vmatpush.msra.mxu0 %v2829
    %v2831 = vand.u32 %v1643, 4294901760
    %v2832 = vsub.f32 %v1643, %v2831
    %2833 = vmatpush.msra.mxu0 %v2832
    %v2834 = vand.u32 %v1641, 4294901760
    %v2835 = vsub.f32 %v1641, %v2834
    %2836 = vmatpush.msra.mxu0 %v2835
    %v2837 = vand.u32 %v1639, 4294901760
    %v2838 = vsub.f32 %v1639, %v2837
    %2839 = vmatpush.msra.mxu0 %v2838
    %v2840 = vand.u32 %v1637, 4294901760
    %v2841 = vsub.f32 %v1637, %v2840
    %2842 = vmatpush.msra.mxu0 %v2841
    %v2843 = vand.u32 %v1635, 4294901760
    %v2844 = vsub.f32 %v1635, %v2843
    %2845 = vmatpush.msra.mxu0 %v2844
    %v2846 = vand.u32 %v1633, 4294901760
    %v2847 = vsub.f32 %v1633, %v2846
    %2848 = vmatpush.msra.mxu0 %v2847
    %v2849 = vand.u32 %v1631, 4294901760
    %v2850 = vsub.f32 %v1631, %v2849
    %2851 = vmatpush.msra.mxu0 %v2850
    %v2852 = vand.u32 %v1629, 4294901760
    %v2853 = vsub.f32 %v1629, %v2852
    %2854 = vmatpush.msra.mxu0 %v2853
    %v2855 = vand.u32 %v1627, 4294901760
    %v2856 = vsub.f32 %v1627, %v2855
    %2857 = vmatpush.msra.mxu0 %v2856
    %v2858 = vand.u32 %v1625, 4294901760
    %v2859 = vsub.f32 %v1625, %v2858
    %2860 = vmatpush.msra.mxu0 %v2859
    %v2861 = vand.u32 %v1623, 4294901760
    %v2862 = vsub.f32 %v1623, %v2861
    %2863 = vmatpush.msra.mxu0 %v2862
    %v2864 = vand.u32 %v1621, 4294901760
    %v2865 = vsub.f32 %v1621, %v2864
    %2866 = vmatpush.msra.mxu0 %v2865
    %v2867 = vand.u32 %v1619, 4294901760
    %v2868 = vsub.f32 %v1619, %v2867
    %2869 = vmatpush.msra.mxu0 %v2868
    %v2870 = vand.u32 %v1522, 4294901760
    %v2871 = vsub.f32 %v1522, %v2870
    %2872 = vmatmul.f32.gmra.mxu0 %v2871
    %v2873 = vpop.f32.mrf.mxu0
    %v2874 = vadd.f32 %v2820, %v2873
    %2875 = vdwg.mxu0
    %v2876 = vand.u32 %v1649, 4294901760
    %2877 = vmatpush.msra.mxu0 %v2876
    %v2878 = vand.u32 %v1647, 4294901760
    %2879 = vmatpush.msra.mxu0 %v2878
    %v2880 = vand.u32 %v1645, 4294901760
    %2881 = vmatpush.msra.mxu0 %v2880
    %v2882 = vand.u32 %v1643, 4294901760
    %2883 = vmatpush.msra.mxu0 %v2882
    %v2884 = vand.u32 %v1641, 4294901760
    %2885 = vmatpush.msra.mxu0 %v2884
    %v2886 = vand.u32 %v1639, 4294901760
    %2887 = vmatpush.msra.mxu0 %v2886
    %v2888 = vand.u32 %v1637, 4294901760
    %2889 = vmatpush.msra.mxu0 %v2888
    %v2890 = vand.u32 %v1635, 4294901760
    %2891 = vmatpush.msra.mxu0 %v2890
    %v2892 = vand.u32 %v1633, 4294901760
    %2893 = vmatpush.msra.mxu0 %v2892
    %v2894 = vand.u32 %v1631, 4294901760
    %2895 = vmatpush.msra.mxu0 %v2894
    %v2896 = vand.u32 %v1629, 4294901760
    %2897 = vmatpush.msra.mxu0 %v2896
    %v2898 = vand.u32 %v1627, 4294901760
    %2899 = vmatpush.msra.mxu0 %v2898
    %v2900 = vand.u32 %v1625, 4294901760
    %2901 = vmatpush.msra.mxu0 %v2900
    %v2902 = vand.u32 %v1623, 4294901760
    %2903 = vmatpush.msra.mxu0 %v2902
    %v2904 = vand.u32 %v1621, 4294901760
    %2905 = vmatpush.msra.mxu0 %v2904
    %v2906 = vand.u32 %v1619, 4294901760
    %2907 = vmatpush.msra.mxu0 %v2906
    %v2908 = vand.u32 %v1522, 4294901760
    %v2909 = vsub.f32 %v1522, %v2908
    %v2910 = vand.u32 %v2909, 4294901760
    %2911 = vmatmul.f32.gmra.mxu0 %v2910
    %v2912 = vpop.f32.mrf.mxu0
    %v2913 = vadd.f32 %v2874, %v2912
    %2914 = vdwg.mxu0
    %v2915 = vand.u32 %v1649, 4294901760
    %v2916 = vsub.f32 %v1649, %v2915
    %v2917 = vand.u32 %v2916, 4294901760
    %2918 = vmatpush.msra.mxu0 %v2917
    %v2919 = vand.u32 %v1647, 4294901760
    %v2920 = vsub.f32 %v1647, %v2919
    %v2921 = vand.u32 %v2920, 4294901760
    %2922 = vmatpush.msra.mxu0 %v2921
    %v2923 = vand.u32 %v1645, 4294901760
    %v2924 = vsub.f32 %v1645, %v2923
    %v2925 = vand.u32 %v2924, 4294901760
    %2926 = vmatpush.msra.mxu0 %v2925
    %v2927 = vand.u32 %v1643, 4294901760
    %v2928 = vsub.f32 %v1643, %v2927
    %v2929 = vand.u32 %v2928, 4294901760
    %2930 = vmatpush.msra.mxu0 %v2929
    %v2931 = vand.u32 %v1641, 4294901760
    %v2932 = vsub.f32 %v1641, %v2931
    %v2933 = vand.u32 %v2932, 4294901760
    %2934 = vmatpush.msra.mxu0 %v2933
    %v2935 = vand.u32 %v1639, 4294901760
    %v2936 = vsub.f32 %v1639, %v2935
    %v2937 = vand.u32 %v2936, 4294901760
    %2938 = vmatpush.msra.mxu0 %v2937
    %v2939 = vand.u32 %v1637, 4294901760
    %v2940 = vsub.f32 %v1637, %v2939
    %v2941 = vand.u32 %v2940, 4294901760
    %2942 = vmatpush.msra.mxu0 %v2941
    %v2943 = vand.u32 %v1635, 4294901760
    %v2944 = vsub.f32 %v1635, %v2943
    %v2945 = vand.u32 %v2944, 4294901760
    %2946 = vmatpush.msra.mxu0 %v2945
    %v2947 = vand.u32 %v1633, 4294901760
    %v2948 = vsub.f32 %v1633, %v2947
    %v2949 = vand.u32 %v2948, 4294901760
    %2950 = vmatpush.msra.mxu0 %v2949
    %v2951 = vand.u32 %v1631, 4294901760
    %v2952 = vsub.f32 %v1631, %v2951
    %v2953 = vand.u32 %v2952, 4294901760
    %2954 = vmatpush.msra.mxu0 %v2953
    %v2955 = vand.u32 %v1629, 4294901760
    %v2956 = vsub.f32 %v1629, %v2955
    %v2957 = vand.u32 %v2956, 4294901760
    %2958 = vmatpush.msra.mxu0 %v2957
    %v2959 = vand.u32 %v1627, 4294901760
    %v2960 = vsub.f32 %v1627, %v2959
    %v2961 = vand.u32 %v2960, 4294901760
    %2962 = vmatpush.msra.mxu0 %v2961
    %v2963 = vand.u32 %v1625, 4294901760
    %v2964 = vsub.f32 %v1625, %v2963
    %v2965 = vand.u32 %v2964, 4294901760
    %2966 = vmatpush.msra.mxu0 %v2965
    %v2967 = vand.u32 %v1623, 4294901760
    %v2968 = vsub.f32 %v1623, %v2967
    %v2969 = vand.u32 %v2968, 4294901760
    %2970 = vmatpush.msra.mxu0 %v2969
    %v2971 = vand.u32 %v1621, 4294901760
    %v2972 = vsub.f32 %v1621, %v2971
    %v2973 = vand.u32 %v2972, 4294901760
    %2974 = vmatpush.msra.mxu0 %v2973
    %v2975 = vand.u32 %v1619, 4294901760
    %v2976 = vsub.f32 %v1619, %v2975
    %v2977 = vand.u32 %v2976, 4294901760
    %2978 = vmatpush.msra.mxu0 %v2977
    %v2979 = vand.u32 %v1522, 4294901760
    %2980 = vmatmul.f32.gmra.mxu0 %v2979
    %v2981 = vpop.f32.mrf.mxu0
    %v2982 = vadd.f32 %v2913, %v2981
    %2983 = vdwg.mxu0
    %v2984 = vand.u32 %v1649, 4294901760
    %2985 = vmatpush.msra.mxu0 %v2984
    %v2986 = vand.u32 %v1647, 4294901760
    %2987 = vmatpush.msra.mxu0 %v2986
    %v2988 = vand.u32 %v1645, 4294901760
    %2989 = vmatpush.msra.mxu0 %v2988
    %v2990 = vand.u32 %v1643, 4294901760
    %2991 = vmatpush.msra.mxu0 %v2990
    %v2992 = vand.u32 %v1641, 4294901760
    %2993 = vmatpush.msra.mxu0 %v2992
    %v2994 = vand.u32 %v1639, 4294901760
    %2995 = vmatpush.msra.mxu0 %v2994
    %v2996 = vand.u32 %v1637, 4294901760
    %2997 = vmatpush.msra.mxu0 %v2996
    %v2998 = vand.u32 %v1635, 4294901760
    %2999 = vmatpush.msra.mxu0 %v2998
    %v3000 = vand.u32 %v1633, 4294901760
    %3001 = vmatpush.msra.mxu0 %v3000
    %v3002 = vand.u32 %v1631, 4294901760
    %3003 = vmatpush.msra.mxu0 %v3002
    %v3004 = vand.u32 %v1629, 4294901760
    %3005 = vmatpush.msra.mxu0 %v3004
    %v3006 = vand.u32 %v1627, 4294901760
    %3007 = vmatpush.msra.mxu0 %v3006
    %v3008 = vand.u32 %v1625, 4294901760
    %3009 = vmatpush.msra.mxu0 %v3008
    %v3010 = vand.u32 %v1623, 4294901760
    %3011 = vmatpush.msra.mxu0 %v3010
    %v3012 = vand.u32 %v1621, 4294901760
    %3013 = vmatpush.msra.mxu0 %v3012
    %v3014 = vand.u32 %v1619, 4294901760
    %3015 = vmatpush.msra.mxu0 %v3014
    %v3016 = vand.u32 %v1522, 4294901760
    %3017 = vmatmul.f32.gmra.mxu0 %v3016
    %v3018 = vpop.f32.mrf.mxu0
    %v3019 = vadd.f32 %v2982, %v3018
    %3020 = vdwg.mxu0
    %v3021 = vand.u32 %v1554, 4294901760
    %3022 = vmatpush.msra.mxu0 %v3021
    %v3023 = vand.u32 %v1552, 4294901760
    %3024 = vmatpush.msra.mxu0 %v3023
    %v3025 = vand.u32 %v1550, 4294901760
    %3026 = vmatpush.msra.mxu0 %v3025
    %v3027 = vand.u32 %v1548, 4294901760
    %3028 = vmatpush.msra.mxu0 %v3027
    %v3029 = vand.u32 %v1546, 4294901760
    %3030 = vmatpush.msra.mxu0 %v3029
    %v3031 = vand.u32 %v1544, 4294901760
    %3032 = vmatpush.msra.mxu0 %v3031
    %v3033 = vand.u32 %v1542, 4294901760
    %3034 = vmatpush.msra.mxu0 %v3033
    %v3035 = vand.u32 %v1540, 4294901760
    %3036 = vmatpush.msra.mxu0 %v3035
    %v3037 = vand.u32 %v1538, 4294901760
    %3038 = vmatpush.msra.mxu0 %v3037
    %v3039 = vand.u32 %v1536, 4294901760
    %3040 = vmatpush.msra.mxu0 %v3039
    %v3041 = vand.u32 %v1534, 4294901760
    %3042 = vmatpush.msra.mxu0 %v3041
    %v3043 = vand.u32 %v1532, 4294901760
    %3044 = vmatpush.msra.mxu0 %v3043
    %v3045 = vand.u32 %v1530, 4294901760
    %3046 = vmatpush.msra.mxu0 %v3045
    %v3047 = vand.u32 %v1528, 4294901760
    %3048 = vmatpush.msra.mxu0 %v3047
    %v3049 = vand.u32 %v1526, 4294901760
    %3050 = vmatpush.msra.mxu0 %v3049
    %v3051 = vand.u32 %v1524, 4294901760
    %3052 = vmatpush.msra.mxu0 %v3051
    %v3053 = vand.u32 %v1519, 4294901760
    %v3054 = vsub.f32 %v1519, %v3053
    %v3055 = vand.u32 %v3054, 4294901760
    %v3056 = vsub.f32 %v3054, %v3055
    %v3057 = vand.u32 %v3056, 4294901760
    %3058 = vmatmul.f32.gmra.mxu0 %v3057
    %v3059 = vpop.f32.mrf.mxu0
    %v3060 = vadd.f32 %v1654, %v3059
    %3061 = vdwg.mxu0
    %v3062 = vand.u32 %v1554, 4294901760
    %v3063 = vsub.f32 %v1554, %v3062
    %v3064 = vand.u32 %v3063, 4294901760
    %v3065 = vsub.f32 %v3063, %v3064
    %v3066 = vand.u32 %v3065, 4294901760
    %3067 = vmatpush.msra.mxu0 %v3066
    %v3068 = vand.u32 %v1552, 4294901760
    %v3069 = vsub.f32 %v1552, %v3068
    %v3070 = vand.u32 %v3069, 4294901760
    %v3071 = vsub.f32 %v3069, %v3070
    %v3072 = vand.u32 %v3071, 4294901760
    %3073 = vmatpush.msra.mxu0 %v3072
    %v3074 = vand.u32 %v1550, 4294901760
    %v3075 = vsub.f32 %v1550, %v3074
    %v3076 = vand.u32 %v3075, 4294901760
    %v3077 = vsub.f32 %v3075, %v3076
    %v3078 = vand.u32 %v3077, 4294901760
    %3079 = vmatpush.msra.mxu0 %v3078
    %v3080 = vand.u32 %v1548, 4294901760
    %v3081 = vsub.f32 %v1548, %v3080
    %v3082 = vand.u32 %v3081, 4294901760
    %v3083 = vsub.f32 %v3081, %v3082
    %v3084 = vand.u32 %v3083, 4294901760
    %3085 = vmatpush.msra.mxu0 %v3084
    %v3086 = vand.u32 %v1546, 4294901760
    %v3087 = vsub.f32 %v1546, %v3086
    %v3088 = vand.u32 %v3087, 4294901760
    %v3089 = vsub.f32 %v3087, %v3088
    %v3090 = vand.u32 %v3089, 4294901760
    %3091 = vmatpush.msra.mxu0 %v3090
    %v3092 = vand.u32 %v1544, 4294901760
    %v3093 = vsub.f32 %v1544, %v3092
    %v3094 = vand.u32 %v3093, 4294901760
    %v3095 = vsub.f32 %v3093, %v3094
    %v3096 = vand.u32 %v3095, 4294901760
    %3097 = vmatpush.msra.mxu0 %v3096
    %v3098 = vand.u32 %v1542, 4294901760
    %v3099 = vsub.f32 %v1542, %v3098
    %v3100 = vand.u32 %v3099, 4294901760
    %v3101 = vsub.f32 %v3099, %v3100
    %v3102 = vand.u32 %v3101, 4294901760
    %3103 = vmatpush.msra.mxu0 %v3102
    %v3104 = vand.u32 %v1540, 4294901760
    %v3105 = vsub.f32 %v1540, %v3104
    %v3106 = vand.u32 %v3105, 4294901760
    %v3107 = vsub.f32 %v3105, %v3106
    %v3108 = vand.u32 %v3107, 4294901760
    %3109 = vmatpush.msra.mxu0 %v3108
    %v3110 = vand.u32 %v1538, 4294901760
    %v3111 = vsub.f32 %v1538, %v3110
    %v3112 = vand.u32 %v3111, 4294901760
    %v3113 = vsub.f32 %v3111, %v3112
    %v3114 = vand.u32 %v3113, 4294901760
    %3115 = vmatpush.msra.mxu0 %v3114
    %v3116 = vand.u32 %v1536, 4294901760
    %v3117 = vsub.f32 %v1536, %v3116
    %v3118 = vand.u32 %v3117, 4294901760
    %v3119 = vsub.f32 %v3117, %v3118
    %v3120 = vand.u32 %v3119, 4294901760
    %3121 = vmatpush.msra.mxu0 %v3120
    %v3122 = vand.u32 %v1534, 4294901760
    %v3123 = vsub.f32 %v1534, %v3122
    %v3124 = vand.u32 %v3123, 4294901760
    %v3125 = vsub.f32 %v3123, %v3124
    %v3126 = vand.u32 %v3125, 4294901760
    %3127 = vmatpush.msra.mxu0 %v3126
    %v3128 = vand.u32 %v1532, 4294901760
    %v3129 = vsub.f32 %v1532, %v3128
    %v3130 = vand.u32 %v3129, 4294901760
    %v3131 = vsub.f32 %v3129, %v3130
    %v3132 = vand.u32 %v3131, 4294901760
    %3133 = vmatpush.msra.mxu0 %v3132
    %v3134 = vand.u32 %v1530, 4294901760
    %v3135 = vsub.f32 %v1530, %v3134
    %v3136 = vand.u32 %v3135, 4294901760
    %v3137 = vsub.f32 %v3135, %v3136
    %v3138 = vand.u32 %v3137, 4294901760
    %3139 = vmatpush.msra.mxu0 %v3138
    %v3140 = vand.u32 %v1528, 4294901760
    %v3141 = vsub.f32 %v1528, %v3140
    %v3142 = vand.u32 %v3141, 4294901760
    %v3143 = vsub.f32 %v3141, %v3142
    %v3144 = vand.u32 %v3143, 4294901760
    %3145 = vmatpush.msra.mxu0 %v3144
    %v3146 = vand.u32 %v1526, 4294901760
    %v3147 = vsub.f32 %v1526, %v3146
    %v3148 = vand.u32 %v3147, 4294901760
    %v3149 = vsub.f32 %v3147, %v3148
    %v3150 = vand.u32 %v3149, 4294901760
    %3151 = vmatpush.msra.mxu0 %v3150
    %v3152 = vand.u32 %v1524, 4294901760
    %v3153 = vsub.f32 %v1524, %v3152
    %v3154 = vand.u32 %v3153, 4294901760
    %v3155 = vsub.f32 %v3153, %v3154
    %v3156 = vand.u32 %v3155, 4294901760
    %3157 = vmatpush.msra.mxu0 %v3156
    %v3158 = vand.u32 %v1519, 4294901760
    %3159 = vmatmul.f32.gmra.mxu0 %v3158
    %v3160 = vpop.f32.mrf.mxu0
    %v3161 = vadd.f32 %v3060, %v3160
    %3162 = vdwg.mxu0
    %v3163 = vand.u32 %v1554, 4294901760
    %v3164 = vsub.f32 %v1554, %v3163
    %3165 = vmatpush.msra.mxu0 %v3164
    %v3166 = vand.u32 %v1552, 4294901760
    %v3167 = vsub.f32 %v1552, %v3166
    %3168 = vmatpush.msra.mxu0 %v3167
    %v3169 = vand.u32 %v1550, 4294901760
    %v3170 = vsub.f32 %v1550, %v3169
    %3171 = vmatpush.msra.mxu0 %v3170
    %v3172 = vand.u32 %v1548, 4294901760
    %v3173 = vsub.f32 %v1548, %v3172
    %3174 = vmatpush.msra.mxu0 %v3173
    %v3175 = vand.u32 %v1546, 4294901760
    %v3176 = vsub.f32 %v1546, %v3175
    %3177 = vmatpush.msra.mxu0 %v3176
    %v3178 = vand.u32 %v1544, 4294901760
    %v3179 = vsub.f32 %v1544, %v3178
    %3180 = vmatpush.msra.mxu0 %v3179
    %v3181 = vand.u32 %v1542, 4294901760
    %v3182 = vsub.f32 %v1542, %v3181
    %3183 = vmatpush.msra.mxu0 %v3182
    %v3184 = vand.u32 %v1540, 4294901760
    %v3185 = vsub.f32 %v1540, %v3184
    %3186 = vmatpush.msra.mxu0 %v3185
    %v3187 = vand.u32 %v1538, 4294901760
    %v3188 = vsub.f32 %v1538, %v3187
    %3189 = vmatpush.msra.mxu0 %v3188
    %v3190 = vand.u32 %v1536, 4294901760
    %v3191 = vsub.f32 %v1536, %v3190
    %3192 = vmatpush.msra.mxu0 %v3191
    %v3193 = vand.u32 %v1534, 4294901760
    %v3194 = vsub.f32 %v1534, %v3193
    %3195 = vmatpush.msra.mxu0 %v3194
    %v3196 = vand.u32 %v1532, 4294901760
    %v3197 = vsub.f32 %v1532, %v3196
    %3198 = vmatpush.msra.mxu0 %v3197
    %v3199 = vand.u32 %v1530, 4294901760
    %v3200 = vsub.f32 %v1530, %v3199
    %3201 = vmatpush.msra.mxu0 %v3200
    %v3202 = vand.u32 %v1528, 4294901760
    %v3203 = vsub.f32 %v1528, %v3202
    %3204 = vmatpush.msra.mxu0 %v3203
    %v3205 = vand.u32 %v1526, 4294901760
    %v3206 = vsub.f32 %v1526, %v3205
    %3207 = vmatpush.msra.mxu0 %v3206
    %v3208 = vand.u32 %v1524, 4294901760
    %v3209 = vsub.f32 %v1524, %v3208
    %3210 = vmatpush.msra.mxu0 %v3209
    %v3211 = vand.u32 %v1519, 4294901760
    %v3212 = vsub.f32 %v1519, %v3211
    %3213 = vmatmul.f32.gmra.mxu0 %v3212
    %v3214 = vpop.f32.mrf.mxu0
    %v3215 = vadd.f32 %v3161, %v3214
    %3216 = vdwg.mxu0
    %v3217 = vand.u32 %v1554, 4294901760
    %3218 = vmatpush.msra.mxu0 %v3217
    %v3219 = vand.u32 %v1552, 4294901760
    %3220 = vmatpush.msra.mxu0 %v3219
    %v3221 = vand.u32 %v1550, 4294901760
    %3222 = vmatpush.msra.mxu0 %v3221
    %v3223 = vand.u32 %v1548, 4294901760
    %3224 = vmatpush.msra.mxu0 %v3223
    %v3225 = vand.u32 %v1546, 4294901760
    %3226 = vmatpush.msra.mxu0 %v3225
    %v3227 = vand.u32 %v1544, 4294901760
    %3228 = vmatpush.msra.mxu0 %v3227
    %v3229 = vand.u32 %v1542, 4294901760
    %3230 = vmatpush.msra.mxu0 %v3229
    %v3231 = vand.u32 %v1540, 4294901760
    %3232 = vmatpush.msra.mxu0 %v3231
    %v3233 = vand.u32 %v1538, 4294901760
    %3234 = vmatpush.msra.mxu0 %v3233
    %v3235 = vand.u32 %v1536, 4294901760
    %3236 = vmatpush.msra.mxu0 %v3235
    %v3237 = vand.u32 %v1534, 4294901760
    %3238 = vmatpush.msra.mxu0 %v3237
    %v3239 = vand.u32 %v1532, 4294901760
    %3240 = vmatpush.msra.mxu0 %v3239
    %v3241 = vand.u32 %v1530, 4294901760
    %3242 = vmatpush.msra.mxu0 %v3241
    %v3243 = vand.u32 %v1528, 4294901760
    %3244 = vmatpush.msra.mxu0 %v3243
    %v3245 = vand.u32 %v1526, 4294901760
    %3246 = vmatpush.msra.mxu0 %v3245
    %v3247 = vand.u32 %v1524, 4294901760
    %3248 = vmatpush.msra.mxu0 %v3247
    %v3249 = vand.u32 %v1519, 4294901760
    %v3250 = vsub.f32 %v1519, %v3249
    %v3251 = vand.u32 %v3250, 4294901760
    %3252 = vmatmul.f32.gmra.mxu0 %v3251
    %v3253 = vpop.f32.mrf.mxu0
    %v3254 = vadd.f32 %v3215, %v3253
    %3255 = vdwg.mxu0
    %v3256 = vand.u32 %v1554, 4294901760
    %v3257 = vsub.f32 %v1554, %v3256
    %v3258 = vand.u32 %v3257, 4294901760
    %3259 = vmatpush.msra.mxu0 %v3258
    %v3260 = vand.u32 %v1552, 4294901760
    %v3261 = vsub.f32 %v1552, %v3260
    %v3262 = vand.u32 %v3261, 4294901760
    %3263 = vmatpush.msra.mxu0 %v3262
    %v3264 = vand.u32 %v1550, 4294901760
    %v3265 = vsub.f32 %v1550, %v3264
    %v3266 = vand.u32 %v3265, 4294901760
    %3267 = vmatpush.msra.mxu0 %v3266
    %v3268 = vand.u32 %v1548, 4294901760
    %v3269 = vsub.f32 %v1548, %v3268
    %v3270 = vand.u32 %v3269, 4294901760
    %3271 = vmatpush.msra.mxu0 %v3270
    %v3272 = vand.u32 %v1546, 4294901760
    %v3273 = vsub.f32 %v1546, %v3272
    %v3274 = vand.u32 %v3273, 4294901760
    %3275 = vmatpush.msra.mxu0 %v3274
    %v3276 = vand.u32 %v1544, 4294901760
    %v3277 = vsub.f32 %v1544, %v3276
    %v3278 = vand.u32 %v3277, 4294901760
    %3279 = vmatpush.msra.mxu0 %v3278
    %v3280 = vand.u32 %v1542, 4294901760
    %v3281 = vsub.f32 %v1542, %v3280
    %v3282 = vand.u32 %v3281, 4294901760
    %3283 = vmatpush.msra.mxu0 %v3282
    %v3284 = vand.u32 %v1540, 4294901760
    %v3285 = vsub.f32 %v1540, %v3284
    %v3286 = vand.u32 %v3285, 4294901760
    %3287 = vmatpush.msra.mxu0 %v3286
    %v3288 = vand.u32 %v1538, 4294901760
    %v3289 = vsub.f32 %v1538, %v3288
    %v3290 = vand.u32 %v3289, 4294901760
    %3291 = vmatpush.msra.mxu0 %v3290
    %v3292 = vand.u32 %v1536, 4294901760
    %v3293 = vsub.f32 %v1536, %v3292
    %v3294 = vand.u32 %v3293, 4294901760
    %3295 = vmatpush.msra.mxu0 %v3294
    %v3296 = vand.u32 %v1534, 4294901760
    %v3297 = vsub.f32 %v1534, %v3296
    %v3298 = vand.u32 %v3297, 4294901760
    %3299 = vmatpush.msra.mxu0 %v3298
    %v3300 = vand.u32 %v1532, 4294901760
    %v3301 = vsub.f32 %v1532, %v3300
    %v3302 = vand.u32 %v3301, 4294901760
    %3303 = vmatpush.msra.mxu0 %v3302
    %v3304 = vand.u32 %v1530, 4294901760
    %v3305 = vsub.f32 %v1530, %v3304
    %v3306 = vand.u32 %v3305, 4294901760
    %3307 = vmatpush.msra.mxu0 %v3306
    %v3308 = vand.u32 %v1528, 4294901760
    %v3309 = vsub.f32 %v1528, %v3308
    %v3310 = vand.u32 %v3309, 4294901760
    %3311 = vmatpush.msra.mxu0 %v3310
    %v3312 = vand.u32 %v1526, 4294901760
    %v3313 = vsub.f32 %v1526, %v3312
    %v3314 = vand.u32 %v3313, 4294901760
    %3315 = vmatpush.msra.mxu0 %v3314
    %v3316 = vand.u32 %v1524, 4294901760
    %v3317 = vsub.f32 %v1524, %v3316
    %v3318 = vand.u32 %v3317, 4294901760
    %3319 = vmatpush.msra.mxu0 %v3318
    %v3320 = vand.u32 %v1519, 4294901760
    %3321 = vmatmul.f32.gmra.mxu0 %v3320
    %v3322 = vpop.f32.mrf.mxu0
    %v3323 = vadd.f32 %v3254, %v3322
    %3324 = vdwg.mxu0
    %v3325 = vand.u32 %v1554, 4294901760
    %3326 = vmatpush.msra.mxu0 %v3325
    %v3327 = vand.u32 %v1552, 4294901760
    %3328 = vmatpush.msra.mxu0 %v3327
    %v3329 = vand.u32 %v1550, 4294901760
    %3330 = vmatpush.msra.mxu0 %v3329
    %v3331 = vand.u32 %v1548, 4294901760
    %3332 = vmatpush.msra.mxu0 %v3331
    %v3333 = vand.u32 %v1546, 4294901760
    %3334 = vmatpush.msra.mxu0 %v3333
    %v3335 = vand.u32 %v1544, 4294901760
    %3336 = vmatpush.msra.mxu0 %v3335
    %v3337 = vand.u32 %v1542, 4294901760
    %3338 = vmatpush.msra.mxu0 %v3337
    %v3339 = vand.u32 %v1540, 4294901760
    %3340 = vmatpush.msra.mxu0 %v3339
    %v3341 = vand.u32 %v1538, 4294901760
    %3342 = vmatpush.msra.mxu0 %v3341
    %v3343 = vand.u32 %v1536, 4294901760
    %3344 = vmatpush.msra.mxu0 %v3343
    %v3345 = vand.u32 %v1534, 4294901760
    %3346 = vmatpush.msra.mxu0 %v3345
    %v3347 = vand.u32 %v1532, 4294901760
    %3348 = vmatpush.msra.mxu0 %v3347
    %v3349 = vand.u32 %v1530, 4294901760
    %3350 = vmatpush.msra.mxu0 %v3349
    %v3351 = vand.u32 %v1528, 4294901760
    %3352 = vmatpush.msra.mxu0 %v3351
    %v3353 = vand.u32 %v1526, 4294901760
    %3354 = vmatpush.msra.mxu0 %v3353
    %v3355 = vand.u32 %v1524, 4294901760
    %3356 = vmatpush.msra.mxu0 %v3355
    %v3357 = vand.u32 %v1519, 4294901760
    %3358 = vmatmul.f32.gmra.mxu0 %v3357
    %v3359 = vpop.f32.mrf.mxu0
    %v3360 = vadd.f32 %v3323, %v3359
    %3361 = vdwg.mxu0
    %v3362 = vand.u32 %v1586, 4294901760
    %3363 = vmatpush.msra.mxu0 %v3362
    %v3364 = vand.u32 %v1584, 4294901760
    %3365 = vmatpush.msra.mxu0 %v3364
    %v3366 = vand.u32 %v1582, 4294901760
    %3367 = vmatpush.msra.mxu0 %v3366
    %v3368 = vand.u32 %v1580, 4294901760
    %3369 = vmatpush.msra.mxu0 %v3368
    %v3370 = vand.u32 %v1578, 4294901760
    %3371 = vmatpush.msra.mxu0 %v3370
    %v3372 = vand.u32 %v1576, 4294901760
    %3373 = vmatpush.msra.mxu0 %v3372
    %v3374 = vand.u32 %v1574, 4294901760
    %3375 = vmatpush.msra.mxu0 %v3374
    %v3376 = vand.u32 %v1572, 4294901760
    %3377 = vmatpush.msra.mxu0 %v3376
    %v3378 = vand.u32 %v1570, 4294901760
    %3379 = vmatpush.msra.mxu0 %v3378
    %v3380 = vand.u32 %v1568, 4294901760
    %3381 = vmatpush.msra.mxu0 %v3380
    %v3382 = vand.u32 %v1566, 4294901760
    %3383 = vmatpush.msra.mxu0 %v3382
    %v3384 = vand.u32 %v1564, 4294901760
    %3385 = vmatpush.msra.mxu0 %v3384
    %v3386 = vand.u32 %v1562, 4294901760
    %3387 = vmatpush.msra.mxu0 %v3386
    %v3388 = vand.u32 %v1560, 4294901760
    %3389 = vmatpush.msra.mxu0 %v3388
    %v3390 = vand.u32 %v1558, 4294901760
    %3391 = vmatpush.msra.mxu0 %v3390
    %v3392 = vand.u32 %v1556, 4294901760
    %3393 = vmatpush.msra.mxu0 %v3392
    %v3394 = vand.u32 %v1520, 4294901760
    %v3395 = vsub.f32 %v1520, %v3394
    %v3396 = vand.u32 %v3395, 4294901760
    %v3397 = vsub.f32 %v3395, %v3396
    %v3398 = vand.u32 %v3397, 4294901760
    %3399 = vmatmul.f32.gmra.mxu0 %v3398
    %v3400 = vpop.f32.mrf.mxu0
    %v3401 = vadd.f32 %v3360, %v3400
    %3402 = vdwg.mxu0
    %v3403 = vand.u32 %v1586, 4294901760
    %v3404 = vsub.f32 %v1586, %v3403
    %v3405 = vand.u32 %v3404, 4294901760
    %v3406 = vsub.f32 %v3404, %v3405
    %v3407 = vand.u32 %v3406, 4294901760
    %3408 = vmatpush.msra.mxu0 %v3407
    %v3409 = vand.u32 %v1584, 4294901760
    %v3410 = vsub.f32 %v1584, %v3409
    %v3411 = vand.u32 %v3410, 4294901760
    %v3412 = vsub.f32 %v3410, %v3411
    %v3413 = vand.u32 %v3412, 4294901760
    %3414 = vmatpush.msra.mxu0 %v3413
    %v3415 = vand.u32 %v1582, 4294901760
    %v3416 = vsub.f32 %v1582, %v3415
    %v3417 = vand.u32 %v3416, 4294901760
    %v3418 = vsub.f32 %v3416, %v3417
    %v3419 = vand.u32 %v3418, 4294901760
    %3420 = vmatpush.msra.mxu0 %v3419
    %v3421 = vand.u32 %v1580, 4294901760
    %v3422 = vsub.f32 %v1580, %v3421
    %v3423 = vand.u32 %v3422, 4294901760
    %v3424 = vsub.f32 %v3422, %v3423
    %v3425 = vand.u32 %v3424, 4294901760
    %3426 = vmatpush.msra.mxu0 %v3425
    %v3427 = vand.u32 %v1578, 4294901760
    %v3428 = vsub.f32 %v1578, %v3427
    %v3429 = vand.u32 %v3428, 4294901760
    %v3430 = vsub.f32 %v3428, %v3429
    %v3431 = vand.u32 %v3430, 4294901760
    %3432 = vmatpush.msra.mxu0 %v3431
    %v3433 = vand.u32 %v1576, 4294901760
    %v3434 = vsub.f32 %v1576, %v3433
    %v3435 = vand.u32 %v3434, 4294901760
    %v3436 = vsub.f32 %v3434, %v3435
    %v3437 = vand.u32 %v3436, 4294901760
    %3438 = vmatpush.msra.mxu0 %v3437
    %v3439 = vand.u32 %v1574, 4294901760
    %v3440 = vsub.f32 %v1574, %v3439
    %v3441 = vand.u32 %v3440, 4294901760
    %v3442 = vsub.f32 %v3440, %v3441
    %v3443 = vand.u32 %v3442, 4294901760
    %3444 = vmatpush.msra.mxu0 %v3443
    %v3445 = vand.u32 %v1572, 4294901760
    %v3446 = vsub.f32 %v1572, %v3445
    %v3447 = vand.u32 %v3446, 4294901760
    %v3448 = vsub.f32 %v3446, %v3447
    %v3449 = vand.u32 %v3448, 4294901760
    %3450 = vmatpush.msra.mxu0 %v3449
    %v3451 = vand.u32 %v1570, 4294901760
    %v3452 = vsub.f32 %v1570, %v3451
    %v3453 = vand.u32 %v3452, 4294901760
    %v3454 = vsub.f32 %v3452, %v3453
    %v3455 = vand.u32 %v3454, 4294901760
    %3456 = vmatpush.msra.mxu0 %v3455
    %v3457 = vand.u32 %v1568, 4294901760
    %v3458 = vsub.f32 %v1568, %v3457
    %v3459 = vand.u32 %v3458, 4294901760
    %v3460 = vsub.f32 %v3458, %v3459
    %v3461 = vand.u32 %v3460, 4294901760
    %3462 = vmatpush.msra.mxu0 %v3461
    %v3463 = vand.u32 %v1566, 4294901760
    %v3464 = vsub.f32 %v1566, %v3463
    %v3465 = vand.u32 %v3464, 4294901760
    %v3466 = vsub.f32 %v3464, %v3465
    %v3467 = vand.u32 %v3466, 4294901760
    %3468 = vmatpush.msra.mxu0 %v3467
    %v3469 = vand.u32 %v1564, 4294901760
    %v3470 = vsub.f32 %v1564, %v3469
    %v3471 = vand.u32 %v3470, 4294901760
    %v3472 = vsub.f32 %v3470, %v3471
    %v3473 = vand.u32 %v3472, 4294901760
    %3474 = vmatpush.msra.mxu0 %v3473
    %v3475 = vand.u32 %v1562, 4294901760
    %v3476 = vsub.f32 %v1562, %v3475
    %v3477 = vand.u32 %v3476, 4294901760
    %v3478 = vsub.f32 %v3476, %v3477
    %v3479 = vand.u32 %v3478, 4294901760
    %3480 = vmatpush.msra.mxu0 %v3479
    %v3481 = vand.u32 %v1560, 4294901760
    %v3482 = vsub.f32 %v1560, %v3481
    %v3483 = vand.u32 %v3482, 4294901760
    %v3484 = vsub.f32 %v3482, %v3483
    %v3485 = vand.u32 %v3484, 4294901760
    %3486 = vmatpush.msra.mxu0 %v3485
    %v3487 = vand.u32 %v1558, 4294901760
    %v3488 = vsub.f32 %v1558, %v3487
    %v3489 = vand.u32 %v3488, 4294901760
    %v3490 = vsub.f32 %v3488, %v3489
    %v3491 = vand.u32 %v3490, 4294901760
    %3492 = vmatpush.msra.mxu0 %v3491
    %v3493 = vand.u32 %v1556, 4294901760
    %v3494 = vsub.f32 %v1556, %v3493
    %v3495 = vand.u32 %v3494, 4294901760
    %v3496 = vsub.f32 %v3494, %v3495
    %v3497 = vand.u32 %v3496, 4294901760
    %3498 = vmatpush.msra.mxu0 %v3497
    %v3499 = vand.u32 %v1520, 4294901760
    %3500 = vmatmul.f32.gmra.mxu0 %v3499
    %v3501 = vpop.f32.mrf.mxu0
    %v3502 = vadd.f32 %v3401, %v3501
    %3503 = vdwg.mxu0
    %v3504 = vand.u32 %v1586, 4294901760
    %v3505 = vsub.f32 %v1586, %v3504
    %3506 = vmatpush.msra.mxu0 %v3505
    %v3507 = vand.u32 %v1584, 4294901760
    %v3508 = vsub.f32 %v1584, %v3507
    %3509 = vmatpush.msra.mxu0 %v3508
    %v3510 = vand.u32 %v1582, 4294901760
    %v3511 = vsub.f32 %v1582, %v3510
    %3512 = vmatpush.msra.mxu0 %v3511
    %v3513 = vand.u32 %v1580, 4294901760
    %v3514 = vsub.f32 %v1580, %v3513
    %3515 = vmatpush.msra.mxu0 %v3514
    %v3516 = vand.u32 %v1578, 4294901760
    %v3517 = vsub.f32 %v1578, %v3516
    %3518 = vmatpush.msra.mxu0 %v3517
    %v3519 = vand.u32 %v1576, 4294901760
    %v3520 = vsub.f32 %v1576, %v3519
    %3521 = vmatpush.msra.mxu0 %v3520
    %v3522 = vand.u32 %v1574, 4294901760
    %v3523 = vsub.f32 %v1574, %v3522
    %3524 = vmatpush.msra.mxu0 %v3523
    %v3525 = vand.u32 %v1572, 4294901760
    %v3526 = vsub.f32 %v1572, %v3525
    %3527 = vmatpush.msra.mxu0 %v3526
    %v3528 = vand.u32 %v1570, 4294901760
    %v3529 = vsub.f32 %v1570, %v3528
    %3530 = vmatpush.msra.mxu0 %v3529
    %v3531 = vand.u32 %v1568, 4294901760
    %v3532 = vsub.f32 %v1568, %v3531
    %3533 = vmatpush.msra.mxu0 %v3532
    %v3534 = vand.u32 %v1566, 4294901760
    %v3535 = vsub.f32 %v1566, %v3534
    %3536 = vmatpush.msra.mxu0 %v3535
    %v3537 = vand.u32 %v1564, 4294901760
    %v3538 = vsub.f32 %v1564, %v3537
    %3539 = vmatpush.msra.mxu0 %v3538
    %v3540 = vand.u32 %v1562, 4294901760
    %v3541 = vsub.f32 %v1562, %v3540
    %3542 = vmatpush.msra.mxu0 %v3541
    %v3543 = vand.u32 %v1560, 4294901760
    %v3544 = vsub.f32 %v1560, %v3543
    %3545 = vmatpush.msra.mxu0 %v3544
    %v3546 = vand.u32 %v1558, 4294901760
    %v3547 = vsub.f32 %v1558, %v3546
    %3548 = vmatpush.msra.mxu0 %v3547
    %v3549 = vand.u32 %v1556, 4294901760
    %v3550 = vsub.f32 %v1556, %v3549
    %3551 = vmatpush.msra.mxu0 %v3550
    %v3552 = vand.u32 %v1520, 4294901760
    %v3553 = vsub.f32 %v1520, %v3552
    %3554 = vmatmul.f32.gmra.mxu0 %v3553
    %v3555 = vpop.f32.mrf.mxu0
    %v3556 = vadd.f32 %v3502, %v3555
    %3557 = vdwg.mxu0
    %v3558 = vand.u32 %v1586, 4294901760
    %3559 = vmatpush.msra.mxu0 %v3558
    %v3560 = vand.u32 %v1584, 4294901760
    %3561 = vmatpush.msra.mxu0 %v3560
    %v3562 = vand.u32 %v1582, 4294901760
    %3563 = vmatpush.msra.mxu0 %v3562
    %v3564 = vand.u32 %v1580, 4294901760
    %3565 = vmatpush.msra.mxu0 %v3564
    %v3566 = vand.u32 %v1578, 4294901760
    %3567 = vmatpush.msra.mxu0 %v3566
    %v3568 = vand.u32 %v1576, 4294901760
    %3569 = vmatpush.msra.mxu0 %v3568
    %v3570 = vand.u32 %v1574, 4294901760
    %3571 = vmatpush.msra.mxu0 %v3570
    %v3572 = vand.u32 %v1572, 4294901760
    %3573 = vmatpush.msra.mxu0 %v3572
    %v3574 = vand.u32 %v1570, 4294901760
    %3575 = vmatpush.msra.mxu0 %v3574
    %v3576 = vand.u32 %v1568, 4294901760
    %3577 = vmatpush.msra.mxu0 %v3576
    %v3578 = vand.u32 %v1566, 4294901760
    %3579 = vmatpush.msra.mxu0 %v3578
    %v3580 = vand.u32 %v1564, 4294901760
    %3581 = vmatpush.msra.mxu0 %v3580
    %v3582 = vand.u32 %v1562, 4294901760
    %3583 = vmatpush.msra.mxu0 %v3582
    %v3584 = vand.u32 %v1560, 4294901760
    %3585 = vmatpush.msra.mxu0 %v3584
    %v3586 = vand.u32 %v1558, 4294901760
    %3587 = vmatpush.msra.mxu0 %v3586
    %v3588 = vand.u32 %v1556, 4294901760
    %3589 = vmatpush.msra.mxu0 %v3588
    %v3590 = vand.u32 %v1520, 4294901760
    %v3591 = vsub.f32 %v1520, %v3590
    %v3592 = vand.u32 %v3591, 4294901760
    %3593 = vmatmul.f32.gmra.mxu0 %v3592
    %v3594 = vpop.f32.mrf.mxu0
    %v3595 = vadd.f32 %v3556, %v3594
    %3596 = vdwg.mxu0
    %v3597 = vand.u32 %v1586, 4294901760
    %v3598 = vsub.f32 %v1586, %v3597
    %v3599 = vand.u32 %v3598, 4294901760
    %3600 = vmatpush.msra.mxu0 %v3599
    %v3601 = vand.u32 %v1584, 4294901760
    %v3602 = vsub.f32 %v1584, %v3601
    %v3603 = vand.u32 %v3602, 4294901760
    %3604 = vmatpush.msra.mxu0 %v3603
    %v3605 = vand.u32 %v1582, 4294901760
    %v3606 = vsub.f32 %v1582, %v3605
    %v3607 = vand.u32 %v3606, 4294901760
    %3608 = vmatpush.msra.mxu0 %v3607
    %v3609 = vand.u32 %v1580, 4294901760
    %v3610 = vsub.f32 %v1580, %v3609
    %v3611 = vand.u32 %v3610, 4294901760
    %3612 = vmatpush.msra.mxu0 %v3611
    %v3613 = vand.u32 %v1578, 4294901760
    %v3614 = vsub.f32 %v1578, %v3613
    %v3615 = vand.u32 %v3614, 4294901760
    %3616 = vmatpush.msra.mxu0 %v3615
    %v3617 = vand.u32 %v1576, 4294901760
    %v3618 = vsub.f32 %v1576, %v3617
    %v3619 = vand.u32 %v3618, 4294901760
    %3620 = vmatpush.msra.mxu0 %v3619
    %v3621 = vand.u32 %v1574, 4294901760
    %v3622 = vsub.f32 %v1574, %v3621
    %v3623 = vand.u32 %v3622, 4294901760
    %3624 = vmatpush.msra.mxu0 %v3623
    %v3625 = vand.u32 %v1572, 4294901760
    %v3626 = vsub.f32 %v1572, %v3625
    %v3627 = vand.u32 %v3626, 4294901760
    %3628 = vmatpush.msra.mxu0 %v3627
    %v3629 = vand.u32 %v1570, 4294901760
    %v3630 = vsub.f32 %v1570, %v3629
    %v3631 = vand.u32 %v3630, 4294901760
    %3632 = vmatpush.msra.mxu0 %v3631
    %v3633 = vand.u32 %v1568, 4294901760
    %v3634 = vsub.f32 %v1568, %v3633
    %v3635 = vand.u32 %v3634, 4294901760
    %3636 = vmatpush.msra.mxu0 %v3635
    %v3637 = vand.u32 %v1566, 4294901760
    %v3638 = vsub.f32 %v1566, %v3637
    %v3639 = vand.u32 %v3638, 4294901760
    %3640 = vmatpush.msra.mxu0 %v3639
    %v3641 = vand.u32 %v1564, 4294901760
    %v3642 = vsub.f32 %v1564, %v3641
    %v3643 = vand.u32 %v3642, 4294901760
    %3644 = vmatpush.msra.mxu0 %v3643
    %v3645 = vand.u32 %v1562, 4294901760
    %v3646 = vsub.f32 %v1562, %v3645
    %v3647 = vand.u32 %v3646, 4294901760
    %3648 = vmatpush.msra.mxu0 %v3647
    %v3649 = vand.u32 %v1560, 4294901760
    %v3650 = vsub.f32 %v1560, %v3649
    %v3651 = vand.u32 %v3650, 4294901760
    %3652 = vmatpush.msra.mxu0 %v3651
    %v3653 = vand.u32 %v1558, 4294901760
    %v3654 = vsub.f32 %v1558, %v3653
    %v3655 = vand.u32 %v3654, 4294901760
    %3656 = vmatpush.msra.mxu0 %v3655
    %v3657 = vand.u32 %v1556, 4294901760
    %v3658 = vsub.f32 %v1556, %v3657
    %v3659 = vand.u32 %v3658, 4294901760
    %3660 = vmatpush.msra.mxu0 %v3659
    %v3661 = vand.u32 %v1520, 4294901760
    %3662 = vmatmul.f32.gmra.mxu0 %v3661
    %v3663 = vpop.f32.mrf.mxu0
    %v3664 = vadd.f32 %v3595, %v3663
    %3665 = vdwg.mxu0
    %v3666 = vand.u32 %v1586, 4294901760
    %3667 = vmatpush.msra.mxu0 %v3666
    %v3668 = vand.u32 %v1584, 4294901760
    %3669 = vmatpush.msra.mxu0 %v3668
    %v3670 = vand.u32 %v1582, 4294901760
    %3671 = vmatpush.msra.mxu0 %v3670
    %v3672 = vand.u32 %v1580, 4294901760
    %3673 = vmatpush.msra.mxu0 %v3672
    %v3674 = vand.u32 %v1578, 4294901760
    %3675 = vmatpush.msra.mxu0 %v3674
    %v3676 = vand.u32 %v1576, 4294901760
    %3677 = vmatpush.msra.mxu0 %v3676
    %v3678 = vand.u32 %v1574, 4294901760
    %3679 = vmatpush.msra.mxu0 %v3678
    %v3680 = vand.u32 %v1572, 4294901760
    %3681 = vmatpush.msra.mxu0 %v3680
    %v3682 = vand.u32 %v1570, 4294901760
    %3683 = vmatpush.msra.mxu0 %v3682
    %v3684 = vand.u32 %v1568, 4294901760
    %3685 = vmatpush.msra.mxu0 %v3684
    %v3686 = vand.u32 %v1566, 4294901760
    %3687 = vmatpush.msra.mxu0 %v3686
    %v3688 = vand.u32 %v1564, 4294901760
    %3689 = vmatpush.msra.mxu0 %v3688
    %v3690 = vand.u32 %v1562, 4294901760
    %3691 = vmatpush.msra.mxu0 %v3690
    %v3692 = vand.u32 %v1560, 4294901760
    %3693 = vmatpush.msra.mxu0 %v3692
    %v3694 = vand.u32 %v1558, 4294901760
    %3695 = vmatpush.msra.mxu0 %v3694
    %v3696 = vand.u32 %v1556, 4294901760
    %3697 = vmatpush.msra.mxu0 %v3696
    %v3698 = vand.u32 %v1520, 4294901760
    %3699 = vmatmul.f32.gmra.mxu0 %v3698
    %v3700 = vpop.f32.mrf.mxu0
    %v3701 = vadd.f32 %v3664, %v3700
    %3702 = vdwg.mxu0
    %v3703 = vand.u32 %v1618, 4294901760
    %3704 = vmatpush.msra.mxu0 %v3703
    %v3705 = vand.u32 %v1616, 4294901760
    %3706 = vmatpush.msra.mxu0 %v3705
    %v3707 = vand.u32 %v1614, 4294901760
    %3708 = vmatpush.msra.mxu0 %v3707
    %v3709 = vand.u32 %v1612, 4294901760
    %3710 = vmatpush.msra.mxu0 %v3709
    %v3711 = vand.u32 %v1610, 4294901760
    %3712 = vmatpush.msra.mxu0 %v3711
    %v3713 = vand.u32 %v1608, 4294901760
    %3714 = vmatpush.msra.mxu0 %v3713
    %v3715 = vand.u32 %v1606, 4294901760
    %3716 = vmatpush.msra.mxu0 %v3715
    %v3717 = vand.u32 %v1604, 4294901760
    %3718 = vmatpush.msra.mxu0 %v3717
    %v3719 = vand.u32 %v1602, 4294901760
    %3720 = vmatpush.msra.mxu0 %v3719
    %v3721 = vand.u32 %v1600, 4294901760
    %3722 = vmatpush.msra.mxu0 %v3721
    %v3723 = vand.u32 %v1598, 4294901760
    %3724 = vmatpush.msra.mxu0 %v3723
    %v3725 = vand.u32 %v1596, 4294901760
    %3726 = vmatpush.msra.mxu0 %v3725
    %v3727 = vand.u32 %v1594, 4294901760
    %3728 = vmatpush.msra.mxu0 %v3727
    %v3729 = vand.u32 %v1592, 4294901760
    %3730 = vmatpush.msra.mxu0 %v3729
    %v3731 = vand.u32 %v1590, 4294901760
    %3732 = vmatpush.msra.mxu0 %v3731
    %v3733 = vand.u32 %v1588, 4294901760
    %3734 = vmatpush.msra.mxu0 %v3733
    %v3735 = vand.u32 %v1521, 4294901760
    %v3736 = vsub.f32 %v1521, %v3735
    %v3737 = vand.u32 %v3736, 4294901760
    %v3738 = vsub.f32 %v3736, %v3737
    %v3739 = vand.u32 %v3738, 4294901760
    %3740 = vmatmul.f32.gmra.mxu0 %v3739
    %v3741 = vpop.f32.mrf.mxu0
    %v3742 = vadd.f32 %v3701, %v3741
    %3743 = vdwg.mxu0
    %v3744 = vand.u32 %v1618, 4294901760
    %v3745 = vsub.f32 %v1618, %v3744
    %v3746 = vand.u32 %v3745, 4294901760
    %v3747 = vsub.f32 %v3745, %v3746
    %v3748 = vand.u32 %v3747, 4294901760
    %3749 = vmatpush.msra.mxu0 %v3748
    %v3750 = vand.u32 %v1616, 4294901760
    %v3751 = vsub.f32 %v1616, %v3750
    %v3752 = vand.u32 %v3751, 4294901760
    %v3753 = vsub.f32 %v3751, %v3752
    %v3754 = vand.u32 %v3753, 4294901760
    %3755 = vmatpush.msra.mxu0 %v3754
    %v3756 = vand.u32 %v1614, 4294901760
    %v3757 = vsub.f32 %v1614, %v3756
    %v3758 = vand.u32 %v3757, 4294901760
    %v3759 = vsub.f32 %v3757, %v3758
    %v3760 = vand.u32 %v3759, 4294901760
    %3761 = vmatpush.msra.mxu0 %v3760
    %v3762 = vand.u32 %v1612, 4294901760
    %v3763 = vsub.f32 %v1612, %v3762
    %v3764 = vand.u32 %v3763, 4294901760
    %v3765 = vsub.f32 %v3763, %v3764
    %v3766 = vand.u32 %v3765, 4294901760
    %3767 = vmatpush.msra.mxu0 %v3766
    %v3768 = vand.u32 %v1610, 4294901760
    %v3769 = vsub.f32 %v1610, %v3768
    %v3770 = vand.u32 %v3769, 4294901760
    %v3771 = vsub.f32 %v3769, %v3770
    %v3772 = vand.u32 %v3771, 4294901760
    %3773 = vmatpush.msra.mxu0 %v3772
    %v3774 = vand.u32 %v1608, 4294901760
    %v3775 = vsub.f32 %v1608, %v3774
    %v3776 = vand.u32 %v3775, 4294901760
    %v3777 = vsub.f32 %v3775, %v3776
    %v3778 = vand.u32 %v3777, 4294901760
    %3779 = vmatpush.msra.mxu0 %v3778
    %v3780 = vand.u32 %v1606, 4294901760
    %v3781 = vsub.f32 %v1606, %v3780
    %v3782 = vand.u32 %v3781, 4294901760
    %v3783 = vsub.f32 %v3781, %v3782
    %v3784 = vand.u32 %v3783, 4294901760
    %3785 = vmatpush.msra.mxu0 %v3784
    %v3786 = vand.u32 %v1604, 4294901760
    %v3787 = vsub.f32 %v1604, %v3786
    %v3788 = vand.u32 %v3787, 4294901760
    %v3789 = vsub.f32 %v3787, %v3788
    %v3790 = vand.u32 %v3789, 4294901760
    %3791 = vmatpush.msra.mxu0 %v3790
    %v3792 = vand.u32 %v1602, 4294901760
    %v3793 = vsub.f32 %v1602, %v3792
    %v3794 = vand.u32 %v3793, 4294901760
    %v3795 = vsub.f32 %v3793, %v3794
    %v3796 = vand.u32 %v3795, 4294901760
    %3797 = vmatpush.msra.mxu0 %v3796
    %v3798 = vand.u32 %v1600, 4294901760
    %v3799 = vsub.f32 %v1600, %v3798
    %v3800 = vand.u32 %v3799, 4294901760
    %v3801 = vsub.f32 %v3799, %v3800
    %v3802 = vand.u32 %v3801, 4294901760
    %3803 = vmatpush.msra.mxu0 %v3802
    %v3804 = vand.u32 %v1598, 4294901760
    %v3805 = vsub.f32 %v1598, %v3804
    %v3806 = vand.u32 %v3805, 4294901760
    %v3807 = vsub.f32 %v3805, %v3806
    %v3808 = vand.u32 %v3807, 4294901760
    %3809 = vmatpush.msra.mxu0 %v3808
    %v3810 = vand.u32 %v1596, 4294901760
    %v3811 = vsub.f32 %v1596, %v3810
    %v3812 = vand.u32 %v3811, 4294901760
    %v3813 = vsub.f32 %v3811, %v3812
    %v3814 = vand.u32 %v3813, 4294901760
    %3815 = vmatpush.msra.mxu0 %v3814
    %v3816 = vand.u32 %v1594, 4294901760
    %v3817 = vsub.f32 %v1594, %v3816
    %v3818 = vand.u32 %v3817, 4294901760
    %v3819 = vsub.f32 %v3817, %v3818
    %v3820 = vand.u32 %v3819, 4294901760
    %3821 = vmatpush.msra.mxu0 %v3820
    %v3822 = vand.u32 %v1592, 4294901760
    %v3823 = vsub.f32 %v1592, %v3822
    %v3824 = vand.u32 %v3823, 4294901760
    %v3825 = vsub.f32 %v3823, %v3824
    %v3826 = vand.u32 %v3825, 4294901760
    %3827 = vmatpush.msra.mxu0 %v3826
    %v3828 = vand.u32 %v1590, 4294901760
    %v3829 = vsub.f32 %v1590, %v3828
    %v3830 = vand.u32 %v3829, 4294901760
    %v3831 = vsub.f32 %v3829, %v3830
    %v3832 = vand.u32 %v3831, 4294901760
    %3833 = vmatpush.msra.mxu0 %v3832
    %v3834 = vand.u32 %v1588, 4294901760
    %v3835 = vsub.f32 %v1588, %v3834
    %v3836 = vand.u32 %v3835, 4294901760
    %v3837 = vsub.f32 %v3835, %v3836
    %v3838 = vand.u32 %v3837, 4294901760
    %3839 = vmatpush.msra.mxu0 %v3838
    %v3840 = vand.u32 %v1521, 4294901760
    %3841 = vmatmul.f32.gmra.mxu0 %v3840
    %v3842 = vpop.f32.mrf.mxu0
    %v3843 = vadd.f32 %v3742, %v3842
    %3844 = vdwg.mxu0
    %v3845 = vand.u32 %v1618, 4294901760
    %v3846 = vsub.f32 %v1618, %v3845
    %3847 = vmatpush.msra.mxu0 %v3846
    %v3848 = vand.u32 %v1616, 4294901760
    %v3849 = vsub.f32 %v1616, %v3848
    %3850 = vmatpush.msra.mxu0 %v3849
    %v3851 = vand.u32 %v1614, 4294901760
    %v3852 = vsub.f32 %v1614, %v3851
    %3853 = vmatpush.msra.mxu0 %v3852
    %v3854 = vand.u32 %v1612, 4294901760
    %v3855 = vsub.f32 %v1612, %v3854
    %3856 = vmatpush.msra.mxu0 %v3855
    %v3857 = vand.u32 %v1610, 4294901760
    %v3858 = vsub.f32 %v1610, %v3857
    %3859 = vmatpush.msra.mxu0 %v3858
    %v3860 = vand.u32 %v1608, 4294901760
    %v3861 = vsub.f32 %v1608, %v3860
    %3862 = vmatpush.msra.mxu0 %v3861
    %v3863 = vand.u32 %v1606, 4294901760
    %v3864 = vsub.f32 %v1606, %v3863
    %3865 = vmatpush.msra.mxu0 %v3864
    %v3866 = vand.u32 %v1604, 4294901760
    %v3867 = vsub.f32 %v1604, %v3866
    %3868 = vmatpush.msra.mxu0 %v3867
    %v3869 = vand.u32 %v1602, 4294901760
    %v3870 = vsub.f32 %v1602, %v3869
    %3871 = vmatpush.msra.mxu0 %v3870
    %v3872 = vand.u32 %v1600, 4294901760
    %v3873 = vsub.f32 %v1600, %v3872
    %3874 = vmatpush.msra.mxu0 %v3873
    %v3875 = vand.u32 %v1598, 4294901760
    %v3876 = vsub.f32 %v1598, %v3875
    %3877 = vmatpush.msra.mxu0 %v3876
    %v3878 = vand.u32 %v1596, 4294901760
    %v3879 = vsub.f32 %v1596, %v3878
    %3880 = vmatpush.msra.mxu0 %v3879
    %v3881 = vand.u32 %v1594, 4294901760
    %v3882 = vsub.f32 %v1594, %v3881
    %3883 = vmatpush.msra.mxu0 %v3882
    %v3884 = vand.u32 %v1592, 4294901760
    %v3885 = vsub.f32 %v1592, %v3884
    %3886 = vmatpush.msra.mxu0 %v3885
    %v3887 = vand.u32 %v1590, 4294901760
    %v3888 = vsub.f32 %v1590, %v3887
    %3889 = vmatpush.msra.mxu0 %v3888
    %v3890 = vand.u32 %v1588, 4294901760
    %v3891 = vsub.f32 %v1588, %v3890
    %3892 = vmatpush.msra.mxu0 %v3891
    %v3893 = vand.u32 %v1521, 4294901760
    %v3894 = vsub.f32 %v1521, %v3893
    %3895 = vmatmul.f32.gmra.mxu0 %v3894
    %v3896 = vpop.f32.mrf.mxu0
    %v3897 = vadd.f32 %v3843, %v3896
    %3898 = vdwg.mxu0
    %v3899 = vand.u32 %v1618, 4294901760
    %3900 = vmatpush.msra.mxu0 %v3899
    %v3901 = vand.u32 %v1616, 4294901760
    %3902 = vmatpush.msra.mxu0 %v3901
    %v3903 = vand.u32 %v1614, 4294901760
    %3904 = vmatpush.msra.mxu0 %v3903
    %v3905 = vand.u32 %v1612, 4294901760
    %3906 = vmatpush.msra.mxu0 %v3905
    %v3907 = vand.u32 %v1610, 4294901760
    %3908 = vmatpush.msra.mxu0 %v3907
    %v3909 = vand.u32 %v1608, 4294901760
    %3910 = vmatpush.msra.mxu0 %v3909
    %v3911 = vand.u32 %v1606, 4294901760
    %3912 = vmatpush.msra.mxu0 %v3911
    %v3913 = vand.u32 %v1604, 4294901760
    %3914 = vmatpush.msra.mxu0 %v3913
    %v3915 = vand.u32 %v1602, 4294901760
    %3916 = vmatpush.msra.mxu0 %v3915
    %v3917 = vand.u32 %v1600, 4294901760
    %3918 = vmatpush.msra.mxu0 %v3917
    %v3919 = vand.u32 %v1598, 4294901760
    %3920 = vmatpush.msra.mxu0 %v3919
    %v3921 = vand.u32 %v1596, 4294901760
    %3922 = vmatpush.msra.mxu0 %v3921
    %v3923 = vand.u32 %v1594, 4294901760
    %3924 = vmatpush.msra.mxu0 %v3923
    %v3925 = vand.u32 %v1592, 4294901760
    %3926 = vmatpush.msra.mxu0 %v3925
    %v3927 = vand.u32 %v1590, 4294901760
    %3928 = vmatpush.msra.mxu0 %v3927
    %v3929 = vand.u32 %v1588, 4294901760
    %3930 = vmatpush.msra.mxu0 %v3929
    %v3931 = vand.u32 %v1521, 4294901760
    %v3932 = vsub.f32 %v1521, %v3931
    %v3933 = vand.u32 %v3932, 4294901760
    %3934 = vmatmul.f32.gmra.mxu0 %v3933
    %v3935 = vpop.f32.mrf.mxu0
    %v3936 = vadd.f32 %v3897, %v3935
    %3937 = vdwg.mxu0
    %v3938 = vand.u32 %v1618, 4294901760
    %v3939 = vsub.f32 %v1618, %v3938
    %v3940 = vand.u32 %v3939, 4294901760
    %3941 = vmatpush.msra.mxu0 %v3940
    %v3942 = vand.u32 %v1616, 4294901760
    %v3943 = vsub.f32 %v1616, %v3942
    %v3944 = vand.u32 %v3943, 4294901760
    %3945 = vmatpush.msra.mxu0 %v3944
    %v3946 = vand.u32 %v1614, 4294901760
    %v3947 = vsub.f32 %v1614, %v3946
    %v3948 = vand.u32 %v3947, 4294901760
    %3949 = vmatpush.msra.mxu0 %v3948
    %v3950 = vand.u32 %v1612, 4294901760
    %v3951 = vsub.f32 %v1612, %v3950
    %v3952 = vand.u32 %v3951, 4294901760
    %3953 = vmatpush.msra.mxu0 %v3952
    %v3954 = vand.u32 %v1610, 4294901760
    %v3955 = vsub.f32 %v1610, %v3954
    %v3956 = vand.u32 %v3955, 4294901760
    %3957 = vmatpush.msra.mxu0 %v3956
    %v3958 = vand.u32 %v1608, 4294901760
    %v3959 = vsub.f32 %v1608, %v3958
    %v3960 = vand.u32 %v3959, 4294901760
    %3961 = vmatpush.msra.mxu0 %v3960
    %v3962 = vand.u32 %v1606, 4294901760
    %v3963 = vsub.f32 %v1606, %v3962
    %v3964 = vand.u32 %v3963, 4294901760
    %3965 = vmatpush.msra.mxu0 %v3964
    %v3966 = vand.u32 %v1604, 4294901760
    %v3967 = vsub.f32 %v1604, %v3966
    %v3968 = vand.u32 %v3967, 4294901760
    %3969 = vmatpush.msra.mxu0 %v3968
    %v3970 = vand.u32 %v1602, 4294901760
    %v3971 = vsub.f32 %v1602, %v3970
    %v3972 = vand.u32 %v3971, 4294901760
    %3973 = vmatpush.msra.mxu0 %v3972
    %v3974 = vand.u32 %v1600, 4294901760
    %v3975 = vsub.f32 %v1600, %v3974
    %v3976 = vand.u32 %v3975, 4294901760
    %3977 = vmatpush.msra.mxu0 %v3976
    %v3978 = vand.u32 %v1598, 4294901760
    %v3979 = vsub.f32 %v1598, %v3978
    %v3980 = vand.u32 %v3979, 4294901760
    %3981 = vmatpush.msra.mxu0 %v3980
    %v3982 = vand.u32 %v1596, 4294901760
    %v3983 = vsub.f32 %v1596, %v3982
    %v3984 = vand.u32 %v3983, 4294901760
    %3985 = vmatpush.msra.mxu0 %v3984
    %v3986 = vand.u32 %v1594, 4294901760
    %v3987 = vsub.f32 %v1594, %v3986
    %v3988 = vand.u32 %v3987, 4294901760
    %3989 = vmatpush.msra.mxu0 %v3988
    %v3990 = vand.u32 %v1592, 4294901760
    %v3991 = vsub.f32 %v1592, %v3990
    %v3992 = vand.u32 %v3991, 4294901760
    %3993 = vmatpush.msra.mxu0 %v3992
    %v3994 = vand.u32 %v1590, 4294901760
    %v3995 = vsub.f32 %v1590, %v3994
    %v3996 = vand.u32 %v3995, 4294901760
    %3997 = vmatpush.msra.mxu0 %v3996
    %v3998 = vand.u32 %v1588, 4294901760
    %v3999 = vsub.f32 %v1588, %v3998
    %v4000 = vand.u32 %v3999, 4294901760
    %4001 = vmatpush.msra.mxu0 %v4000
    %v4002 = vand.u32 %v1521, 4294901760
    %4003 = vmatmul.f32.gmra.mxu0 %v4002
    %v4004 = vpop.f32.mrf.mxu0
    %v4005 = vadd.f32 %v3936, %v4004
    %4006 = vdwg.mxu0
    %v4007 = vand.u32 %v1618, 4294901760
    %4008 = vmatpush.msra.mxu0 %v4007
    %v4009 = vand.u32 %v1616, 4294901760
    %4010 = vmatpush.msra.mxu0 %v4009
    %v4011 = vand.u32 %v1614, 4294901760
    %4012 = vmatpush.msra.mxu0 %v4011
    %v4013 = vand.u32 %v1612, 4294901760
    %4014 = vmatpush.msra.mxu0 %v4013
    %v4015 = vand.u32 %v1610, 4294901760
    %4016 = vmatpush.msra.mxu0 %v4015
    %v4017 = vand.u32 %v1608, 4294901760
    %4018 = vmatpush.msra.mxu0 %v4017
    %v4019 = vand.u32 %v1606, 4294901760
    %4020 = vmatpush.msra.mxu0 %v4019
    %v4021 = vand.u32 %v1604, 4294901760
    %4022 = vmatpush.msra.mxu0 %v4021
    %v4023 = vand.u32 %v1602, 4294901760
    %4024 = vmatpush.msra.mxu0 %v4023
    %v4025 = vand.u32 %v1600, 4294901760
    %4026 = vmatpush.msra.mxu0 %v4025
    %v4027 = vand.u32 %v1598, 4294901760
    %4028 = vmatpush.msra.mxu0 %v4027
    %v4029 = vand.u32 %v1596, 4294901760
    %4030 = vmatpush.msra.mxu0 %v4029
    %v4031 = vand.u32 %v1594, 4294901760
    %4032 = vmatpush.msra.mxu0 %v4031
    %v4033 = vand.u32 %v1592, 4294901760
    %4034 = vmatpush.msra.mxu0 %v4033
    %v4035 = vand.u32 %v1590, 4294901760
    %4036 = vmatpush.msra.mxu0 %v4035
    %v4037 = vand.u32 %v1588, 4294901760
    %4038 = vmatpush.msra.mxu0 %v4037
    %v4039 = vand.u32 %v1521, 4294901760
    %4040 = vmatmul.f32.gmra.mxu0 %v4039
    %v4041 = vpop.f32.mrf.mxu0
    %v4042 = vadd.f32 %v4005, %v4041
    %4043 = vdwg.mxu0
    %v4044 = vand.u32 %v1650, 4294901760
    %4045 = vmatpush.msra.mxu0 %v4044
    %v4046 = vand.u32 %v1648, 4294901760
    %4047 = vmatpush.msra.mxu0 %v4046
    %v4048 = vand.u32 %v1646, 4294901760
    %4049 = vmatpush.msra.mxu0 %v4048
    %v4050 = vand.u32 %v1644, 4294901760
    %4051 = vmatpush.msra.mxu0 %v4050
    %v4052 = vand.u32 %v1642, 4294901760
    %4053 = vmatpush.msra.mxu0 %v4052
    %v4054 = vand.u32 %v1640, 4294901760
    %4055 = vmatpush.msra.mxu0 %v4054
    %v4056 = vand.u32 %v1638, 4294901760
    %4057 = vmatpush.msra.mxu0 %v4056
    %v4058 = vand.u32 %v1636, 4294901760
    %4059 = vmatpush.msra.mxu0 %v4058
    %v4060 = vand.u32 %v1634, 4294901760
    %4061 = vmatpush.msra.mxu0 %v4060
    %v4062 = vand.u32 %v1632, 4294901760
    %4063 = vmatpush.msra.mxu0 %v4062
    %v4064 = vand.u32 %v1630, 4294901760
    %4065 = vmatpush.msra.mxu0 %v4064
    %v4066 = vand.u32 %v1628, 4294901760
    %4067 = vmatpush.msra.mxu0 %v4066
    %v4068 = vand.u32 %v1626, 4294901760
    %4069 = vmatpush.msra.mxu0 %v4068
    %v4070 = vand.u32 %v1624, 4294901760
    %4071 = vmatpush.msra.mxu0 %v4070
    %v4072 = vand.u32 %v1622, 4294901760
    %4073 = vmatpush.msra.mxu0 %v4072
    %v4074 = vand.u32 %v1620, 4294901760
    %4075 = vmatpush.msra.mxu0 %v4074
    %v4076 = vand.u32 %v1522, 4294901760
    %v4077 = vsub.f32 %v1522, %v4076
    %v4078 = vand.u32 %v4077, 4294901760
    %v4079 = vsub.f32 %v4077, %v4078
    %v4080 = vand.u32 %v4079, 4294901760
    %4081 = vmatmul.f32.gmra.mxu0 %v4080
    %v4082 = vpop.f32.mrf.mxu0
    %v4083 = vadd.f32 %v4042, %v4082
    %4084 = vdwg.mxu0
    %v4085 = vand.u32 %v1650, 4294901760
    %v4086 = vsub.f32 %v1650, %v4085
    %v4087 = vand.u32 %v4086, 4294901760
    %v4088 = vsub.f32 %v4086, %v4087
    %v4089 = vand.u32 %v4088, 4294901760
    %4090 = vmatpush.msra.mxu0 %v4089
    %v4091 = vand.u32 %v1648, 4294901760
    %v4092 = vsub.f32 %v1648, %v4091
    %v4093 = vand.u32 %v4092, 4294901760
    %v4094 = vsub.f32 %v4092, %v4093
    %v4095 = vand.u32 %v4094, 4294901760
    %4096 = vmatpush.msra.mxu0 %v4095
    %v4097 = vand.u32 %v1646, 4294901760
    %v4098 = vsub.f32 %v1646, %v4097
    %v4099 = vand.u32 %v4098, 4294901760
    %v4100 = vsub.f32 %v4098, %v4099
    %v4101 = vand.u32 %v4100, 4294901760
    %4102 = vmatpush.msra.mxu0 %v4101
    %v4103 = vand.u32 %v1644, 4294901760
    %v4104 = vsub.f32 %v1644, %v4103
    %v4105 = vand.u32 %v4104, 4294901760
    %v4106 = vsub.f32 %v4104, %v4105
    %v4107 = vand.u32 %v4106, 4294901760
    %4108 = vmatpush.msra.mxu0 %v4107
    %v4109 = vand.u32 %v1642, 4294901760
    %v4110 = vsub.f32 %v1642, %v4109
    %v4111 = vand.u32 %v4110, 4294901760
    %v4112 = vsub.f32 %v4110, %v4111
    %v4113 = vand.u32 %v4112, 4294901760
    %4114 = vmatpush.msra.mxu0 %v4113
    %v4115 = vand.u32 %v1640, 4294901760
    %v4116 = vsub.f32 %v1640, %v4115
    %v4117 = vand.u32 %v4116, 4294901760
    %v4118 = vsub.f32 %v4116, %v4117
    %v4119 = vand.u32 %v4118, 4294901760
    %4120 = vmatpush.msra.mxu0 %v4119
    %v4121 = vand.u32 %v1638, 4294901760
    %v4122 = vsub.f32 %v1638, %v4121
    %v4123 = vand.u32 %v4122, 4294901760
    %v4124 = vsub.f32 %v4122, %v4123
    %v4125 = vand.u32 %v4124, 4294901760
    %4126 = vmatpush.msra.mxu0 %v4125
    %v4127 = vand.u32 %v1636, 4294901760
    %v4128 = vsub.f32 %v1636, %v4127
    %v4129 = vand.u32 %v4128, 4294901760
    %v4130 = vsub.f32 %v4128, %v4129
    %v4131 = vand.u32 %v4130, 4294901760
    %4132 = vmatpush.msra.mxu0 %v4131
    %v4133 = vand.u32 %v1634, 4294901760
    %v4134 = vsub.f32 %v1634, %v4133
    %v4135 = vand.u32 %v4134, 4294901760
    %v4136 = vsub.f32 %v4134, %v4135
    %v4137 = vand.u32 %v4136, 4294901760
    %4138 = vmatpush.msra.mxu0 %v4137
    %v4139 = vand.u32 %v1632, 4294901760
    %v4140 = vsub.f32 %v1632, %v4139
    %v4141 = vand.u32 %v4140, 4294901760
    %v4142 = vsub.f32 %v4140, %v4141
    %v4143 = vand.u32 %v4142, 4294901760
    %4144 = vmatpush.msra.mxu0 %v4143
    %v4145 = vand.u32 %v1630, 4294901760
    %v4146 = vsub.f32 %v1630, %v4145
    %v4147 = vand.u32 %v4146, 4294901760
    %v4148 = vsub.f32 %v4146, %v4147
    %v4149 = vand.u32 %v4148, 4294901760
    %4150 = vmatpush.msra.mxu0 %v4149
    %v4151 = vand.u32 %v1628, 4294901760
    %v4152 = vsub.f32 %v1628, %v4151
    %v4153 = vand.u32 %v4152, 4294901760
    %v4154 = vsub.f32 %v4152, %v4153
    %v4155 = vand.u32 %v4154, 4294901760
    %4156 = vmatpush.msra.mxu0 %v4155
    %v4157 = vand.u32 %v1626, 4294901760
    %v4158 = vsub.f32 %v1626, %v4157
    %v4159 = vand.u32 %v4158, 4294901760
    %v4160 = vsub.f32 %v4158, %v4159
    %v4161 = vand.u32 %v4160, 4294901760
    %4162 = vmatpush.msra.mxu0 %v4161
    %v4163 = vand.u32 %v1624, 4294901760
    %v4164 = vsub.f32 %v1624, %v4163
    %v4165 = vand.u32 %v4164, 4294901760
    %v4166 = vsub.f32 %v4164, %v4165
    %v4167 = vand.u32 %v4166, 4294901760
    %4168 = vmatpush.msra.mxu0 %v4167
    %v4169 = vand.u32 %v1622, 4294901760
    %v4170 = vsub.f32 %v1622, %v4169
    %v4171 = vand.u32 %v4170, 4294901760
    %v4172 = vsub.f32 %v4170, %v4171
    %v4173 = vand.u32 %v4172, 4294901760
    %4174 = vmatpush.msra.mxu0 %v4173
    %v4175 = vand.u32 %v1620, 4294901760
    %v4176 = vsub.f32 %v1620, %v4175
    %v4177 = vand.u32 %v4176, 4294901760
    %v4178 = vsub.f32 %v4176, %v4177
    %v4179 = vand.u32 %v4178, 4294901760
    %4180 = vmatpush.msra.mxu0 %v4179
    %v4181 = vand.u32 %v1522, 4294901760
    %4182 = vmatmul.f32.gmra.mxu0 %v4181
    %v4183 = vpop.f32.mrf.mxu0
    %v4184 = vadd.f32 %v4083, %v4183
    %4185 = vdwg.mxu0
    %v4186 = vand.u32 %v1650, 4294901760
    %v4187 = vsub.f32 %v1650, %v4186
    %4188 = vmatpush.msra.mxu0 %v4187
    %v4189 = vand.u32 %v1648, 4294901760
    %v4190 = vsub.f32 %v1648, %v4189
    %4191 = vmatpush.msra.mxu0 %v4190
    %v4192 = vand.u32 %v1646, 4294901760
    %v4193 = vsub.f32 %v1646, %v4192
    %4194 = vmatpush.msra.mxu0 %v4193
    %v4195 = vand.u32 %v1644, 4294901760
    %v4196 = vsub.f32 %v1644, %v4195
    %4197 = vmatpush.msra.mxu0 %v4196
    %v4198 = vand.u32 %v1642, 4294901760
    %v4199 = vsub.f32 %v1642, %v4198
    %4200 = vmatpush.msra.mxu0 %v4199
    %v4201 = vand.u32 %v1640, 4294901760
    %v4202 = vsub.f32 %v1640, %v4201
    %4203 = vmatpush.msra.mxu0 %v4202
    %v4204 = vand.u32 %v1638, 4294901760
    %v4205 = vsub.f32 %v1638, %v4204
    %4206 = vmatpush.msra.mxu0 %v4205
    %v4207 = vand.u32 %v1636, 4294901760
    %v4208 = vsub.f32 %v1636, %v4207
    %4209 = vmatpush.msra.mxu0 %v4208
    %v4210 = vand.u32 %v1634, 4294901760
    %v4211 = vsub.f32 %v1634, %v4210
    %4212 = vmatpush.msra.mxu0 %v4211
    %v4213 = vand.u32 %v1632, 4294901760
    %v4214 = vsub.f32 %v1632, %v4213
    %4215 = vmatpush.msra.mxu0 %v4214
    %v4216 = vand.u32 %v1630, 4294901760
    %v4217 = vsub.f32 %v1630, %v4216
    %4218 = vmatpush.msra.mxu0 %v4217
    %v4219 = vand.u32 %v1628, 4294901760
    %v4220 = vsub.f32 %v1628, %v4219
    %4221 = vmatpush.msra.mxu0 %v4220
    %v4222 = vand.u32 %v1626, 4294901760
    %v4223 = vsub.f32 %v1626, %v4222
    %4224 = vmatpush.msra.mxu0 %v4223
    %v4225 = vand.u32 %v1624, 4294901760
    %v4226 = vsub.f32 %v1624, %v4225
    %4227 = vmatpush.msra.mxu0 %v4226
    %v4228 = vand.u32 %v1622, 4294901760
    %v4229 = vsub.f32 %v1622, %v4228
    %4230 = vmatpush.msra.mxu0 %v4229
    %v4231 = vand.u32 %v1620, 4294901760
    %v4232 = vsub.f32 %v1620, %v4231
    %4233 = vmatpush.msra.mxu0 %v4232
    %v4234 = vand.u32 %v1522, 4294901760
    %v4235 = vsub.f32 %v1522, %v4234
    %4236 = vmatmul.f32.gmra.mxu0 %v4235
    %v4237 = vpop.f32.mrf.mxu0
    %v4238 = vadd.f32 %v4184, %v4237
    %4239 = vdwg.mxu0
    %v4240 = vand.u32 %v1650, 4294901760
    %4241 = vmatpush.msra.mxu0 %v4240
    %v4242 = vand.u32 %v1648, 4294901760
    %4243 = vmatpush.msra.mxu0 %v4242
    %v4244 = vand.u32 %v1646, 4294901760
    %4245 = vmatpush.msra.mxu0 %v4244
    %v4246 = vand.u32 %v1644, 4294901760
    %4247 = vmatpush.msra.mxu0 %v4246
    %v4248 = vand.u32 %v1642, 4294901760
    %4249 = vmatpush.msra.mxu0 %v4248
    %v4250 = vand.u32 %v1640, 4294901760
    %4251 = vmatpush.msra.mxu0 %v4250
    %v4252 = vand.u32 %v1638, 4294901760
    %4253 = vmatpush.msra.mxu0 %v4252
    %v4254 = vand.u32 %v1636, 4294901760
    %4255 = vmatpush.msra.mxu0 %v4254
    %v4256 = vand.u32 %v1634, 4294901760
    %4257 = vmatpush.msra.mxu0 %v4256
    %v4258 = vand.u32 %v1632, 4294901760
    %4259 = vmatpush.msra.mxu0 %v4258
    %v4260 = vand.u32 %v1630, 4294901760
    %4261 = vmatpush.msra.mxu0 %v4260
    %v4262 = vand.u32 %v1628, 4294901760
    %4263 = vmatpush.msra.mxu0 %v4262
    %v4264 = vand.u32 %v1626, 4294901760
    %4265 = vmatpush.msra.mxu0 %v4264
    %v4266 = vand.u32 %v1624, 4294901760
    %4267 = vmatpush.msra.mxu0 %v4266
    %v4268 = vand.u32 %v1622, 4294901760
    %4269 = vmatpush.msra.mxu0 %v4268
    %v4270 = vand.u32 %v1620, 4294901760
    %4271 = vmatpush.msra.mxu0 %v4270
    %v4272 = vand.u32 %v1522, 4294901760
    %v4273 = vsub.f32 %v1522, %v4272
    %v4274 = vand.u32 %v4273, 4294901760
    %4275 = vmatmul.f32.gmra.mxu0 %v4274
    %v4276 = vpop.f32.mrf.mxu0
    %v4277 = vadd.f32 %v4238, %v4276
    %4278 = vdwg.mxu0
    %v4279 = vand.u32 %v1650, 4294901760
    %v4280 = vsub.f32 %v1650, %v4279
    %v4281 = vand.u32 %v4280, 4294901760
    %4282 = vmatpush.msra.mxu0 %v4281
    %v4283 = vand.u32 %v1648, 4294901760
    %v4284 = vsub.f32 %v1648, %v4283
    %v4285 = vand.u32 %v4284, 4294901760
    %4286 = vmatpush.msra.mxu0 %v4285
    %v4287 = vand.u32 %v1646, 4294901760
    %v4288 = vsub.f32 %v1646, %v4287
    %v4289 = vand.u32 %v4288, 4294901760
    %4290 = vmatpush.msra.mxu0 %v4289
    %v4291 = vand.u32 %v1644, 4294901760
    %v4292 = vsub.f32 %v1644, %v4291
    %v4293 = vand.u32 %v4292, 4294901760
    %4294 = vmatpush.msra.mxu0 %v4293
    %v4295 = vand.u32 %v1642, 4294901760
    %v4296 = vsub.f32 %v1642, %v4295
    %v4297 = vand.u32 %v4296, 4294901760
    %4298 = vmatpush.msra.mxu0 %v4297
    %v4299 = vand.u32 %v1640, 4294901760
    %v4300 = vsub.f32 %v1640, %v4299
    %v4301 = vand.u32 %v4300, 4294901760
    %4302 = vmatpush.msra.mxu0 %v4301
    %v4303 = vand.u32 %v1638, 4294901760
    %v4304 = vsub.f32 %v1638, %v4303
    %v4305 = vand.u32 %v4304, 4294901760
    %4306 = vmatpush.msra.mxu0 %v4305
    %v4307 = vand.u32 %v1636, 4294901760
    %v4308 = vsub.f32 %v1636, %v4307
    %v4309 = vand.u32 %v4308, 4294901760
    %4310 = vmatpush.msra.mxu0 %v4309
    %v4311 = vand.u32 %v1634, 4294901760
    %v4312 = vsub.f32 %v1634, %v4311
    %v4313 = vand.u32 %v4312, 4294901760
    %4314 = vmatpush.msra.mxu0 %v4313
    %v4315 = vand.u32 %v1632, 4294901760
    %v4316 = vsub.f32 %v1632, %v4315
    %v4317 = vand.u32 %v4316, 4294901760
    %4318 = vmatpush.msra.mxu0 %v4317
    %v4319 = vand.u32 %v1630, 4294901760
    %v4320 = vsub.f32 %v1630, %v4319
    %v4321 = vand.u32 %v4320, 4294901760
    %4322 = vmatpush.msra.mxu0 %v4321
    %v4323 = vand.u32 %v1628, 4294901760
    %v4324 = vsub.f32 %v1628, %v4323
    %v4325 = vand.u32 %v4324, 4294901760
    %4326 = vmatpush.msra.mxu0 %v4325
    %v4327 = vand.u32 %v1626, 4294901760
    %v4328 = vsub.f32 %v1626, %v4327
    %v4329 = vand.u32 %v4328, 4294901760
    %4330 = vmatpush.msra.mxu0 %v4329
    %v4331 = vand.u32 %v1624, 4294901760
    %v4332 = vsub.f32 %v1624, %v4331
    %v4333 = vand.u32 %v4332, 4294901760
    %4334 = vmatpush.msra.mxu0 %v4333
    %v4335 = vand.u32 %v1622, 4294901760
    %v4336 = vsub.f32 %v1622, %v4335
    %v4337 = vand.u32 %v4336, 4294901760
    %4338 = vmatpush.msra.mxu0 %v4337
    %v4339 = vand.u32 %v1620, 4294901760
    %v4340 = vsub.f32 %v1620, %v4339
    %v4341 = vand.u32 %v4340, 4294901760
    %4342 = vmatpush.msra.mxu0 %v4341
    %v4343 = vand.u32 %v1522, 4294901760
    %4344 = vmatmul.f32.gmra.mxu0 %v4343
    %v4345 = vpop.f32.mrf.mxu0
    %v4346 = vadd.f32 %v4277, %v4345
    %4347 = vdwg.mxu0
    %v4348 = vand.u32 %v1650, 4294901760
    %4349 = vmatpush.msra.mxu0 %v4348
    %v4350 = vand.u32 %v1648, 4294901760
    %4351 = vmatpush.msra.mxu0 %v4350
    %v4352 = vand.u32 %v1646, 4294901760
    %4353 = vmatpush.msra.mxu0 %v4352
    %v4354 = vand.u32 %v1644, 4294901760
    %4355 = vmatpush.msra.mxu0 %v4354
    %v4356 = vand.u32 %v1642, 4294901760
    %4357 = vmatpush.msra.mxu0 %v4356
    %v4358 = vand.u32 %v1640, 4294901760
    %4359 = vmatpush.msra.mxu0 %v4358
    %v4360 = vand.u32 %v1638, 4294901760
    %4361 = vmatpush.msra.mxu0 %v4360
    %v4362 = vand.u32 %v1636, 4294901760
    %4363 = vmatpush.msra.mxu0 %v4362
    %v4364 = vand.u32 %v1634, 4294901760
    %4365 = vmatpush.msra.mxu0 %v4364
    %v4366 = vand.u32 %v1632, 4294901760
    %4367 = vmatpush.msra.mxu0 %v4366
    %v4368 = vand.u32 %v1630, 4294901760
    %4369 = vmatpush.msra.mxu0 %v4368
    %v4370 = vand.u32 %v1628, 4294901760
    %4371 = vmatpush.msra.mxu0 %v4370
    %v4372 = vand.u32 %v1626, 4294901760
    %4373 = vmatpush.msra.mxu0 %v4372
    %v4374 = vand.u32 %v1624, 4294901760
    %4375 = vmatpush.msra.mxu0 %v4374
    %v4376 = vand.u32 %v1622, 4294901760
    %4377 = vmatpush.msra.mxu0 %v4376
    %v4378 = vand.u32 %v1620, 4294901760
    %4379 = vmatpush.msra.mxu0 %v4378
    %v4380 = vand.u32 %v1522, 4294901760
    %4381 = vmatmul.f32.gmra.mxu0 %v4380
    %v4382 = vpop.f32.mrf.mxu0
    %v4383 = vadd.f32 %v4346, %v4382
    %4384 = vdwg.mxu0
    %v4385 = vmax.f32 %v3019, 0.0
    %v4386 = vmax.f32 %v4383, 0.0
    %v4389 = vrot.slane %v4386, 7
    %vm4390 = vcmask 1040384
    %v4391 = vsel %vm4390, %v4385, %v4389
    %v4393 = vlaneseq
    %vm4394 = vcmp.ge.s32.totalorder %v4393, 0
    %vm4395 = vcmp.lt.s32.totalorder %v4393, 256
    %vm4396 = vmand %vm4394, %vm4395
    %4397 = vst.msk [vmem:[#allocation10] sm:$0x3] %vm4396, %v4391
    // Predicated region
    $region38: #{tpu_custom_call.1} parent=1 // pred_check
      _
    $region39: #{tpu_custom_call.1} parent=1 // pred_check_branch
      %4399 = sbr.rel (0) target = $region41
    $region40: #{tpu_custom_call.1} parent=1 // pred_region
      %4401 = vsyncadd [#allocation4], 0
      %s4403 = sshll.u32 [#allocation10], 4
      %s4404 = int_to_ptr.vmem [resolvable:$true] %s4403
      %s4405 = sshll.u32 %s5, 4
      %s4406 = int_to_ptr.hbm [resolvable:$true] %s4405
      %4408 = dma.vmem_to_hbm [thread:$0]  %s4404, 32, %s4406, [#allocation4]
    $region41: #{tpu_custom_call.1} parent=1 // pred_fallthru
      _
    // Predicated region
    $region42: #{tpu_custom_call.1} parent=1 // pred_check
      _
    $region43: #{tpu_custom_call.1} parent=1 // pred_check_branch
      %4410 = sbr.rel (0) target = $region45
    $region44: #{tpu_custom_call.1} parent=1 // pred_region
      %4412 = dma.done [#allocation4], 32
    $region45: #{tpu_custom_call.1} parent=1 // pred_fallthru
      _
    %4413 = vsyncpa [#allocation3], 1
    %4414 = vsyncpa [#allocation6], 1
    %4415 = vsyncpa [#allocation9], 1
    %4416 = vsyncpa [#allocation4], 1

</llo_original>
